<compile_context>
chip_gen: v6e
topology: v6e:2x2x1
jax: 0.10.0
libtpu: 0.0.40
codegen_flags: <defaults>
</compile_context>

<pallas_src>
import jax
import jax.numpy as jnp
from jax.experimental import pallas as pl
from jax.experimental.pallas import tpu as pltpu

NEG_SLOPE = -0.1  # the module's negative_slope (spec: where(v>0, v, v * -0.1))


def _make_kernel(b_blk):
    def kernel(x_ref, w_ref, b_ref, o_ref):
        # x_ref: (B_blk, Cin, t_hw) f32   w_ref: (Nd, Cin) f32   b_ref: (Nd, 1) f32
        # o_ref: (B_blk, Nd, t_hw) f32 -- lane axis is the wide spatial dim
        w = w_ref[...]
        bias = b_ref[...]
        for i in range(b_blk):  # static unroll over the (small) batch block
            v = jnp.dot(w, x_ref[i],
                        preferred_element_type=jnp.float32,
                        precision=jax.lax.Precision.HIGHEST)
            v = v + bias  # bias broadcast along lanes
            o_ref[i] = jnp.where(v > 0, v, v * NEG_SLOPE)
    return kernel


def _round_up(a, b):
    return ((a + b - 1) // b) * b


def conv_transpose_leaky(x, w, b):
    """ConvTranspose2d(k=2, stride=2) + where(v>0, v, v * -0.1).

    x: (N, Cin, H, W)      NCHW, as in PyTorch (float32)
    w: (Cin, Cout, kH, kW) PyTorch ConvTranspose2d weight layout
    b: (Cout,)
    returns: (N, Cout, 2H, 2W) NCHW, float32
    """
    N, Cin, H, W = x.shape
    Cin_w, Cout, kH, kW = w.shape
    assert Cin_w == Cin
    Nd = Cout * kH * kW
    HW = H * W

    # Spatial tile: largest multiple of 128 that divides HW_pad, capped at 2048
    # lanes (f32 input block <= ~3.9 MB, double-buffered < v5e's 16 MiB scoped).
    HW_pad = _round_up(HW, 128)
    t_hw = 128
    cand = 128
    while cand <= min(HW_pad, 2048):
        if HW_pad % cand == 0:
            t_hw = cand
        cand += 128
    n_s = HW_pad // t_hw

    # Keep both TensorCores busy (v7x) on single-image, single-tile calls.
    if N == 1 and n_s == 1 and t_hw % 256 == 0:
        t_hw //= 2
        n_s = 2

    # When the spatial axis has only one step, pack several images per grid
    # step to amortize per-step overhead (still >=2 grid steps along batch).
    B_blk = 1
    if n_s == 1 and N > 1:
        for d in range(1, N + 1):
            if (N % d) or (d * t_hw > 2048) or (N // d < 2):
                continue
            B_blk = d
    n_b = N // B_blk

    # Native NCHW: (N, Cin, H, W) -> (N, Cin, H*W) is a free reshape, no cast.
    x_flat = x.reshape(N, Cin, HW)
    if HW_pad != HW:
        # TODO(synk): a ragged last tile (masked store) would avoid this extra
        # HBM pass; only taken when H*W is not a multiple of 128.
        x_flat = jnp.pad(x_flat, ((0, 0), (0, 0), (0, HW_pad - HW)))

    # Weight as (Cout*kH*kW, Cin), rows ordered (co, ki, kj). Tiny, resident.
    w_t = jnp.transpose(w, (1, 2, 3, 0)).reshape(Nd, Cin).astype(jnp.float32)
    b_col = jnp.repeat(b.astype(jnp.float32), kH * kW).reshape(Nd, 1)

    flops = 2 * N * HW_pad * Cin * Nd
    bytes_accessed = (x_flat.size + w_t.size + b_col.size + N * Nd * HW_pad) * 4

    out = pl.pallas_call(
        _make_kernel(B_blk),
        out_shape=jax.ShapeDtypeStruct((N, Nd, HW_pad), jnp.float32),
        grid_spec=pltpu.PrefetchScalarGridSpec(
            num_scalar_prefetch=0,
            grid=(n_b, n_s),
            in_specs=[
                pl.BlockSpec((B_blk, Cin, t_hw), lambda nb, s: (nb, 0, s)),  # acts
                pl.BlockSpec((Nd, Cin), lambda nb, s: (0, 0)),               # weight
                pl.BlockSpec((Nd, 1), lambda nb, s: (0, 0)),                 # bias
            ],
            out_specs=pl.BlockSpec((B_blk, Nd, t_hw), lambda nb, s: (nb, 0, s)),
        ),
        compiler_params=pltpu.CompilerParams(
            dimension_semantics=("parallel", "parallel")),
        cost_estimate=pl.CostEstimate(
            flops=flops, transcendentals=0, bytes_accessed=bytes_accessed),
    )(x_flat, w_t, b_col)

    # Scatter (layout glue on the small output tensor):
    # out[n, (co,ki,kj), i*W+j] -> y[n, co, 2i+ki, 2j+kj]
    y = out[:, :, :HW].reshape(N, Cout, kH, kW, H, W)
    y = jnp.transpose(y, (0, 1, 4, 2, 5, 3)).reshape(N, Cout, H * kH, W * kW)
    return y


def _reference(x, w, b):
    # pure-JAX f32 reference of the same math
    N, Cin, H, W = x.shape
    _, Cout, kH, kW = w.shape
    v1 = jnp.einsum('nchw,cokl->nohkwl', x, w,
                    precision=jax.lax.Precision.HIGHEST)   # (N,Cout,H,kH,W,kW)
    v1 = v1.reshape(N, Cout, H * kH, W * kW) + b[None, :, None, None]
    return jnp.where(v1 > 0, v1, v1 * NEG_SLOPE)


if __name__ == "__main__":
    key = jax.random.PRNGKey(0)
    kx, kw, kb = jax.random.split(key, 3)

    # small shapes consistent with the module: Cin fixed at 480 by the conv
    N, Cin, H, W = 4, 480, 16, 16
    Cout, kH, kW = 7, 2, 2

    x = jax.random.normal(kx, (N, Cin, H, W), dtype=jnp.float32)
    # deterministic parameter init (PyTorch-style uniform bound ~ 1/sqrt(fan_in))
    bound = 1.0 / (Cin ** 0.5)
    w = jax.random.uniform(kw, (Cin, Cout, kH, kW), jnp.float32, -bound, bound)
    b = jax.random.uniform(kb, (Cout,), jnp.float32, -bound, bound)

    y = conv_transpose_leaky(x, w, b)
    y = jax.block_until_ready(y)

    y_ref = _reference(x, w, b)
    assert y.shape == (N, Cout, 2 * H, 2 * W)
    # f32 matmul (Precision.HIGHEST) -> tight tolerance vs f32 reference
    assert jnp.allclose(y, y_ref, atol=2e-4, rtol=2e-4)

    print("KERNEL_OK")
</pallas_src>

<mosaic_0001>
module attributes {stable_mosaic.version = 11 : i64} {
  func.func @kernel(%arg0: i32, %arg1: i32, %arg2: memref<2x480x256xf32, #tpu.memory_space<vmem>>, %arg3: memref<28x480xf32, #tpu.memory_space<vmem>>, %arg4: memref<28x1xf32, #tpu.memory_space<vmem>>, %arg5: memref<2x28x256xf32, #tpu.memory_space<vmem>>) attributes {dimension_semantics = [#tpu.dimension_semantics<parallel>, #tpu.dimension_semantics<parallel>], iteration_bounds = array<i64: 2, 1>, scalar_prefetch = 0 : i64, scratch_operands = 0 : i64, tpu.core_type = #tpu.core_type<tc>, window_params = [{transform_indices = @transform_0, window_bounds = array<i64: 2, 480, 256>}, {pipeline_mode = #tpu.pipeline_mode<synchronous>, transform_indices = @transform_1, window_bounds = array<i64: 28, 480>}, {pipeline_mode = #tpu.pipeline_mode<synchronous>, transform_indices = @transform_2, window_bounds = array<i64: 28, 1>}, {transform_indices = @transform_3, window_bounds = array<i64: 2, 28, 256>}]} {
    %c0 = arith.constant 0 : index
    %c0_0 = arith.constant 0 : index
    %0 = vector.load %arg3[%c0, %c0_0] : memref<28x480xf32, #tpu.memory_space<vmem>>, vector<28x480xf32>
    %c0_1 = arith.constant 0 : index
    %c0_2 = arith.constant 0 : index
    %1 = vector.load %arg4[%c0_1, %c0_2] : memref<28x1xf32, #tpu.memory_space<vmem>>, vector<28x1xf32>
    %c0_3 = arith.constant 0 : index
    %c0_4 = arith.constant 0 : index
    %c0_5 = arith.constant 0 : index
    %2 = vector.load %arg2[%c0_3, %c0_4, %c0_5] : memref<2x480x256xf32, #tpu.memory_space<vmem>>, vector<1x480x256xf32>
    %3 = vector.shape_cast %2 : vector<1x480x256xf32> to vector<480x256xf32>
    %cst = arith.constant dense<0.000000e+00> : vector<28x256xf32>
    %4 = tpu.matmul %0, %3, %cst {dimension_numbers = #tpu.dot_dimension_numbers<[1], [0], [0], [1], [0, 0, 1, 1], [], []>, precision = #tpu.contract_precision<fp32>} : vector<28x480xf32>, vector<480x256xf32>, vector<28x256xf32> -> vector<28x256xf32>
    %5 = vector.broadcast %1 : vector<28x1xf32> to vector<28x256xf32>
    %6 = arith.addf %4, %5 : vector<28x256xf32>
    %cst_6 = arith.constant 0.000000e+00 : f32
    %7 = vector.broadcast %cst_6 : f32 to vector<28x256xf32>
    %8 = arith.cmpf ogt, %6, %7 : vector<28x256xf32>
    %cst_7 = arith.constant -1.000000e-01 : f32
    %9 = vector.broadcast %cst_7 : f32 to vector<28x256xf32>
    %10 = arith.mulf %6, %9 : vector<28x256xf32>
    %11 = arith.select %8, %6, %10 : vector<28x256xi1>, vector<28x256xf32>
    %c0_8 = arith.constant 0 : index
    %c0_9 = arith.constant 0 : index
    %c0_10 = arith.constant 0 : index
    %12 = vector.load %arg5[%c0_8, %c0_9, %c0_10] : memref<2x28x256xf32, #tpu.memory_space<vmem>>, vector<1x28x256xf32>
    %13 = vector.shape_cast %12 : vector<1x28x256xf32> to vector<28x256xf32>
    %14 = vector.shape_cast %11 : vector<28x256xf32> to vector<1x28x256xf32>
    tpu.vector_store %arg5[%c0_8, %c0_9, %c0_10], %14 {strides = array<i32>} : memref<2x28x256xf32, #tpu.memory_space<vmem>>, vector<1x28x256xf32>,
    %c1 = arith.constant 1 : index
    %c0_11 = arith.constant 0 : index
    %c0_12 = arith.constant 0 : index
    %15 = vector.load %arg2[%c1, %c0_11, %c0_12] : memref<2x480x256xf32, #tpu.memory_space<vmem>>, vector<1x480x256xf32>
    %16 = vector.shape_cast %15 : vector<1x480x256xf32> to vector<480x256xf32>
    %cst_13 = arith.constant dense<0.000000e+00> : vector<28x256xf32>
    %17 = tpu.matmul %0, %16, %cst_13 {dimension_numbers = #tpu.dot_dimension_numbers<[1], [0], [0], [1], [0, 0, 1, 1], [], []>, precision = #tpu.contract_precision<fp32>} : vector<28x480xf32>, vector<480x256xf32>, vector<28x256xf32> -> vector<28x256xf32>
    %18 = vector.broadcast %1 : vector<28x1xf32> to vector<28x256xf32>
    %19 = arith.addf %17, %18 : vector<28x256xf32>
    %cst_14 = arith.constant 0.000000e+00 : f32
    %20 = vector.broadcast %cst_14 : f32 to vector<28x256xf32>
    %21 = arith.cmpf ogt, %19, %20 : vector<28x256xf32>
    %cst_15 = arith.constant -1.000000e-01 : f32
    %22 = vector.broadcast %cst_15 : f32 to vector<28x256xf32>
    %23 = arith.mulf %19, %22 : vector<28x256xf32>
    %24 = arith.select %21, %19, %23 : vector<28x256xi1>, vector<28x256xf32>
    %c1_16 = arith.constant 1 : index
    %c0_17 = arith.constant 0 : index
    %c0_18 = arith.constant 0 : index
    %25 = vector.load %arg5[%c1_16, %c0_17, %c0_18] : memref<2x28x256xf32, #tpu.memory_space<vmem>>, vector<1x28x256xf32>
    %26 = vector.shape_cast %25 : vector<1x28x256xf32> to vector<28x256xf32>
    %27 = vector.shape_cast %24 : vector<28x256xf32> to vector<1x28x256xf32>
    tpu.vector_store %arg5[%c1_16, %c0_17, %c0_18], %27 {strides = array<i32>} : memref<2x28x256xf32, #tpu.memory_space<vmem>>, vector<1x28x256xf32>,
    return
  }
  func.func @transform_0(%arg0: i32, %arg1: i32) -> (i32, i32, i32) {
    %c0_i32 = arith.constant 0 : i32
    %c0_i32_0 = arith.constant 0 : i32
    return %arg0, %c0_i32, %arg1 : i32, i32, i32
  }
  func.func @transform_1(%arg0: i32, %arg1: i32) -> (i32, i32) {
    %c0_i32 = arith.constant 0 : i32
    %c0_i32_0 = arith.constant 0 : i32
    %c0_i32_1 = arith.constant 0 : i32
    return %c0_i32, %c0_i32_0 : i32, i32
  }
  func.func @transform_2(%arg0: i32, %arg1: i32) -> (i32, i32) {
    %c0_i32 = arith.constant 0 : i32
    %c0_i32_0 = arith.constant 0 : i32
    %c0_i32_1 = arith.constant 0 : i32
    return %c0_i32, %c0_i32_0 : i32, i32
  }
  func.func @transform_3(%arg0: i32, %arg1: i32) -> (i32, i32, i32) {
    %c0_i32 = arith.constant 0 : i32
    %c0_i32_0 = arith.constant 0 : i32
    return %arg0, %c0_i32, %arg1 : i32, i32, i32
  }
}

</mosaic_0001>

<llo_original>
// kernel: tpu_custom_call.1
$region0: #{tpu_custom_call.1}
  #allocation0 [shape = 'u32[]', space=smem, size = 0x4, offset = 0x4, fixed_abs, tag = 'smem constant byte address 0x4 - core index']
  #allocation1 [shape = 'u32[144,128]{1,0:T(1,128)}', space=vmem, size = 0x12000, scoped, tag = 'internal scratch']
  %s0 = inlined_call_operand.hbm [shape: f32[4,480,256], index: 0, kind: input, shape index: {}]
  %s1 = inlined_call_operand.hbm [shape: f32[28,480], index: 1, kind: input, shape index: {}]
  %s2 = inlined_call_operand.vmem [shape: f32[28,1], index: 2, kind: input, shape index: {}]
  %s3 = inlined_call_operand.vmem [shape: f32[4,28,256], index: 3, kind: output, shape index: {}]
  %s4 = sld [smem:[#allocation0]]
  $region53: #{tpu_custom_call.1} parent=0
    _
  %s6 = ssub.s32 1, %s4
  %s7 = scalar_select 0, %s6, %s4
  $region1: #{tpu_custom_call.1} parent=0
    #allocation2 [shape = 'u8[1966080]{0}', space=vmem, size = 0x1e0000, scoped, tag = 'input window, operand 0']
    #allocation3 [shape = 's32[2]{0}', space=sflag, size = 0x8, scoped, tag = 'scoped memory for tpu_custom_call.1']
    #allocation4 [shape = 'u8[65536]{0}', space=vmem, size = 0x10000, scoped, tag = 'input window, operand 1, single buffered']
    #allocation5 [shape = 's32[1]{0}', space=sflag, size = 0x4, scoped, tag = 'scoped memory for tpu_custom_call.1']
    %8 = vsyncpa [#allocation3], 0
    %s9 = scalar_lea.sflag [#allocation3], 1
    %10 = vsyncpa %s9, 0
    %11 = vsyncpa [#allocation5], 0
    loop: start=0, step=1, limit=4
    $region2: #{tpu_custom_call.1} parent=1 // loop_pre_header
      _
    $region3: #{tpu_custom_call.1} parent=1 // loop_header
      %s13 = sphi 0, %s17
      %p14 = scmp.ge.s32.totalorder %s13, 4
      %s20 = sphi 0, %s32
      %s21 = sphi 0, %s28
      %s22 = sphi 0, %s20
      %s23 = sphi 0, %s21
      %s24 = sphi 0, %s22
      %s25 = sphi 0, %s23
      %s37 = sphi 0, %s39
      %s40 = sphi 0, %s37
      %s41 = sphi 0, %s40
      %s57 = sphi 0, %s41
      %s61 = sphi 0, %s61
      %s63 = sphi 0, %s61
      %s64 = sphi 0, %s63
      %s78 = sphi 0, %s64
      %s82 = sphi 0, %s82
      %s84 = sphi 0, %s82
      %s85 = sphi 0, %s84
      %s99 = sphi 0, %s85
      %s107 = sphi 0, %s109
      %s110 = sphi 0, %s107
      %s111 = sphi 0, %s110
      %s127 = sphi 0, %s111
    $region4: #{tpu_custom_call.1} parent=1 // loop_header_branch
      %16 = sbr.rel (%p14) target = $region8
    $region5: #{tpu_custom_call.1} parent=1 // loop_body
      %s18 = ssub.s32 %s13, 1
      %s19 = ssub.s32 %s13, 2
      %s26 = sadd.s32 1, %s21
      %p27 = scmp.ge.s32.totalorder %s26, 1
      %s28 = scalar_select %p27, 0, %s26
      %s29 = sadd.s32 1, %s20
      %s30 = scalar_select %p27, %s29, %s20
      %p31 = scmp.ge.s32.totalorder %s30, 2
      %s32 = scalar_select %p31, 0, %s30
      %s33 = ssub.s32 %s20, %s32
      %s34 = ssub.s32 %s21, %s28
      %s35 = sor.u32 %s33, %s34
      %p36 = scmp.eq.s32.totalorder %s35, 0
      %s38 = sadd.s32 %s37, 1
      %s39 = scalar_select %p36, %s37, %s38
      %p42 = pneg %p36
      %p43 = scmp.eq.s32.totalorder %s13, 1
      %p44 = por %p42, %p43
      %p45 = scmp.ne.s32.totalorder %s37, %s40
      %p46 = scmp.eq.s32.totalorder %s13, 0
      %p47 = por %p45, %p46
      %p48 = scmp.ne.s32.totalorder %s37, %s40
      %p49 = scmp.eq.s32.totalorder %s18, 1
      %p50 = por %p48, %p49
      %p51 = scmp.ne.s32.totalorder %s40, %s41
      %p52 = scmp.eq.s32.totalorder %s18, 0
      %p53 = por %p51, %p52
      %p54 = scmp.ne.s32.totalorder %s40, %s41
      %p55 = scmp.eq.s32.totalorder %s19, 1
      %p56 = por %p54, %p55
      %p58 = scmp.ne.s32.totalorder %s41, %s57
      %p59 = scmp.eq.s32.totalorder %s19, 0
      %p60 = por %p58, %p59
      %s62 = sadd.s32 %s61, 1
      %p65 = scmp.eq.s32.totalorder %s13, 1
      %p66 = scmp.ne.s32.totalorder %s61, %s63
      %p67 = scmp.eq.s32.totalorder %s13, 0
      %p68 = por %p66, %p67
      %p69 = scmp.ne.s32.totalorder %s61, %s63
      %p70 = scmp.eq.s32.totalorder %s18, 1
      %p71 = por %p69, %p70
      %p72 = scmp.ne.s32.totalorder %s63, %s64
      %p73 = scmp.eq.s32.totalorder %s18, 0
      %p74 = por %p72, %p73
      %p75 = scmp.ne.s32.totalorder %s63, %s64
      %p76 = scmp.eq.s32.totalorder %s19, 1
      %p77 = por %p75, %p76
      %p79 = scmp.ne.s32.totalorder %s64, %s78
      %p80 = scmp.eq.s32.totalorder %s19, 0
      %p81 = por %p79, %p80
      %s83 = sadd.s32 %s82, 1
      %p86 = scmp.eq.s32.totalorder %s13, 1
      %p87 = scmp.ne.s32.totalorder %s82, %s84
      %p88 = scmp.eq.s32.totalorder %s13, 0
      %p89 = por %p87, %p88
      %p90 = scmp.ne.s32.totalorder %s82, %s84
      %p91 = scmp.eq.s32.totalorder %s18, 1
      %p92 = por %p90, %p91
      %p93 = scmp.ne.s32.totalorder %s84, %s85
      %p94 = scmp.eq.s32.totalorder %s18, 0
      %p95 = por %p93, %p94
      %p96 = scmp.ne.s32.totalorder %s84, %s85
      %p97 = scmp.eq.s32.totalorder %s19, 1
      %p98 = por %p96, %p97
      %p100 = scmp.ne.s32.totalorder %s85, %s99
      %p101 = scmp.eq.s32.totalorder %s19, 0
      %p102 = por %p100, %p101
      %s103 = ssub.s32 %s20, %s32
      %s104 = ssub.s32 %s21, %s28
      %s105 = sor.u32 %s103, %s104
      %p106 = scmp.eq.s32.totalorder %s105, 0
      %s108 = sadd.s32 %s107, 1
      %s109 = scalar_select %p106, %s107, %s108
      %p112 = pneg %p106
      %p113 = scmp.eq.s32.totalorder %s13, 1
      %p114 = por %p112, %p113
      %p115 = scmp.ne.s32.totalorder %s107, %s110
      %p116 = scmp.eq.s32.totalorder %s13, 0
      %p117 = por %p115, %p116
      %p118 = scmp.ne.s32.totalorder %s107, %s110
      %p119 = scmp.eq.s32.totalorder %s18, 1
      %p120 = por %p118, %p119
      %p121 = scmp.ne.s32.totalorder %s110, %s111
      %p122 = scmp.eq.s32.totalorder %s18, 0
      %p123 = por %p121, %p122
      %p124 = scmp.ne.s32.totalorder %s110, %s111
      %p125 = scmp.eq.s32.totalorder %s19, 1
      %p126 = por %p124, %p125
      %p128 = scmp.ne.s32.totalorder %s111, %s127
      %p129 = scmp.eq.s32.totalorder %s19, 0
      %p130 = por %p128, %p129
      %p131 = scmp.le.s32.totalorder 1, %s13
      %p132 = scmp.lt.s32.totalorder %s13, 3
      %p133 = pnand %p131, %p132
      %p134 = pneg %p133
      // Predicated region
      $region9: #{tpu_custom_call.1} parent=5 // pred_check
        _
      $region10: #{tpu_custom_call.1} parent=5 // pred_check_branch
        %136 = sbr.rel (%p133) target = $region12
      $region11: #{tpu_custom_call.1} parent=5 // pred_region
        %s137 = ssub.s32 %s13, 1
        // Predicated region
        $region13: #{tpu_custom_call.1} parent=11 // pred_check
          %p138 = pneg %p74
        $region14: #{tpu_custom_call.1} parent=11 // pred_check_branch
          %140 = sbr.rel (%p138) target = $region16
        $region15: #{tpu_custom_call.1} parent=11 // pred_region
          %s142 = ssub.s32 2048, 2048
          %143 = vsyncadd [#allocation5], %s142
          %s144 = sshll.u32 [#allocation4], 4
          %s145 = int_to_ptr.vmem [resolvable:$true] %s144
          %150 = dma.hbm_to_vmem [thread:$0]  %s1, 2048, %s145, [#allocation5], 512, 512, 32
        $region16: #{tpu_custom_call.1} parent=11 // pred_fallthru
          _
        // Predicated region
        $region17: #{tpu_custom_call.1} parent=11 // pred_check
          %p151 = pneg %p95
        $region18: #{tpu_custom_call.1} parent=11 // pred_check_branch
          %153 = sbr.rel (%p151) target = $region20
        $region19: #{tpu_custom_call.1} parent=11 // pred_region
          _
        $region20: #{tpu_custom_call.1} parent=11 // pred_fallthru
          _
      $region12: #{tpu_custom_call.1} parent=5 // pred_fallthru
        _
      %p154 = scmp.lt.s32.totalorder %s13, 2
      // Predicated region
      $region21: #{tpu_custom_call.1} parent=5 // pred_check
        %p155 = pneg %p154
      $region22: #{tpu_custom_call.1} parent=5 // pred_check_branch
        %157 = sbr.rel (%p155) target = $region24
      $region23: #{tpu_custom_call.1} parent=5 // pred_region
        // Predicated region
        $region25: #{tpu_custom_call.1} parent=23 // pred_check
          %p158 = pneg %p47
        $region26: #{tpu_custom_call.1} parent=23 // pred_check_branch
          %160 = sbr.rel (%p158) target = $region28
        $region27: #{tpu_custom_call.1} parent=23 // pred_region
          %s161 = sand.u32 %s37, 1
          %s162 = scalar_lea.sflag [#allocation3], %s161
          %s163 = sand.u32 %s37, 1
          %s164 = smul.addr %s163, 1920
          %s165 = scalar_lea.vmem [#allocation2], %s164
          %s166 = smul.u32 2, %s20
          %s167 = smul.u32 2, %s21
          %s169 = ssub.s32 30720, 30720
          %170 = vsyncadd %s162, %s169
          %s171 = smul.addr %s166, 120
          %s172 = sadd.s32 %s167, %s171
          %s173 = smul.addr %s172, 128
          %s174 = scalar_lea.hbm %s0, %s173
          %s175 = sshll.u32 %s165, 4
          %s176 = int_to_ptr.vmem [resolvable:$true] %s175
          %181 = dma.hbm_to_vmem [thread:$0]  %s174, 30720, %s176, %s162, 256, 256, 16
        $region28: #{tpu_custom_call.1} parent=23 // pred_fallthru
          _
      $region24: #{tpu_custom_call.1} parent=5 // pred_fallthru
        _
      %p182 = scmp.le.s32.totalorder 1, %s13
      %p183 = scmp.lt.s32.totalorder %s13, 3
      %p184 = pnand %p182, %p183
      %p185 = pneg %p184
      // Predicated region
      $region29: #{tpu_custom_call.1} parent=5 // pred_check
        _
      $region30: #{tpu_custom_call.1} parent=5 // pred_check_branch
        %187 = sbr.rel (%p184) target = $region32
      $region31: #{tpu_custom_call.1} parent=5 // pred_region
        %s188 = ssub.s32 %s13, 1
        %s189 = sand.u32 %s40, 1
        %s190 = scalar_lea.sflag [#allocation3], %s189
        %s191 = sand.u32 %s40, 1
        %s192 = smul.addr %s191, 1920
        %s193 = scalar_lea.vmem [#allocation2], %s192
        // Predicated region
        $region33: #{tpu_custom_call.1} parent=31 // pred_check
          %p194 = pneg %p53
        $region34: #{tpu_custom_call.1} parent=31 // pred_check_branch
          %196 = sbr.rel (%p194) target = $region36
        $region35: #{tpu_custom_call.1} parent=31 // pred_region
          %197 = dma.done %s190, 30720
        $region36: #{tpu_custom_call.1} parent=31 // pred_fallthru
          _
        // Predicated region
        $region37: #{tpu_custom_call.1} parent=31 // pred_check
          %p198 = pneg %p74
        $region38: #{tpu_custom_call.1} parent=31 // pred_check_branch
          %200 = sbr.rel (%p198) target = $region40
        $region39: #{tpu_custom_call.1} parent=31 // pred_region
          %201 = dma.done [#allocation5], 2048
        $region40: #{tpu_custom_call.1} parent=31 // pred_fallthru
          _
        %s202 = sand.u32 %s40, 1
        %s203 = scalar_lea.sflag [#allocation3], %s202
        %s204 = sand.u32 %s40, 1
        %s205 = smul.addr %s204, 1920
        %s206 = scalar_lea.vmem [#allocation2], %s205
        %p207 = pneg %p53
        %p208 = pneg %p50
        %p209 = pneg %p74
        %p210 = pneg %p71
        %p211 = pneg %p95
        %p212 = pneg %p92
        %p213 = pneg %p123
        %p214 = pneg %p120
        %s215 = smul.u32 2, %s22
        %s216 = smul.u32 2, %s23
        %p217 = scmp.lt.s32.totalorder %s215, 3
        %s218 = scalar_select %p217, %s215, 3
        %p219 = scmp.lt.s32.totalorder %s216, 1
        %s220 = scalar_select %p219, %s216, 1
        %s221 = smul.addr %s218, 8
        %s222 = sadd.s32 %s220, %s221
        %s223 = smul.addr %s222, 8
        %s224 = scalar_lea.vmem %s3, %s223
        %s225 = smul.u32 2, %s22
        %s226 = smul.u32 2, %s23
        %s227 = smul.u32 2, %s22
        %s228 = smul.u32 2, %s23
        %p229 = scmp.lt.s32.totalorder %s227, 3
        %s230 = scalar_select %p229, %s227, 3
        %p231 = scmp.lt.s32.totalorder %s228, 1
        %s232 = scalar_select %p231, %s228, 1
        %s233 = smul.addr %s230, 8
        %s234 = sadd.s32 %s232, %s233
        %s235 = smul.addr %s234, 8
        %s236 = scalar_lea.vmem %s3, %s235
        %s237 = smul.u32 2, %s22
        %s238 = smul.u32 2, %s23
        %v239 = vld [vmem:[#allocation4] sm:$0xff]
        %v240 = vld [vmem:[#allocation4 + $0x8] sm:$0xff]
        %v241 = vld [vmem:[#allocation4 + $0x10] sm:$0xff]
        %v242 = vld [vmem:[#allocation4 + $0x18] sm:$0xff]
        %v243 = vld [vmem:[#allocation4 + $0x20] sm:$0xff]
        %v244 = vld [vmem:[#allocation4 + $0x28] sm:$0xff]
        %v245 = vld [vmem:[#allocation4 + $0x30] sm:$0xff]
        %v246 = vld [vmem:[#allocation4 + $0x38] sm:$0xff]
        %v247 = vld [vmem:[#allocation4 + $0x40] sm:$0xff]
        %v248 = vld [vmem:[#allocation4 + $0x48] sm:$0xff]
        %v249 = vld [vmem:[#allocation4 + $0x50] sm:$0xff]
        %v250 = vld [vmem:[#allocation4 + $0x58] sm:$0xff]
        %v251 = vld [vmem:[#allocation4 + $0x60] sm:$0xf]
        %v252 = vld [vmem:[#allocation4 + $0x68] sm:$0xf]
        %v253 = vld [vmem:[#allocation4 + $0x70] sm:$0xf]
        %v254 = vld [vmem:[#allocation4 + $0x78] sm:$0xf]
        %v255 = vld [vmem:[%s2] sm:$0xff]
        %v256 = vld [vmem:[%s2 + $0x8] sm:$0xff]
        %v257 = vld [vmem:[%s2 + $0x10] sm:$0xff]
        %v258 = vld [vmem:[%s2 + $0x18] sm:$0xf]
        %v259 = vld [vmem:[%s193] sm:$0xff]
        %v260 = vld [vmem:[%s193 + $0x8] sm:$0xff]
        %v261 = vld [vmem:[%s193 + $0x10] sm:$0xff]
        %v262 = vld [vmem:[%s193 + $0x18] sm:$0xff]
        %v263 = vld [vmem:[%s193 + $0x20] sm:$0xff]
        %v264 = vld [vmem:[%s193 + $0x28] sm:$0xff]
        %v265 = vld [vmem:[%s193 + $0x30] sm:$0xff]
        %v266 = vld [vmem:[%s193 + $0x38] sm:$0xff]
        %v267 = vld [vmem:[%s193 + $0x40] sm:$0xff]
        %v268 = vld [vmem:[%s193 + $0x48] sm:$0xff]
        %v269 = vld [vmem:[%s193 + $0x50] sm:$0xff]
        %v270 = vld [vmem:[%s193 + $0x58] sm:$0xff]
        %v271 = vld [vmem:[%s193 + $0x60] sm:$0xff]
        %v272 = vld [vmem:[%s193 + $0x68] sm:$0xff]
        %v273 = vld [vmem:[%s193 + $0x70] sm:$0xff]
        %v274 = vld [vmem:[%s193 + $0x78] sm:$0xff]
        %v275 = vld [vmem:[%s193 + $0x80] sm:$0xff]
        %v276 = vld [vmem:[%s193 + $0x88] sm:$0xff]
        %v277 = vld [vmem:[%s193 + $0x90] sm:$0xff]
        %v278 = vld [vmem:[%s193 + $0x98] sm:$0xff]
        %v279 = vld [vmem:[%s193 + $0xa0] sm:$0xff]
        %v280 = vld [vmem:[%s193 + $0xa8] sm:$0xff]
        %v281 = vld [vmem:[%s193 + $0xb0] sm:$0xff]
        %v282 = vld [vmem:[%s193 + $0xb8] sm:$0xff]
        %v283 = vld [vmem:[%s193 + $0xc0] sm:$0xff]
        %v284 = vld [vmem:[%s193 + $0xc8] sm:$0xff]
        %v285 = vld [vmem:[%s193 + $0xd0] sm:$0xff]
        %v286 = vld [vmem:[%s193 + $0xd8] sm:$0xff]
        %v287 = vld [vmem:[%s193 + $0xe0] sm:$0xff]
        %v288 = vld [vmem:[%s193 + $0xe8] sm:$0xff]
        %v289 = vld [vmem:[%s193 + $0xf0] sm:$0xff]
        %v290 = vld [vmem:[%s193 + $0xf8] sm:$0xff]
        %v291 = vld [vmem:[%s193 + $0x100] sm:$0xff]
        %v292 = vld [vmem:[%s193 + $0x108] sm:$0xff]
        %v293 = vld [vmem:[%s193 + $0x110] sm:$0xff]
        %v294 = vld [vmem:[%s193 + $0x118] sm:$0xff]
        %v295 = vld [vmem:[%s193 + $0x120] sm:$0xff]
        %v296 = vld [vmem:[%s193 + $0x128] sm:$0xff]
        %v297 = vld [vmem:[%s193 + $0x130] sm:$0xff]
        %v298 = vld [vmem:[%s193 + $0x138] sm:$0xff]
        %v299 = vld [vmem:[%s193 + $0x140] sm:$0xff]
        %v300 = vld [vmem:[%s193 + $0x148] sm:$0xff]
        %v301 = vld [vmem:[%s193 + $0x150] sm:$0xff]
        %v302 = vld [vmem:[%s193 + $0x158] sm:$0xff]
        %v303 = vld [vmem:[%s193 + $0x160] sm:$0xff]
        %v304 = vld [vmem:[%s193 + $0x168] sm:$0xff]
        %v305 = vld [vmem:[%s193 + $0x170] sm:$0xff]
        %v306 = vld [vmem:[%s193 + $0x178] sm:$0xff]
        %v307 = vld [vmem:[%s193 + $0x180] sm:$0xff]
        %v308 = vld [vmem:[%s193 + $0x188] sm:$0xff]
        %v309 = vld [vmem:[%s193 + $0x190] sm:$0xff]
        %v310 = vld [vmem:[%s193 + $0x198] sm:$0xff]
        %v311 = vld [vmem:[%s193 + $0x1a0] sm:$0xff]
        %v312 = vld [vmem:[%s193 + $0x1a8] sm:$0xff]
        %v313 = vld [vmem:[%s193 + $0x1b0] sm:$0xff]
        %v314 = vld [vmem:[%s193 + $0x1b8] sm:$0xff]
        %v315 = vld [vmem:[%s193 + $0x1c0] sm:$0xff]
        %v316 = vld [vmem:[%s193 + $0x1c8] sm:$0xff]
        %v317 = vld [vmem:[%s193 + $0x1d0] sm:$0xff]
        %v318 = vld [vmem:[%s193 + $0x1d8] sm:$0xff]
        %v319 = vld [vmem:[%s193 + $0x1e0] sm:$0xff]
        %v320 = vld [vmem:[%s193 + $0x1e8] sm:$0xff]
        %v321 = vld [vmem:[%s193 + $0x1f0] sm:$0xff]
        %v322 = vld [vmem:[%s193 + $0x1f8] sm:$0xff]
        %v323 = vld [vmem:[%s193 + $0x200] sm:$0xff]
        %v324 = vld [vmem:[%s193 + $0x208] sm:$0xff]
        %v325 = vld [vmem:[%s193 + $0x210] sm:$0xff]
        %v326 = vld [vmem:[%s193 + $0x218] sm:$0xff]
        %v327 = vld [vmem:[%s193 + $0x220] sm:$0xff]
        %v328 = vld [vmem:[%s193 + $0x228] sm:$0xff]
        %v329 = vld [vmem:[%s193 + $0x230] sm:$0xff]
        %v330 = vld [vmem:[%s193 + $0x238] sm:$0xff]
        %v331 = vld [vmem:[%s193 + $0x240] sm:$0xff]
        %v332 = vld [vmem:[%s193 + $0x248] sm:$0xff]
        %v333 = vld [vmem:[%s193 + $0x250] sm:$0xff]
        %v334 = vld [vmem:[%s193 + $0x258] sm:$0xff]
        %v335 = vld [vmem:[%s193 + $0x260] sm:$0xff]
        %v336 = vld [vmem:[%s193 + $0x268] sm:$0xff]
        %v337 = vld [vmem:[%s193 + $0x270] sm:$0xff]
        %v338 = vld [vmem:[%s193 + $0x278] sm:$0xff]
        %v339 = vld [vmem:[%s193 + $0x280] sm:$0xff]
        %v340 = vld [vmem:[%s193 + $0x288] sm:$0xff]
        %v341 = vld [vmem:[%s193 + $0x290] sm:$0xff]
        %v342 = vld [vmem:[%s193 + $0x298] sm:$0xff]
        %v343 = vld [vmem:[%s193 + $0x2a0] sm:$0xff]
        %v344 = vld [vmem:[%s193 + $0x2a8] sm:$0xff]
        %v345 = vld [vmem:[%s193 + $0x2b0] sm:$0xff]
        %v346 = vld [vmem:[%s193 + $0x2b8] sm:$0xff]
        %v347 = vld [vmem:[%s193 + $0x2c0] sm:$0xff]
        %v348 = vld [vmem:[%s193 + $0x2c8] sm:$0xff]
        %v349 = vld [vmem:[%s193 + $0x2d0] sm:$0xff]
        %v350 = vld [vmem:[%s193 + $0x2d8] sm:$0xff]
        %v351 = vld [vmem:[%s193 + $0x2e0] sm:$0xff]
        %v352 = vld [vmem:[%s193 + $0x2e8] sm:$0xff]
        %v353 = vld [vmem:[%s193 + $0x2f0] sm:$0xff]
        %v354 = vld [vmem:[%s193 + $0x2f8] sm:$0xff]
        %v355 = vld [vmem:[%s193 + $0x300] sm:$0xff]
        %v356 = vld [vmem:[%s193 + $0x308] sm:$0xff]
        %v357 = vld [vmem:[%s193 + $0x310] sm:$0xff]
        %v358 = vld [vmem:[%s193 + $0x318] sm:$0xff]
        %v359 = vld [vmem:[%s193 + $0x320] sm:$0xff]
        %v360 = vld [vmem:[%s193 + $0x328] sm:$0xff]
        %v361 = vld [vmem:[%s193 + $0x330] sm:$0xff]
        %v362 = vld [vmem:[%s193 + $0x338] sm:$0xff]
        %v363 = vld [vmem:[%s193 + $0x340] sm:$0xff]
        %v364 = vld [vmem:[%s193 + $0x348] sm:$0xff]
        %v365 = vld [vmem:[%s193 + $0x350] sm:$0xff]
        %v366 = vld [vmem:[%s193 + $0x358] sm:$0xff]
        %v367 = vld [vmem:[%s193 + $0x360] sm:$0xff]
        %v368 = vld [vmem:[%s193 + $0x368] sm:$0xff]
        %v369 = vld [vmem:[%s193 + $0x370] sm:$0xff]
        %v370 = vld [vmem:[%s193 + $0x378] sm:$0xff]
        %v371 = vld [vmem:[%s193 + $0x380] sm:$0xff]
        %v372 = vld [vmem:[%s193 + $0x388] sm:$0xff]
        %v373 = vld [vmem:[%s193 + $0x390] sm:$0xff]
        %v374 = vld [vmem:[%s193 + $0x398] sm:$0xff]
        %v375 = vld [vmem:[%s193 + $0x3a0] sm:$0xff]
        %v376 = vld [vmem:[%s193 + $0x3a8] sm:$0xff]
        %v377 = vld [vmem:[%s193 + $0x3b0] sm:$0xff]
        %v378 = vld [vmem:[%s193 + $0x3b8] sm:$0xff]
        %380 = vset.pattern.permute.xlu0 0
        %381 = vperm.xlu0 %380, %v255
        %v382 = vpop.permute.xlu0 %381
        %385 = vset.pattern.permute.xlu0 0
        %386 = vperm.xlu0 %385, %v256
        %v387 = vpop.permute.xlu0 %386
        %390 = vset.pattern.permute.xlu0 0
        %391 = vperm.xlu0 %390, %v257
        %v392 = vpop.permute.xlu0 %391
        %395 = vset.pattern.permute.xlu0 0
        %396 = vperm.xlu0 %395, %v258
        %v397 = vpop.permute.xlu0 %396
        %vm399 = vcmask 785408
        %v401 = vsel %vm399, %v242, 0
        %v404 = vsel %vm399, %v246, 0
        %v407 = vsel %vm399, %v250, 0
        %v410 = vsel %vm399, %v254, 0
        %v412 = vand.u32 %v290, 4294901760
        %413 = vmatprep.subr.mxu0 %v412
        %v414 = vand.u32 %v289, 4294901760
        %415 = vmatpush1.msra.mxu0 %v414
        %v416 = vand.u32 %v288, 4294901760
        %417 = vmatprep.subr.mxu0 %v416
        %v418 = vand.u32 %v287, 4294901760
        %419 = vmatpush1.msra.mxu0 %v418
        %v420 = vand.u32 %v286, 4294901760
        %421 = vmatprep.subr.mxu0 %v420
        %v422 = vand.u32 %v285, 4294901760
        %423 = vmatpush1.msra.mxu0 %v422
        %v424 = vand.u32 %v284, 4294901760
        %425 = vmatprep.subr.mxu0 %v424
        %v426 = vand.u32 %v283, 4294901760
        %427 = vmatpush1.msra.mxu0 %v426
        %v428 = vand.u32 %v282, 4294901760
        %429 = vmatprep.subr.mxu0 %v428
        %v430 = vand.u32 %v281, 4294901760
        %431 = vmatpush1.msra.mxu0 %v430
        %v432 = vand.u32 %v280, 4294901760
        %433 = vmatprep.subr.mxu0 %v432
        %v434 = vand.u32 %v279, 4294901760
        %435 = vmatpush1.msra.mxu0 %v434
        %v436 = vand.u32 %v278, 4294901760
        %437 = vmatprep.subr.mxu0 %v436
        %v438 = vand.u32 %v277, 4294901760
        %439 = vmatpush1.msra.mxu0 %v438
        %v440 = vand.u32 %v276, 4294901760
        %441 = vmatprep.subr.mxu0 %v440
        %v442 = vand.u32 %v275, 4294901760
        %443 = vmatpush1.msra.mxu0 %v442
        %v444 = vand.u32 %v274, 4294901760
        %445 = vmatprep.subr.mxu0 %v444
        %v446 = vand.u32 %v273, 4294901760
        %447 = vmatpush1.msra.mxu0 %v446
        %v448 = vand.u32 %v272, 4294901760
        %449 = vmatprep.subr.mxu0 %v448
        %v450 = vand.u32 %v271, 4294901760
        %451 = vmatpush1.msra.mxu0 %v450
        %v452 = vand.u32 %v270, 4294901760
        %453 = vmatprep.subr.mxu0 %v452
        %v454 = vand.u32 %v269, 4294901760
        %455 = vmatpush1.msra.mxu0 %v454
        %v456 = vand.u32 %v268, 4294901760
        %457 = vmatprep.subr.mxu0 %v456
        %v458 = vand.u32 %v267, 4294901760
        %459 = vmatpush1.msra.mxu0 %v458
        %v460 = vand.u32 %v266, 4294901760
        %461 = vmatprep.subr.mxu0 %v460
        %v462 = vand.u32 %v265, 4294901760
        %463 = vmatpush1.msra.mxu0 %v462
        %v464 = vand.u32 %v264, 4294901760
        %465 = vmatprep.subr.mxu0 %v464
        %v466 = vand.u32 %v263, 4294901760
        %467 = vmatpush1.msra.mxu0 %v466
        %v468 = vand.u32 %v262, 4294901760
        %469 = vmatprep.subr.mxu0 %v468
        %v470 = vand.u32 %v261, 4294901760
        %471 = vmatpush1.msra.mxu0 %v470
        %v472 = vand.u32 %v260, 4294901760
        %473 = vmatprep.subr.mxu0 %v472
        %v474 = vand.u32 %v259, 4294901760
        %475 = vmatpush1.msra.mxu0 %v474
        %v476 = vand.u32 %v322, 4294901760
        %477 = vmatprep.subr.mxu0 %v476
        %v478 = vand.u32 %v321, 4294901760
        %479 = vmatpush2.msra.mxu0 %v478
        %v480 = vand.u32 %v320, 4294901760
        %481 = vmatprep.subr.mxu0 %v480
        %v482 = vand.u32 %v319, 4294901760
        %483 = vmatpush2.msra.mxu0 %v482
        %v484 = vand.u32 %v318, 4294901760
        %485 = vmatprep.subr.mxu0 %v484
        %v486 = vand.u32 %v317, 4294901760
        %487 = vmatpush2.msra.mxu0 %v486
        %v488 = vand.u32 %v316, 4294901760
        %489 = vmatprep.subr.mxu0 %v488
        %v490 = vand.u32 %v315, 4294901760
        %491 = vmatpush2.msra.mxu0 %v490
        %v492 = vand.u32 %v314, 4294901760
        %493 = vmatprep.subr.mxu0 %v492
        %v494 = vand.u32 %v313, 4294901760
        %495 = vmatpush2.msra.mxu0 %v494
        %v496 = vand.u32 %v312, 4294901760
        %497 = vmatprep.subr.mxu0 %v496
        %v498 = vand.u32 %v311, 4294901760
        %499 = vmatpush2.msra.mxu0 %v498
        %v500 = vand.u32 %v310, 4294901760
        %501 = vmatprep.subr.mxu0 %v500
        %v502 = vand.u32 %v309, 4294901760
        %503 = vmatpush2.msra.mxu0 %v502
        %v504 = vand.u32 %v308, 4294901760
        %505 = vmatprep.subr.mxu0 %v504
        %v506 = vand.u32 %v307, 4294901760
        %507 = vmatpush2.msra.mxu0 %v506
        %v508 = vand.u32 %v306, 4294901760
        %509 = vmatprep.subr.mxu0 %v508
        %v510 = vand.u32 %v305, 4294901760
        %511 = vmatpush2.msra.mxu0 %v510
        %v512 = vand.u32 %v304, 4294901760
        %513 = vmatprep.subr.mxu0 %v512
        %v514 = vand.u32 %v303, 4294901760
        %515 = vmatpush2.msra.mxu0 %v514
        %v516 = vand.u32 %v302, 4294901760
        %517 = vmatprep.subr.mxu0 %v516
        %v518 = vand.u32 %v301, 4294901760
        %519 = vmatpush2.msra.mxu0 %v518
        %v520 = vand.u32 %v300, 4294901760
        %521 = vmatprep.subr.mxu0 %v520
        %v522 = vand.u32 %v299, 4294901760
        %523 = vmatpush2.msra.mxu0 %v522
        %v524 = vand.u32 %v298, 4294901760
        %525 = vmatprep.subr.mxu0 %v524
        %v526 = vand.u32 %v297, 4294901760
        %527 = vmatpush2.msra.mxu0 %v526
        %v528 = vand.u32 %v296, 4294901760
        %529 = vmatprep.subr.mxu0 %v528
        %v530 = vand.u32 %v295, 4294901760
        %531 = vmatpush2.msra.mxu0 %v530
        %v532 = vand.u32 %v294, 4294901760
        %533 = vmatprep.subr.mxu0 %v532
        %v534 = vand.u32 %v293, 4294901760
        %535 = vmatpush2.msra.mxu0 %v534
        %v536 = vand.u32 %v292, 4294901760
        %537 = vmatprep.subr.mxu0 %v536
        %v538 = vand.u32 %v291, 4294901760
        %539 = vmatpush2.msra.mxu0 %v538
        %v540 = vand.u32 %v240, 4294901760
        %v541 = vsub.f32 %v240, %v540
        %v542 = vand.u32 %v541, 4294901760
        %v543 = vsub.f32 %v541, %v542
        %v544 = vand.u32 %v543, 4294901760
        %545 = vmatprep.mubr.f32.mxu0 %v544
        %v546 = vand.u32 %v239, 4294901760
        %v547 = vsub.f32 %v239, %v546
        %v548 = vand.u32 %v547, 4294901760
        %v549 = vsub.f32 %v547, %v548
        %v550 = vand.u32 %v549, 4294901760
        %551 = vmatmul.mubr.f32.gmra.mxu0 %v550
        %v552 = vpop.f32.mrf.mxu0
        %v553 = vadd.f32 %v382, %v552
        %v554 = vpop.f32.mrf.mxu0
        %v555 = vadd.f32 %v382, %v554
        %v556 = vand.u32 %v244, 4294901760
        %v557 = vsub.f32 %v244, %v556
        %v558 = vand.u32 %v557, 4294901760
        %v559 = vsub.f32 %v557, %v558
        %v560 = vand.u32 %v559, 4294901760
        %561 = vmatprep.mubr.f32.mxu0 %v560
        %v562 = vand.u32 %v243, 4294901760
        %v563 = vsub.f32 %v243, %v562
        %v564 = vand.u32 %v563, 4294901760
        %v565 = vsub.f32 %v563, %v564
        %v566 = vand.u32 %v565, 4294901760
        %567 = vmatmul.mubr.f32.gmra.mxu0 %v566
        %v568 = vpop.f32.mrf.mxu0
        %v569 = vadd.f32 %v387, %v568
        %v570 = vpop.f32.mrf.mxu0
        %v571 = vadd.f32 %v387, %v570
        %v572 = vand.u32 %v248, 4294901760
        %v573 = vsub.f32 %v248, %v572
        %v574 = vand.u32 %v573, 4294901760
        %v575 = vsub.f32 %v573, %v574
        %v576 = vand.u32 %v575, 4294901760
        %577 = vmatprep.mubr.f32.mxu0 %v576
        %v578 = vand.u32 %v247, 4294901760
        %v579 = vsub.f32 %v247, %v578
        %v580 = vand.u32 %v579, 4294901760
        %v581 = vsub.f32 %v579, %v580
        %v582 = vand.u32 %v581, 4294901760
        %583 = vmatmul.mubr.f32.gmra.mxu0 %v582
        %v584 = vpop.f32.mrf.mxu0
        %v585 = vadd.f32 %v392, %v584
        %v586 = vpop.f32.mrf.mxu0
        %v587 = vadd.f32 %v392, %v586
        %v588 = vand.u32 %v252, 4294901760
        %v589 = vsub.f32 %v252, %v588
        %v590 = vand.u32 %v589, 4294901760
        %v591 = vsub.f32 %v589, %v590
        %v592 = vand.u32 %v591, 4294901760
        %593 = vmatprep.mubr.f32.mxu0 %v592
        %v594 = vand.u32 %v251, 4294901760
        %v595 = vsub.f32 %v251, %v594
        %v596 = vand.u32 %v595, 4294901760
        %v597 = vsub.f32 %v595, %v596
        %v598 = vand.u32 %v597, 4294901760
        %599 = vmatmul.mubr.f32.gmra.mxu0 %v598
        %v600 = vpop.f32.mrf.mxu0
        %v601 = vadd.f32 %v397, %v600
        %v602 = vpop.f32.mrf.mxu0
        %v603 = vadd.f32 %v397, %v602
        %604 = vdwg.mxu0
        %v605 = vand.u32 %v290, 4294901760
        %v606 = vsub.f32 %v290, %v605
        %v607 = vand.u32 %v606, 4294901760
        %v608 = vsub.f32 %v606, %v607
        %v609 = vand.u32 %v608, 4294901760
        %610 = vmatprep.subr.mxu0 %v609
        %v611 = vand.u32 %v289, 4294901760
        %v612 = vsub.f32 %v289, %v611
        %v613 = vand.u32 %v612, 4294901760
        %v614 = vsub.f32 %v612, %v613
        %v615 = vand.u32 %v614, 4294901760
        %616 = vmatpush1.msra.mxu0 %v615
        %v617 = vand.u32 %v288, 4294901760
        %v618 = vsub.f32 %v288, %v617
        %v619 = vand.u32 %v618, 4294901760
        %v620 = vsub.f32 %v618, %v619
        %v621 = vand.u32 %v620, 4294901760
        %622 = vmatprep.subr.mxu0 %v621
        %v623 = vand.u32 %v287, 4294901760
        %v624 = vsub.f32 %v287, %v623
        %v625 = vand.u32 %v624, 4294901760
        %v626 = vsub.f32 %v624, %v625
        %v627 = vand.u32 %v626, 4294901760
        %628 = vmatpush1.msra.mxu0 %v627
        %v629 = vand.u32 %v286, 4294901760
        %v630 = vsub.f32 %v286, %v629
        %v631 = vand.u32 %v630, 4294901760
        %v632 = vsub.f32 %v630, %v631
        %v633 = vand.u32 %v632, 4294901760
        %634 = vmatprep.subr.mxu0 %v633
        %v635 = vand.u32 %v285, 4294901760
        %v636 = vsub.f32 %v285, %v635
        %v637 = vand.u32 %v636, 4294901760
        %v638 = vsub.f32 %v636, %v637
        %v639 = vand.u32 %v638, 4294901760
        %640 = vmatpush1.msra.mxu0 %v639
        %v641 = vand.u32 %v284, 4294901760
        %v642 = vsub.f32 %v284, %v641
        %v643 = vand.u32 %v642, 4294901760
        %v644 = vsub.f32 %v642, %v643
        %v645 = vand.u32 %v644, 4294901760
        %646 = vmatprep.subr.mxu0 %v645
        %v647 = vand.u32 %v283, 4294901760
        %v648 = vsub.f32 %v283, %v647
        %v649 = vand.u32 %v648, 4294901760
        %v650 = vsub.f32 %v648, %v649
        %v651 = vand.u32 %v650, 4294901760
        %652 = vmatpush1.msra.mxu0 %v651
        %v653 = vand.u32 %v282, 4294901760
        %v654 = vsub.f32 %v282, %v653
        %v655 = vand.u32 %v654, 4294901760
        %v656 = vsub.f32 %v654, %v655
        %v657 = vand.u32 %v656, 4294901760
        %658 = vmatprep.subr.mxu0 %v657
        %v659 = vand.u32 %v281, 4294901760
        %v660 = vsub.f32 %v281, %v659
        %v661 = vand.u32 %v660, 4294901760
        %v662 = vsub.f32 %v660, %v661
        %v663 = vand.u32 %v662, 4294901760
        %664 = vmatpush1.msra.mxu0 %v663
        %v665 = vand.u32 %v280, 4294901760
        %v666 = vsub.f32 %v280, %v665
        %v667 = vand.u32 %v666, 4294901760
        %v668 = vsub.f32 %v666, %v667
        %v669 = vand.u32 %v668, 4294901760
        %670 = vmatprep.subr.mxu0 %v669
        %v671 = vand.u32 %v279, 4294901760
        %v672 = vsub.f32 %v279, %v671
        %v673 = vand.u32 %v672, 4294901760
        %v674 = vsub.f32 %v672, %v673
        %v675 = vand.u32 %v674, 4294901760
        %676 = vmatpush1.msra.mxu0 %v675
        %v677 = vand.u32 %v278, 4294901760
        %v678 = vsub.f32 %v278, %v677
        %v679 = vand.u32 %v678, 4294901760
        %v680 = vsub.f32 %v678, %v679
        %v681 = vand.u32 %v680, 4294901760
        %682 = vmatprep.subr.mxu0 %v681
        %v683 = vand.u32 %v277, 4294901760
        %v684 = vsub.f32 %v277, %v683
        %v685 = vand.u32 %v684, 4294901760
        %v686 = vsub.f32 %v684, %v685
        %v687 = vand.u32 %v686, 4294901760
        %688 = vmatpush1.msra.mxu0 %v687
        %v689 = vand.u32 %v276, 4294901760
        %v690 = vsub.f32 %v276, %v689
        %v691 = vand.u32 %v690, 4294901760
        %v692 = vsub.f32 %v690, %v691
        %v693 = vand.u32 %v692, 4294901760
        %694 = vmatprep.subr.mxu0 %v693
        %v695 = vand.u32 %v275, 4294901760
        %v696 = vsub.f32 %v275, %v695
        %v697 = vand.u32 %v696, 4294901760
        %v698 = vsub.f32 %v696, %v697
        %v699 = vand.u32 %v698, 4294901760
        %700 = vmatpush1.msra.mxu0 %v699
        %v701 = vand.u32 %v274, 4294901760
        %v702 = vsub.f32 %v274, %v701
        %v703 = vand.u32 %v702, 4294901760
        %v704 = vsub.f32 %v702, %v703
        %v705 = vand.u32 %v704, 4294901760
        %706 = vmatprep.subr.mxu0 %v705
        %v707 = vand.u32 %v273, 4294901760
        %v708 = vsub.f32 %v273, %v707
        %v709 = vand.u32 %v708, 4294901760
        %v710 = vsub.f32 %v708, %v709
        %v711 = vand.u32 %v710, 4294901760
        %712 = vmatpush1.msra.mxu0 %v711
        %v713 = vand.u32 %v272, 4294901760
        %v714 = vsub.f32 %v272, %v713
        %v715 = vand.u32 %v714, 4294901760
        %v716 = vsub.f32 %v714, %v715
        %v717 = vand.u32 %v716, 4294901760
        %718 = vmatprep.subr.mxu0 %v717
        %v719 = vand.u32 %v271, 4294901760
        %v720 = vsub.f32 %v271, %v719
        %v721 = vand.u32 %v720, 4294901760
        %v722 = vsub.f32 %v720, %v721
        %v723 = vand.u32 %v722, 4294901760
        %724 = vmatpush1.msra.mxu0 %v723
        %v725 = vand.u32 %v270, 4294901760
        %v726 = vsub.f32 %v270, %v725
        %v727 = vand.u32 %v726, 4294901760
        %v728 = vsub.f32 %v726, %v727
        %v729 = vand.u32 %v728, 4294901760
        %730 = vmatprep.subr.mxu0 %v729
        %v731 = vand.u32 %v269, 4294901760
        %v732 = vsub.f32 %v269, %v731
        %v733 = vand.u32 %v732, 4294901760
        %v734 = vsub.f32 %v732, %v733
        %v735 = vand.u32 %v734, 4294901760
        %736 = vmatpush1.msra.mxu0 %v735
        %v737 = vand.u32 %v268, 4294901760
        %v738 = vsub.f32 %v268, %v737
        %v739 = vand.u32 %v738, 4294901760
        %v740 = vsub.f32 %v738, %v739
        %v741 = vand.u32 %v740, 4294901760
        %742 = vmatprep.subr.mxu0 %v741
        %v743 = vand.u32 %v267, 4294901760
        %v744 = vsub.f32 %v267, %v743
        %v745 = vand.u32 %v744, 4294901760
        %v746 = vsub.f32 %v744, %v745
        %v747 = vand.u32 %v746, 4294901760
        %748 = vmatpush1.msra.mxu0 %v747
        %v749 = vand.u32 %v266, 4294901760
        %v750 = vsub.f32 %v266, %v749
        %v751 = vand.u32 %v750, 4294901760
        %v752 = vsub.f32 %v750, %v751
        %v753 = vand.u32 %v752, 4294901760
        %754 = vmatprep.subr.mxu0 %v753
        %v755 = vand.u32 %v265, 4294901760
        %v756 = vsub.f32 %v265, %v755
        %v757 = vand.u32 %v756, 4294901760
        %v758 = vsub.f32 %v756, %v757
        %v759 = vand.u32 %v758, 4294901760
        %760 = vmatpush1.msra.mxu0 %v759
        %v761 = vand.u32 %v264, 4294901760
        %v762 = vsub.f32 %v264, %v761
        %v763 = vand.u32 %v762, 4294901760
        %v764 = vsub.f32 %v762, %v763
        %v765 = vand.u32 %v764, 4294901760
        %766 = vmatprep.subr.mxu0 %v765
        %v767 = vand.u32 %v263, 4294901760
        %v768 = vsub.f32 %v263, %v767
        %v769 = vand.u32 %v768, 4294901760
        %v770 = vsub.f32 %v768, %v769
        %v771 = vand.u32 %v770, 4294901760
        %772 = vmatpush1.msra.mxu0 %v771
        %v773 = vand.u32 %v262, 4294901760
        %v774 = vsub.f32 %v262, %v773
        %v775 = vand.u32 %v774, 4294901760
        %v776 = vsub.f32 %v774, %v775
        %v777 = vand.u32 %v776, 4294901760
        %778 = vmatprep.subr.mxu0 %v777
        %v779 = vand.u32 %v261, 4294901760
        %v780 = vsub.f32 %v261, %v779
        %v781 = vand.u32 %v780, 4294901760
        %v782 = vsub.f32 %v780, %v781
        %v783 = vand.u32 %v782, 4294901760
        %784 = vmatpush1.msra.mxu0 %v783
        %v785 = vand.u32 %v260, 4294901760
        %v786 = vsub.f32 %v260, %v785
        %v787 = vand.u32 %v786, 4294901760
        %v788 = vsub.f32 %v786, %v787
        %v789 = vand.u32 %v788, 4294901760
        %790 = vmatprep.subr.mxu0 %v789
        %v791 = vand.u32 %v259, 4294901760
        %v792 = vsub.f32 %v259, %v791
        %v793 = vand.u32 %v792, 4294901760
        %v794 = vsub.f32 %v792, %v793
        %v795 = vand.u32 %v794, 4294901760
        %796 = vmatpush1.msra.mxu0 %v795
        %v797 = vand.u32 %v322, 4294901760
        %v798 = vsub.f32 %v322, %v797
        %v799 = vand.u32 %v798, 4294901760
        %v800 = vsub.f32 %v798, %v799
        %v801 = vand.u32 %v800, 4294901760
        %802 = vmatprep.subr.mxu0 %v801
        %v803 = vand.u32 %v321, 4294901760
        %v804 = vsub.f32 %v321, %v803
        %v805 = vand.u32 %v804, 4294901760
        %v806 = vsub.f32 %v804, %v805
        %v807 = vand.u32 %v806, 4294901760
        %808 = vmatpush2.msra.mxu0 %v807
        %v809 = vand.u32 %v320, 4294901760
        %v810 = vsub.f32 %v320, %v809
        %v811 = vand.u32 %v810, 4294901760
        %v812 = vsub.f32 %v810, %v811
        %v813 = vand.u32 %v812, 4294901760
        %814 = vmatprep.subr.mxu0 %v813
        %v815 = vand.u32 %v319, 4294901760
        %v816 = vsub.f32 %v319, %v815
        %v817 = vand.u32 %v816, 4294901760
        %v818 = vsub.f32 %v816, %v817
        %v819 = vand.u32 %v818, 4294901760
        %820 = vmatpush2.msra.mxu0 %v819
        %v821 = vand.u32 %v318, 4294901760
        %v822 = vsub.f32 %v318, %v821
        %v823 = vand.u32 %v822, 4294901760
        %v824 = vsub.f32 %v822, %v823
        %v825 = vand.u32 %v824, 4294901760
        %826 = vmatprep.subr.mxu0 %v825
        %v827 = vand.u32 %v317, 4294901760
        %v828 = vsub.f32 %v317, %v827
        %v829 = vand.u32 %v828, 4294901760
        %v830 = vsub.f32 %v828, %v829
        %v831 = vand.u32 %v830, 4294901760
        %832 = vmatpush2.msra.mxu0 %v831
        %v833 = vand.u32 %v316, 4294901760
        %v834 = vsub.f32 %v316, %v833
        %v835 = vand.u32 %v834, 4294901760
        %v836 = vsub.f32 %v834, %v835
        %v837 = vand.u32 %v836, 4294901760
        %838 = vmatprep.subr.mxu0 %v837
        %v839 = vand.u32 %v315, 4294901760
        %v840 = vsub.f32 %v315, %v839
        %v841 = vand.u32 %v840, 4294901760
        %v842 = vsub.f32 %v840, %v841
        %v843 = vand.u32 %v842, 4294901760
        %844 = vmatpush2.msra.mxu0 %v843
        %v845 = vand.u32 %v314, 4294901760
        %v846 = vsub.f32 %v314, %v845
        %v847 = vand.u32 %v846, 4294901760
        %v848 = vsub.f32 %v846, %v847
        %v849 = vand.u32 %v848, 4294901760
        %850 = vmatprep.subr.mxu0 %v849
        %v851 = vand.u32 %v313, 4294901760
        %v852 = vsub.f32 %v313, %v851
        %v853 = vand.u32 %v852, 4294901760
        %v854 = vsub.f32 %v852, %v853
        %v855 = vand.u32 %v854, 4294901760
        %856 = vmatpush2.msra.mxu0 %v855
        %v857 = vand.u32 %v312, 4294901760
        %v858 = vsub.f32 %v312, %v857
        %v859 = vand.u32 %v858, 4294901760
        %v860 = vsub.f32 %v858, %v859
        %v861 = vand.u32 %v860, 4294901760
        %862 = vmatprep.subr.mxu0 %v861
        %v863 = vand.u32 %v311, 4294901760
        %v864 = vsub.f32 %v311, %v863
        %v865 = vand.u32 %v864, 4294901760
        %v866 = vsub.f32 %v864, %v865
        %v867 = vand.u32 %v866, 4294901760
        %868 = vmatpush2.msra.mxu0 %v867
        %v869 = vand.u32 %v310, 4294901760
        %v870 = vsub.f32 %v310, %v869
        %v871 = vand.u32 %v870, 4294901760
        %v872 = vsub.f32 %v870, %v871
        %v873 = vand.u32 %v872, 4294901760
        %874 = vmatprep.subr.mxu0 %v873
        %v875 = vand.u32 %v309, 4294901760
        %v876 = vsub.f32 %v309, %v875
        %v877 = vand.u32 %v876, 4294901760
        %v878 = vsub.f32 %v876, %v877
        %v879 = vand.u32 %v878, 4294901760
        %880 = vmatpush2.msra.mxu0 %v879
        %v881 = vand.u32 %v308, 4294901760
        %v882 = vsub.f32 %v308, %v881
        %v883 = vand.u32 %v882, 4294901760
        %v884 = vsub.f32 %v882, %v883
        %v885 = vand.u32 %v884, 4294901760
        %886 = vmatprep.subr.mxu0 %v885
        %v887 = vand.u32 %v307, 4294901760
        %v888 = vsub.f32 %v307, %v887
        %v889 = vand.u32 %v888, 4294901760
        %v890 = vsub.f32 %v888, %v889
        %v891 = vand.u32 %v890, 4294901760
        %892 = vmatpush2.msra.mxu0 %v891
        %v893 = vand.u32 %v306, 4294901760
        %v894 = vsub.f32 %v306, %v893
        %v895 = vand.u32 %v894, 4294901760
        %v896 = vsub.f32 %v894, %v895
        %v897 = vand.u32 %v896, 4294901760
        %898 = vmatprep.subr.mxu0 %v897
        %v899 = vand.u32 %v305, 4294901760
        %v900 = vsub.f32 %v305, %v899
        %v901 = vand.u32 %v900, 4294901760
        %v902 = vsub.f32 %v900, %v901
        %v903 = vand.u32 %v902, 4294901760
        %904 = vmatpush2.msra.mxu0 %v903
        %v905 = vand.u32 %v304, 4294901760
        %v906 = vsub.f32 %v304, %v905
        %v907 = vand.u32 %v906, 4294901760
        %v908 = vsub.f32 %v906, %v907
        %v909 = vand.u32 %v908, 4294901760
        %910 = vmatprep.subr.mxu0 %v909
        %v911 = vand.u32 %v303, 4294901760
        %v912 = vsub.f32 %v303, %v911
        %v913 = vand.u32 %v912, 4294901760
        %v914 = vsub.f32 %v912, %v913
        %v915 = vand.u32 %v914, 4294901760
        %916 = vmatpush2.msra.mxu0 %v915
        %v917 = vand.u32 %v302, 4294901760
        %v918 = vsub.f32 %v302, %v917
        %v919 = vand.u32 %v918, 4294901760
        %v920 = vsub.f32 %v918, %v919
        %v921 = vand.u32 %v920, 4294901760
        %922 = vmatprep.subr.mxu0 %v921
        %v923 = vand.u32 %v301, 4294901760
        %v924 = vsub.f32 %v301, %v923
        %v925 = vand.u32 %v924, 4294901760
        %v926 = vsub.f32 %v924, %v925
        %v927 = vand.u32 %v926, 4294901760
        %928 = vmatpush2.msra.mxu0 %v927
        %v929 = vand.u32 %v300, 4294901760
        %v930 = vsub.f32 %v300, %v929
        %v931 = vand.u32 %v930, 4294901760
        %v932 = vsub.f32 %v930, %v931
        %v933 = vand.u32 %v932, 4294901760
        %934 = vmatprep.subr.mxu0 %v933
        %v935 = vand.u32 %v299, 4294901760
        %v936 = vsub.f32 %v299, %v935
        %v937 = vand.u32 %v936, 4294901760
        %v938 = vsub.f32 %v936, %v937
        %v939 = vand.u32 %v938, 4294901760
        %940 = vmatpush2.msra.mxu0 %v939
        %v941 = vand.u32 %v298, 4294901760
        %v942 = vsub.f32 %v298, %v941
        %v943 = vand.u32 %v942, 4294901760
        %v944 = vsub.f32 %v942, %v943
        %v945 = vand.u32 %v944, 4294901760
        %946 = vmatprep.subr.mxu0 %v945
        %v947 = vand.u32 %v297, 4294901760
        %v948 = vsub.f32 %v297, %v947
        %v949 = vand.u32 %v948, 4294901760
        %v950 = vsub.f32 %v948, %v949
        %v951 = vand.u32 %v950, 4294901760
        %952 = vmatpush2.msra.mxu0 %v951
        %v953 = vand.u32 %v296, 4294901760
        %v954 = vsub.f32 %v296, %v953
        %v955 = vand.u32 %v954, 4294901760
        %v956 = vsub.f32 %v954, %v955
        %v957 = vand.u32 %v956, 4294901760
        %958 = vmatprep.subr.mxu0 %v957
        %v959 = vand.u32 %v295, 4294901760
        %v960 = vsub.f32 %v295, %v959
        %v961 = vand.u32 %v960, 4294901760
        %v962 = vsub.f32 %v960, %v961
        %v963 = vand.u32 %v962, 4294901760
        %964 = vmatpush2.msra.mxu0 %v963
        %v965 = vand.u32 %v294, 4294901760
        %v966 = vsub.f32 %v294, %v965
        %v967 = vand.u32 %v966, 4294901760
        %v968 = vsub.f32 %v966, %v967
        %v969 = vand.u32 %v968, 4294901760
        %970 = vmatprep.subr.mxu0 %v969
        %v971 = vand.u32 %v293, 4294901760
        %v972 = vsub.f32 %v293, %v971
        %v973 = vand.u32 %v972, 4294901760
        %v974 = vsub.f32 %v972, %v973
        %v975 = vand.u32 %v974, 4294901760
        %976 = vmatpush2.msra.mxu0 %v975
        %v977 = vand.u32 %v292, 4294901760
        %v978 = vsub.f32 %v292, %v977
        %v979 = vand.u32 %v978, 4294901760
        %v980 = vsub.f32 %v978, %v979
        %v981 = vand.u32 %v980, 4294901760
        %982 = vmatprep.subr.mxu0 %v981
        %v983 = vand.u32 %v291, 4294901760
        %v984 = vsub.f32 %v291, %v983
        %v985 = vand.u32 %v984, 4294901760
        %v986 = vsub.f32 %v984, %v985
        %v987 = vand.u32 %v986, 4294901760
        %988 = vmatpush2.msra.mxu0 %v987
        %v989 = vand.u32 %v240, 4294901760
        %990 = vmatprep.mubr.f32.mxu0 %v989
        %v991 = vand.u32 %v239, 4294901760
        %992 = vmatmul.mubr.f32.gmra.mxu0 %v991
        %v993 = vpop.f32.mrf.mxu0
        %v994 = vadd.f32 %v553, %v993
        %v995 = vpop.f32.mrf.mxu0
        %v996 = vadd.f32 %v555, %v995
        %v997 = vand.u32 %v244, 4294901760
        %998 = vmatprep.mubr.f32.mxu0 %v997
        %v999 = vand.u32 %v243, 4294901760
        %1000 = vmatmul.mubr.f32.gmra.mxu0 %v999
        %v1001 = vpop.f32.mrf.mxu0
        %v1002 = vadd.f32 %v569, %v1001
        %v1003 = vpop.f32.mrf.mxu0
        %v1004 = vadd.f32 %v571, %v1003
        %v1005 = vand.u32 %v248, 4294901760
        %1006 = vmatprep.mubr.f32.mxu0 %v1005
        %v1007 = vand.u32 %v247, 4294901760
        %1008 = vmatmul.mubr.f32.gmra.mxu0 %v1007
        %v1009 = vpop.f32.mrf.mxu0
        %v1010 = vadd.f32 %v585, %v1009
        %v1011 = vpop.f32.mrf.mxu0
        %v1012 = vadd.f32 %v587, %v1011
        %v1013 = vand.u32 %v252, 4294901760
        %1014 = vmatprep.mubr.f32.mxu0 %v1013
        %v1015 = vand.u32 %v251, 4294901760
        %1016 = vmatmul.mubr.f32.gmra.mxu0 %v1015
        %v1017 = vpop.f32.mrf.mxu0
        %v1018 = vadd.f32 %v601, %v1017
        %v1019 = vpop.f32.mrf.mxu0
        %v1020 = vadd.f32 %v603, %v1019
        %1021 = vdwg.mxu0
        %v1022 = vand.u32 %v290, 4294901760
        %v1023 = vsub.f32 %v290, %v1022
        %1024 = vmatprep.subr.mxu0 %v1023
        %v1025 = vand.u32 %v289, 4294901760
        %v1026 = vsub.f32 %v289, %v1025
        %1027 = vmatpush1.msra.mxu0 %v1026
        %v1028 = vand.u32 %v288, 4294901760
        %v1029 = vsub.f32 %v288, %v1028
        %1030 = vmatprep.subr.mxu0 %v1029
        %v1031 = vand.u32 %v287, 4294901760
        %v1032 = vsub.f32 %v287, %v1031
        %1033 = vmatpush1.msra.mxu0 %v1032
        %v1034 = vand.u32 %v286, 4294901760
        %v1035 = vsub.f32 %v286, %v1034
        %1036 = vmatprep.subr.mxu0 %v1035
        %v1037 = vand.u32 %v285, 4294901760
        %v1038 = vsub.f32 %v285, %v1037
        %1039 = vmatpush1.msra.mxu0 %v1038
        %v1040 = vand.u32 %v284, 4294901760
        %v1041 = vsub.f32 %v284, %v1040
        %1042 = vmatprep.subr.mxu0 %v1041
        %v1043 = vand.u32 %v283, 4294901760
        %v1044 = vsub.f32 %v283, %v1043
        %1045 = vmatpush1.msra.mxu0 %v1044
        %v1046 = vand.u32 %v282, 4294901760
        %v1047 = vsub.f32 %v282, %v1046
        %1048 = vmatprep.subr.mxu0 %v1047
        %v1049 = vand.u32 %v281, 4294901760
        %v1050 = vsub.f32 %v281, %v1049
        %1051 = vmatpush1.msra.mxu0 %v1050
        %v1052 = vand.u32 %v280, 4294901760
        %v1053 = vsub.f32 %v280, %v1052
        %1054 = vmatprep.subr.mxu0 %v1053
        %v1055 = vand.u32 %v279, 4294901760
        %v1056 = vsub.f32 %v279, %v1055
        %1057 = vmatpush1.msra.mxu0 %v1056
        %v1058 = vand.u32 %v278, 4294901760
        %v1059 = vsub.f32 %v278, %v1058
        %1060 = vmatprep.subr.mxu0 %v1059
        %v1061 = vand.u32 %v277, 4294901760
        %v1062 = vsub.f32 %v277, %v1061
        %1063 = vmatpush1.msra.mxu0 %v1062
        %v1064 = vand.u32 %v276, 4294901760
        %v1065 = vsub.f32 %v276, %v1064
        %1066 = vmatprep.subr.mxu0 %v1065
        %v1067 = vand.u32 %v275, 4294901760
        %v1068 = vsub.f32 %v275, %v1067
        %1069 = vmatpush1.msra.mxu0 %v1068
        %v1070 = vand.u32 %v274, 4294901760
        %v1071 = vsub.f32 %v274, %v1070
        %1072 = vmatprep.subr.mxu0 %v1071
        %v1073 = vand.u32 %v273, 4294901760
        %v1074 = vsub.f32 %v273, %v1073
        %1075 = vmatpush1.msra.mxu0 %v1074
        %v1076 = vand.u32 %v272, 4294901760
        %v1077 = vsub.f32 %v272, %v1076
        %1078 = vmatprep.subr.mxu0 %v1077
        %v1079 = vand.u32 %v271, 4294901760
        %v1080 = vsub.f32 %v271, %v1079
        %1081 = vmatpush1.msra.mxu0 %v1080
        %v1082 = vand.u32 %v270, 4294901760
        %v1083 = vsub.f32 %v270, %v1082
        %1084 = vmatprep.subr.mxu0 %v1083
        %v1085 = vand.u32 %v269, 4294901760
        %v1086 = vsub.f32 %v269, %v1085
        %1087 = vmatpush1.msra.mxu0 %v1086
        %v1088 = vand.u32 %v268, 4294901760
        %v1089 = vsub.f32 %v268, %v1088
        %1090 = vmatprep.subr.mxu0 %v1089
        %v1091 = vand.u32 %v267, 4294901760
        %v1092 = vsub.f32 %v267, %v1091
        %1093 = vmatpush1.msra.mxu0 %v1092
        %v1094 = vand.u32 %v266, 4294901760
        %v1095 = vsub.f32 %v266, %v1094
        %1096 = vmatprep.subr.mxu0 %v1095
        %v1097 = vand.u32 %v265, 4294901760
        %v1098 = vsub.f32 %v265, %v1097
        %1099 = vmatpush1.msra.mxu0 %v1098
        %v1100 = vand.u32 %v264, 4294901760
        %v1101 = vsub.f32 %v264, %v1100
        %1102 = vmatprep.subr.mxu0 %v1101
        %v1103 = vand.u32 %v263, 4294901760
        %v1104 = vsub.f32 %v263, %v1103
        %1105 = vmatpush1.msra.mxu0 %v1104
        %v1106 = vand.u32 %v262, 4294901760
        %v1107 = vsub.f32 %v262, %v1106
        %1108 = vmatprep.subr.mxu0 %v1107
        %v1109 = vand.u32 %v261, 4294901760
        %v1110 = vsub.f32 %v261, %v1109
        %1111 = vmatpush1.msra.mxu0 %v1110
        %v1112 = vand.u32 %v260, 4294901760
        %v1113 = vsub.f32 %v260, %v1112
        %1114 = vmatprep.subr.mxu0 %v1113
        %v1115 = vand.u32 %v259, 4294901760
        %v1116 = vsub.f32 %v259, %v1115
        %1117 = vmatpush1.msra.mxu0 %v1116
        %v1118 = vand.u32 %v322, 4294901760
        %v1119 = vsub.f32 %v322, %v1118
        %1120 = vmatprep.subr.mxu0 %v1119
        %v1121 = vand.u32 %v321, 4294901760
        %v1122 = vsub.f32 %v321, %v1121
        %1123 = vmatpush2.msra.mxu0 %v1122
        %v1124 = vand.u32 %v320, 4294901760
        %v1125 = vsub.f32 %v320, %v1124
        %1126 = vmatprep.subr.mxu0 %v1125
        %v1127 = vand.u32 %v319, 4294901760
        %v1128 = vsub.f32 %v319, %v1127
        %1129 = vmatpush2.msra.mxu0 %v1128
        %v1130 = vand.u32 %v318, 4294901760
        %v1131 = vsub.f32 %v318, %v1130
        %1132 = vmatprep.subr.mxu0 %v1131
        %v1133 = vand.u32 %v317, 4294901760
        %v1134 = vsub.f32 %v317, %v1133
        %1135 = vmatpush2.msra.mxu0 %v1134
        %v1136 = vand.u32 %v316, 4294901760
        %v1137 = vsub.f32 %v316, %v1136
        %1138 = vmatprep.subr.mxu0 %v1137
        %v1139 = vand.u32 %v315, 4294901760
        %v1140 = vsub.f32 %v315, %v1139
        %1141 = vmatpush2.msra.mxu0 %v1140
        %v1142 = vand.u32 %v314, 4294901760
        %v1143 = vsub.f32 %v314, %v1142
        %1144 = vmatprep.subr.mxu0 %v1143
        %v1145 = vand.u32 %v313, 4294901760
        %v1146 = vsub.f32 %v313, %v1145
        %1147 = vmatpush2.msra.mxu0 %v1146
        %v1148 = vand.u32 %v312, 4294901760
        %v1149 = vsub.f32 %v312, %v1148
        %1150 = vmatprep.subr.mxu0 %v1149
        %v1151 = vand.u32 %v311, 4294901760
        %v1152 = vsub.f32 %v311, %v1151
        %1153 = vmatpush2.msra.mxu0 %v1152
        %v1154 = vand.u32 %v310, 4294901760
        %v1155 = vsub.f32 %v310, %v1154
        %1156 = vmatprep.subr.mxu0 %v1155
        %v1157 = vand.u32 %v309, 4294901760
        %v1158 = vsub.f32 %v309, %v1157
        %1159 = vmatpush2.msra.mxu0 %v1158
        %v1160 = vand.u32 %v308, 4294901760
        %v1161 = vsub.f32 %v308, %v1160
        %1162 = vmatprep.subr.mxu0 %v1161
        %v1163 = vand.u32 %v307, 4294901760
        %v1164 = vsub.f32 %v307, %v1163
        %1165 = vmatpush2.msra.mxu0 %v1164
        %v1166 = vand.u32 %v306, 4294901760
        %v1167 = vsub.f32 %v306, %v1166
        %1168 = vmatprep.subr.mxu0 %v1167
        %v1169 = vand.u32 %v305, 4294901760
        %v1170 = vsub.f32 %v305, %v1169
        %1171 = vmatpush2.msra.mxu0 %v1170
        %v1172 = vand.u32 %v304, 4294901760
        %v1173 = vsub.f32 %v304, %v1172
        %1174 = vmatprep.subr.mxu0 %v1173
        %v1175 = vand.u32 %v303, 4294901760
        %v1176 = vsub.f32 %v303, %v1175
        %1177 = vmatpush2.msra.mxu0 %v1176
        %v1178 = vand.u32 %v302, 4294901760
        %v1179 = vsub.f32 %v302, %v1178
        %1180 = vmatprep.subr.mxu0 %v1179
        %v1181 = vand.u32 %v301, 4294901760
        %v1182 = vsub.f32 %v301, %v1181
        %1183 = vmatpush2.msra.mxu0 %v1182
        %v1184 = vand.u32 %v300, 4294901760
        %v1185 = vsub.f32 %v300, %v1184
        %1186 = vmatprep.subr.mxu0 %v1185
        %v1187 = vand.u32 %v299, 4294901760
        %v1188 = vsub.f32 %v299, %v1187
        %1189 = vmatpush2.msra.mxu0 %v1188
        %v1190 = vand.u32 %v298, 4294901760
        %v1191 = vsub.f32 %v298, %v1190
        %1192 = vmatprep.subr.mxu0 %v1191
        %v1193 = vand.u32 %v297, 4294901760
        %v1194 = vsub.f32 %v297, %v1193
        %1195 = vmatpush2.msra.mxu0 %v1194
        %v1196 = vand.u32 %v296, 4294901760
        %v1197 = vsub.f32 %v296, %v1196
        %1198 = vmatprep.subr.mxu0 %v1197
        %v1199 = vand.u32 %v295, 4294901760
        %v1200 = vsub.f32 %v295, %v1199
        %1201 = vmatpush2.msra.mxu0 %v1200
        %v1202 = vand.u32 %v294, 4294901760
        %v1203 = vsub.f32 %v294, %v1202
        %1204 = vmatprep.subr.mxu0 %v1203
        %v1205 = vand.u32 %v293, 4294901760
        %v1206 = vsub.f32 %v293, %v1205
        %1207 = vmatpush2.msra.mxu0 %v1206
        %v1208 = vand.u32 %v292, 4294901760
        %v1209 = vsub.f32 %v292, %v1208
        %1210 = vmatprep.subr.mxu0 %v1209
        %v1211 = vand.u32 %v291, 4294901760
        %v1212 = vsub.f32 %v291, %v1211
        %1213 = vmatpush2.msra.mxu0 %v1212
        %v1214 = vand.u32 %v240, 4294901760
        %v1215 = vsub.f32 %v240, %v1214
        %1216 = vmatprep.mubr.f32.mxu0 %v1215
        %v1217 = vand.u32 %v239, 4294901760
        %v1218 = vsub.f32 %v239, %v1217
        %1219 = vmatmul.mubr.f32.gmra.mxu0 %v1218
        %v1220 = vpop.f32.mrf.mxu0
        %v1221 = vadd.f32 %v994, %v1220
        %v1222 = vpop.f32.mrf.mxu0
        %v1223 = vadd.f32 %v996, %v1222
        %v1224 = vand.u32 %v244, 4294901760
        %v1225 = vsub.f32 %v244, %v1224
        %1226 = vmatprep.mubr.f32.mxu0 %v1225
        %v1227 = vand.u32 %v243, 4294901760
        %v1228 = vsub.f32 %v243, %v1227
        %1229 = vmatmul.mubr.f32.gmra.mxu0 %v1228
        %v1230 = vpop.f32.mrf.mxu0
        %v1231 = vadd.f32 %v1002, %v1230
        %v1232 = vpop.f32.mrf.mxu0
        %v1233 = vadd.f32 %v1004, %v1232
        %v1234 = vand.u32 %v248, 4294901760
        %v1235 = vsub.f32 %v248, %v1234
        %1236 = vmatprep.mubr.f32.mxu0 %v1235
        %v1237 = vand.u32 %v247, 4294901760
        %v1238 = vsub.f32 %v247, %v1237
        %1239 = vmatmul.mubr.f32.gmra.mxu0 %v1238
        %v1240 = vpop.f32.mrf.mxu0
        %v1241 = vadd.f32 %v1010, %v1240
        %v1242 = vpop.f32.mrf.mxu0
        %v1243 = vadd.f32 %v1012, %v1242
        %v1244 = vand.u32 %v252, 4294901760
        %v1245 = vsub.f32 %v252, %v1244
        %1246 = vmatprep.mubr.f32.mxu0 %v1245
        %v1247 = vand.u32 %v251, 4294901760
        %v1248 = vsub.f32 %v251, %v1247
        %1249 = vmatmul.mubr.f32.gmra.mxu0 %v1248
        %v1250 = vpop.f32.mrf.mxu0
        %v1251 = vadd.f32 %v1018, %v1250
        %v1252 = vpop.f32.mrf.mxu0
        %v1253 = vadd.f32 %v1020, %v1252
        %1254 = vdwg.mxu0
        %v1255 = vand.u32 %v290, 4294901760
        %1256 = vmatprep.subr.mxu0 %v1255
        %v1257 = vand.u32 %v289, 4294901760
        %1258 = vmatpush1.msra.mxu0 %v1257
        %v1259 = vand.u32 %v288, 4294901760
        %1260 = vmatprep.subr.mxu0 %v1259
        %v1261 = vand.u32 %v287, 4294901760
        %1262 = vmatpush1.msra.mxu0 %v1261
        %v1263 = vand.u32 %v286, 4294901760
        %1264 = vmatprep.subr.mxu0 %v1263
        %v1265 = vand.u32 %v285, 4294901760
        %1266 = vmatpush1.msra.mxu0 %v1265
        %v1267 = vand.u32 %v284, 4294901760
        %1268 = vmatprep.subr.mxu0 %v1267
        %v1269 = vand.u32 %v283, 4294901760
        %1270 = vmatpush1.msra.mxu0 %v1269
        %v1271 = vand.u32 %v282, 4294901760
        %1272 = vmatprep.subr.mxu0 %v1271
        %v1273 = vand.u32 %v281, 4294901760
        %1274 = vmatpush1.msra.mxu0 %v1273
        %v1275 = vand.u32 %v280, 4294901760
        %1276 = vmatprep.subr.mxu0 %v1275
        %v1277 = vand.u32 %v279, 4294901760
        %1278 = vmatpush1.msra.mxu0 %v1277
        %v1279 = vand.u32 %v278, 4294901760
        %1280 = vmatprep.subr.mxu0 %v1279
        %v1281 = vand.u32 %v277, 4294901760
        %1282 = vmatpush1.msra.mxu0 %v1281
        %v1283 = vand.u32 %v276, 4294901760
        %1284 = vmatprep.subr.mxu0 %v1283
        %v1285 = vand.u32 %v275, 4294901760
        %1286 = vmatpush1.msra.mxu0 %v1285
        %v1287 = vand.u32 %v274, 4294901760
        %1288 = vmatprep.subr.mxu0 %v1287
        %v1289 = vand.u32 %v273, 4294901760
        %1290 = vmatpush1.msra.mxu0 %v1289
        %v1291 = vand.u32 %v272, 4294901760
        %1292 = vmatprep.subr.mxu0 %v1291
        %v1293 = vand.u32 %v271, 4294901760
        %1294 = vmatpush1.msra.mxu0 %v1293
        %v1295 = vand.u32 %v270, 4294901760
        %1296 = vmatprep.subr.mxu0 %v1295
        %v1297 = vand.u32 %v269, 4294901760
        %1298 = vmatpush1.msra.mxu0 %v1297
        %v1299 = vand.u32 %v268, 4294901760
        %1300 = vmatprep.subr.mxu0 %v1299
        %v1301 = vand.u32 %v267, 4294901760
        %1302 = vmatpush1.msra.mxu0 %v1301
        %v1303 = vand.u32 %v266, 4294901760
        %1304 = vmatprep.subr.mxu0 %v1303
        %v1305 = vand.u32 %v265, 4294901760
        %1306 = vmatpush1.msra.mxu0 %v1305
        %v1307 = vand.u32 %v264, 4294901760
        %1308 = vmatprep.subr.mxu0 %v1307
        %v1309 = vand.u32 %v263, 4294901760
        %1310 = vmatpush1.msra.mxu0 %v1309
        %v1311 = vand.u32 %v262, 4294901760
        %1312 = vmatprep.subr.mxu0 %v1311
        %v1313 = vand.u32 %v261, 4294901760
        %1314 = vmatpush1.msra.mxu0 %v1313
        %v1315 = vand.u32 %v260, 4294901760
        %1316 = vmatprep.subr.mxu0 %v1315
        %v1317 = vand.u32 %v259, 4294901760
        %1318 = vmatpush1.msra.mxu0 %v1317
        %v1319 = vand.u32 %v322, 4294901760
        %1320 = vmatprep.subr.mxu0 %v1319
        %v1321 = vand.u32 %v321, 4294901760
        %1322 = vmatpush2.msra.mxu0 %v1321
        %v1323 = vand.u32 %v320, 4294901760
        %1324 = vmatprep.subr.mxu0 %v1323
        %v1325 = vand.u32 %v319, 4294901760
        %1326 = vmatpush2.msra.mxu0 %v1325
        %v1327 = vand.u32 %v318, 4294901760
        %1328 = vmatprep.subr.mxu0 %v1327
        %v1329 = vand.u32 %v317, 4294901760
        %1330 = vmatpush2.msra.mxu0 %v1329
        %v1331 = vand.u32 %v316, 4294901760
        %1332 = vmatprep.subr.mxu0 %v1331
        %v1333 = vand.u32 %v315, 4294901760
        %1334 = vmatpush2.msra.mxu0 %v1333
        %v1335 = vand.u32 %v314, 4294901760
        %1336 = vmatprep.subr.mxu0 %v1335
        %v1337 = vand.u32 %v313, 4294901760
        %1338 = vmatpush2.msra.mxu0 %v1337
        %v1339 = vand.u32 %v312, 4294901760
        %1340 = vmatprep.subr.mxu0 %v1339
        %v1341 = vand.u32 %v311, 4294901760
        %1342 = vmatpush2.msra.mxu0 %v1341
        %v1343 = vand.u32 %v310, 4294901760
        %1344 = vmatprep.subr.mxu0 %v1343
        %v1345 = vand.u32 %v309, 4294901760
        %1346 = vmatpush2.msra.mxu0 %v1345
        %v1347 = vand.u32 %v308, 4294901760
        %1348 = vmatprep.subr.mxu0 %v1347
        %v1349 = vand.u32 %v307, 4294901760
        %1350 = vmatpush2.msra.mxu0 %v1349
        %v1351 = vand.u32 %v306, 4294901760
        %1352 = vmatprep.subr.mxu0 %v1351
        %v1353 = vand.u32 %v305, 4294901760
        %1354 = vmatpush2.msra.mxu0 %v1353
        %v1355 = vand.u32 %v304, 4294901760
        %1356 = vmatprep.subr.mxu0 %v1355
        %v1357 = vand.u32 %v303, 4294901760
        %1358 = vmatpush2.msra.mxu0 %v1357
        %v1359 = vand.u32 %v302, 4294901760
        %1360 = vmatprep.subr.mxu0 %v1359
        %v1361 = vand.u32 %v301, 4294901760
        %1362 = vmatpush2.msra.mxu0 %v1361
        %v1363 = vand.u32 %v300, 4294901760
        %1364 = vmatprep.subr.mxu0 %v1363
        %v1365 = vand.u32 %v299, 4294901760
        %1366 = vmatpush2.msra.mxu0 %v1365
        %v1367 = vand.u32 %v298, 4294901760
        %1368 = vmatprep.subr.mxu0 %v1367
        %v1369 = vand.u32 %v297, 4294901760
        %1370 = vmatpush2.msra.mxu0 %v1369
        %v1371 = vand.u32 %v296, 4294901760
        %1372 = vmatprep.subr.mxu0 %v1371
        %v1373 = vand.u32 %v295, 4294901760
        %1374 = vmatpush2.msra.mxu0 %v1373
        %v1375 = vand.u32 %v294, 4294901760
        %1376 = vmatprep.subr.mxu0 %v1375
        %v1377 = vand.u32 %v293, 4294901760
        %1378 = vmatpush2.msra.mxu0 %v1377
        %v1379 = vand.u32 %v292, 4294901760
        %1380 = vmatprep.subr.mxu0 %v1379
        %v1381 = vand.u32 %v291, 4294901760
        %1382 = vmatpush2.msra.mxu0 %v1381
        %v1383 = vand.u32 %v240, 4294901760
        %v1384 = vsub.f32 %v240, %v1383
        %v1385 = vand.u32 %v1384, 4294901760
        %1386 = vmatprep.mubr.f32.mxu0 %v1385
        %v1387 = vand.u32 %v239, 4294901760
        %v1388 = vsub.f32 %v239, %v1387
        %v1389 = vand.u32 %v1388, 4294901760
        %1390 = vmatmul.mubr.f32.gmra.mxu0 %v1389
        %v1391 = vpop.f32.mrf.mxu0
        %v1392 = vadd.f32 %v1221, %v1391
        %v1393 = vpop.f32.mrf.mxu0
        %v1394 = vadd.f32 %v1223, %v1393
        %v1395 = vand.u32 %v244, 4294901760
        %v1396 = vsub.f32 %v244, %v1395
        %v1397 = vand.u32 %v1396, 4294901760
        %1398 = vmatprep.mubr.f32.mxu0 %v1397
        %v1399 = vand.u32 %v243, 4294901760
        %v1400 = vsub.f32 %v243, %v1399
        %v1401 = vand.u32 %v1400, 4294901760
        %1402 = vmatmul.mubr.f32.gmra.mxu0 %v1401
        %v1403 = vpop.f32.mrf.mxu0
        %v1404 = vadd.f32 %v1231, %v1403
        %v1405 = vpop.f32.mrf.mxu0
        %v1406 = vadd.f32 %v1233, %v1405
        %v1407 = vand.u32 %v248, 4294901760
        %v1408 = vsub.f32 %v248, %v1407
        %v1409 = vand.u32 %v1408, 4294901760
        %1410 = vmatprep.mubr.f32.mxu0 %v1409
        %v1411 = vand.u32 %v247, 4294901760
        %v1412 = vsub.f32 %v247, %v1411
        %v1413 = vand.u32 %v1412, 4294901760
        %1414 = vmatmul.mubr.f32.gmra.mxu0 %v1413
        %v1415 = vpop.f32.mrf.mxu0
        %v1416 = vadd.f32 %v1241, %v1415
        %v1417 = vpop.f32.mrf.mxu0
        %v1418 = vadd.f32 %v1243, %v1417
        %v1419 = vand.u32 %v252, 4294901760
        %v1420 = vsub.f32 %v252, %v1419
        %v1421 = vand.u32 %v1420, 4294901760
        %1422 = vmatprep.mubr.f32.mxu0 %v1421
        %v1423 = vand.u32 %v251, 4294901760
        %v1424 = vsub.f32 %v251, %v1423
        %v1425 = vand.u32 %v1424, 4294901760
        %1426 = vmatmul.mubr.f32.gmra.mxu0 %v1425
        %v1427 = vpop.f32.mrf.mxu0
        %v1428 = vadd.f32 %v1251, %v1427
        %v1429 = vpop.f32.mrf.mxu0
        %v1430 = vadd.f32 %v1253, %v1429
        %1431 = vdwg.mxu0
        %v1432 = vand.u32 %v290, 4294901760
        %v1433 = vsub.f32 %v290, %v1432
        %v1434 = vand.u32 %v1433, 4294901760
        %1435 = vmatprep.subr.mxu0 %v1434
        %v1436 = vand.u32 %v289, 4294901760
        %v1437 = vsub.f32 %v289, %v1436
        %v1438 = vand.u32 %v1437, 4294901760
        %1439 = vmatpush1.msra.mxu0 %v1438
        %v1440 = vand.u32 %v288, 4294901760
        %v1441 = vsub.f32 %v288, %v1440
        %v1442 = vand.u32 %v1441, 4294901760
        %1443 = vmatprep.subr.mxu0 %v1442
        %v1444 = vand.u32 %v287, 4294901760
        %v1445 = vsub.f32 %v287, %v1444
        %v1446 = vand.u32 %v1445, 4294901760
        %1447 = vmatpush1.msra.mxu0 %v1446
        %v1448 = vand.u32 %v286, 4294901760
        %v1449 = vsub.f32 %v286, %v1448
        %v1450 = vand.u32 %v1449, 4294901760
        %1451 = vmatprep.subr.mxu0 %v1450
        %v1452 = vand.u32 %v285, 4294901760
        %v1453 = vsub.f32 %v285, %v1452
        %v1454 = vand.u32 %v1453, 4294901760
        %1455 = vmatpush1.msra.mxu0 %v1454
        %v1456 = vand.u32 %v284, 4294901760
        %v1457 = vsub.f32 %v284, %v1456
        %v1458 = vand.u32 %v1457, 4294901760
        %1459 = vmatprep.subr.mxu0 %v1458
        %v1460 = vand.u32 %v283, 4294901760
        %v1461 = vsub.f32 %v283, %v1460
        %v1462 = vand.u32 %v1461, 4294901760
        %1463 = vmatpush1.msra.mxu0 %v1462
        %v1464 = vand.u32 %v282, 4294901760
        %v1465 = vsub.f32 %v282, %v1464
        %v1466 = vand.u32 %v1465, 4294901760
        %1467 = vmatprep.subr.mxu0 %v1466
        %v1468 = vand.u32 %v281, 4294901760
        %v1469 = vsub.f32 %v281, %v1468
        %v1470 = vand.u32 %v1469, 4294901760
        %1471 = vmatpush1.msra.mxu0 %v1470
        %v1472 = vand.u32 %v280, 4294901760
        %v1473 = vsub.f32 %v280, %v1472
        %v1474 = vand.u32 %v1473, 4294901760
        %1475 = vmatprep.subr.mxu0 %v1474
        %v1476 = vand.u32 %v279, 4294901760
        %v1477 = vsub.f32 %v279, %v1476
        %v1478 = vand.u32 %v1477, 4294901760
        %1479 = vmatpush1.msra.mxu0 %v1478
        %v1480 = vand.u32 %v278, 4294901760
        %v1481 = vsub.f32 %v278, %v1480
        %v1482 = vand.u32 %v1481, 4294901760
        %1483 = vmatprep.subr.mxu0 %v1482
        %v1484 = vand.u32 %v277, 4294901760
        %v1485 = vsub.f32 %v277, %v1484
        %v1486 = vand.u32 %v1485, 4294901760
        %1487 = vmatpush1.msra.mxu0 %v1486
        %v1488 = vand.u32 %v276, 4294901760
        %v1489 = vsub.f32 %v276, %v1488
        %v1490 = vand.u32 %v1489, 4294901760
        %1491 = vmatprep.subr.mxu0 %v1490
        %v1492 = vand.u32 %v275, 4294901760
        %v1493 = vsub.f32 %v275, %v1492
        %v1494 = vand.u32 %v1493, 4294901760
        %1495 = vmatpush1.msra.mxu0 %v1494
        %v1496 = vand.u32 %v274, 4294901760
        %v1497 = vsub.f32 %v274, %v1496
        %v1498 = vand.u32 %v1497, 4294901760
        %1499 = vmatprep.subr.mxu0 %v1498
        %v1500 = vand.u32 %v273, 4294901760
        %v1501 = vsub.f32 %v273, %v1500
        %v1502 = vand.u32 %v1501, 4294901760
        %1503 = vmatpush1.msra.mxu0 %v1502
        %v1504 = vand.u32 %v272, 4294901760
        %v1505 = vsub.f32 %v272, %v1504
        %v1506 = vand.u32 %v1505, 4294901760
        %1507 = vmatprep.subr.mxu0 %v1506
        %v1508 = vand.u32 %v271, 4294901760
        %v1509 = vsub.f32 %v271, %v1508
        %v1510 = vand.u32 %v1509, 4294901760
        %1511 = vmatpush1.msra.mxu0 %v1510
        %v1512 = vand.u32 %v270, 4294901760
        %v1513 = vsub.f32 %v270, %v1512
        %v1514 = vand.u32 %v1513, 4294901760
        %1515 = vmatprep.subr.mxu0 %v1514
        %v1516 = vand.u32 %v269, 4294901760
        %v1517 = vsub.f32 %v269, %v1516
        %v1518 = vand.u32 %v1517, 4294901760
        %1519 = vmatpush1.msra.mxu0 %v1518
        %v1520 = vand.u32 %v268, 4294901760
        %v1521 = vsub.f32 %v268, %v1520
        %v1522 = vand.u32 %v1521, 4294901760
        %1523 = vmatprep.subr.mxu0 %v1522
        %v1524 = vand.u32 %v267, 4294901760
        %v1525 = vsub.f32 %v267, %v1524
        %v1526 = vand.u32 %v1525, 4294901760
        %1527 = vmatpush1.msra.mxu0 %v1526
        %v1528 = vand.u32 %v266, 4294901760
        %v1529 = vsub.f32 %v266, %v1528
        %v1530 = vand.u32 %v1529, 4294901760
        %1531 = vmatprep.subr.mxu0 %v1530
        %v1532 = vand.u32 %v265, 4294901760
        %v1533 = vsub.f32 %v265, %v1532
        %v1534 = vand.u32 %v1533, 4294901760
        %1535 = vmatpush1.msra.mxu0 %v1534
        %v1536 = vand.u32 %v264, 4294901760
        %v1537 = vsub.f32 %v264, %v1536
        %v1538 = vand.u32 %v1537, 4294901760
        %1539 = vmatprep.subr.mxu0 %v1538
        %v1540 = vand.u32 %v263, 4294901760
        %v1541 = vsub.f32 %v263, %v1540
        %v1542 = vand.u32 %v1541, 4294901760
        %1543 = vmatpush1.msra.mxu0 %v1542
        %v1544 = vand.u32 %v262, 4294901760
        %v1545 = vsub.f32 %v262, %v1544
        %v1546 = vand.u32 %v1545, 4294901760
        %1547 = vmatprep.subr.mxu0 %v1546
        %v1548 = vand.u32 %v261, 4294901760
        %v1549 = vsub.f32 %v261, %v1548
        %v1550 = vand.u32 %v1549, 4294901760
        %1551 = vmatpush1.msra.mxu0 %v1550
        %v1552 = vand.u32 %v260, 4294901760
        %v1553 = vsub.f32 %v260, %v1552
        %v1554 = vand.u32 %v1553, 4294901760
        %1555 = vmatprep.subr.mxu0 %v1554
        %v1556 = vand.u32 %v259, 4294901760
        %v1557 = vsub.f32 %v259, %v1556
        %v1558 = vand.u32 %v1557, 4294901760
        %1559 = vmatpush1.msra.mxu0 %v1558
        %v1560 = vand.u32 %v322, 4294901760
        %v1561 = vsub.f32 %v322, %v1560
        %v1562 = vand.u32 %v1561, 4294901760
        %1563 = vmatprep.subr.mxu0 %v1562
        %v1564 = vand.u32 %v321, 4294901760
        %v1565 = vsub.f32 %v321, %v1564
        %v1566 = vand.u32 %v1565, 4294901760
        %1567 = vmatpush2.msra.mxu0 %v1566
        %v1568 = vand.u32 %v320, 4294901760
        %v1569 = vsub.f32 %v320, %v1568
        %v1570 = vand.u32 %v1569, 4294901760
        %1571 = vmatprep.subr.mxu0 %v1570
        %v1572 = vand.u32 %v319, 4294901760
        %v1573 = vsub.f32 %v319, %v1572
        %v1574 = vand.u32 %v1573, 4294901760
        %1575 = vmatpush2.msra.mxu0 %v1574
        %v1576 = vand.u32 %v318, 4294901760
        %v1577 = vsub.f32 %v318, %v1576
        %v1578 = vand.u32 %v1577, 4294901760
        %1579 = vmatprep.subr.mxu0 %v1578
        %v1580 = vand.u32 %v317, 4294901760
        %v1581 = vsub.f32 %v317, %v1580
        %v1582 = vand.u32 %v1581, 4294901760
        %1583 = vmatpush2.msra.mxu0 %v1582
        %v1584 = vand.u32 %v316, 4294901760
        %v1585 = vsub.f32 %v316, %v1584
        %v1586 = vand.u32 %v1585, 4294901760
        %1587 = vmatprep.subr.mxu0 %v1586
        %v1588 = vand.u32 %v315, 4294901760
        %v1589 = vsub.f32 %v315, %v1588
        %v1590 = vand.u32 %v1589, 4294901760
        %1591 = vmatpush2.msra.mxu0 %v1590
        %v1592 = vand.u32 %v314, 4294901760
        %v1593 = vsub.f32 %v314, %v1592
        %v1594 = vand.u32 %v1593, 4294901760
        %1595 = vmatprep.subr.mxu0 %v1594
        %v1596 = vand.u32 %v313, 4294901760
        %v1597 = vsub.f32 %v313, %v1596
        %v1598 = vand.u32 %v1597, 4294901760
        %1599 = vmatpush2.msra.mxu0 %v1598
        %v1600 = vand.u32 %v312, 4294901760
        %v1601 = vsub.f32 %v312, %v1600
        %v1602 = vand.u32 %v1601, 4294901760
        %1603 = vmatprep.subr.mxu0 %v1602
        %v1604 = vand.u32 %v311, 4294901760
        %v1605 = vsub.f32 %v311, %v1604
        %v1606 = vand.u32 %v1605, 4294901760
        %1607 = vmatpush2.msra.mxu0 %v1606
        %v1608 = vand.u32 %v310, 4294901760
        %v1609 = vsub.f32 %v310, %v1608
        %v1610 = vand.u32 %v1609, 4294901760
        %1611 = vmatprep.subr.mxu0 %v1610
        %v1612 = vand.u32 %v309, 4294901760
        %v1613 = vsub.f32 %v309, %v1612
        %v1614 = vand.u32 %v1613, 4294901760
        %1615 = vmatpush2.msra.mxu0 %v1614
        %v1616 = vand.u32 %v308, 4294901760
        %v1617 = vsub.f32 %v308, %v1616
        %v1618 = vand.u32 %v1617, 4294901760
        %1619 = vmatprep.subr.mxu0 %v1618
        %v1620 = vand.u32 %v307, 4294901760
        %v1621 = vsub.f32 %v307, %v1620
        %v1622 = vand.u32 %v1621, 4294901760
        %1623 = vmatpush2.msra.mxu0 %v1622
        %v1624 = vand.u32 %v306, 4294901760
        %v1625 = vsub.f32 %v306, %v1624
        %v1626 = vand.u32 %v1625, 4294901760
        %1627 = vmatprep.subr.mxu0 %v1626
        %v1628 = vand.u32 %v305, 4294901760
        %v1629 = vsub.f32 %v305, %v1628
        %v1630 = vand.u32 %v1629, 4294901760
        %1631 = vmatpush2.msra.mxu0 %v1630
        %v1632 = vand.u32 %v304, 4294901760
        %v1633 = vsub.f32 %v304, %v1632
        %v1634 = vand.u32 %v1633, 4294901760
        %1635 = vmatprep.subr.mxu0 %v1634
        %v1636 = vand.u32 %v303, 4294901760
        %v1637 = vsub.f32 %v303, %v1636
        %v1638 = vand.u32 %v1637, 4294901760
        %1639 = vmatpush2.msra.mxu0 %v1638
        %v1640 = vand.u32 %v302, 4294901760
        %v1641 = vsub.f32 %v302, %v1640
        %v1642 = vand.u32 %v1641, 4294901760
        %1643 = vmatprep.subr.mxu0 %v1642
        %v1644 = vand.u32 %v301, 4294901760
        %v1645 = vsub.f32 %v301, %v1644
        %v1646 = vand.u32 %v1645, 4294901760
        %1647 = vmatpush2.msra.mxu0 %v1646
        %v1648 = vand.u32 %v300, 4294901760
        %v1649 = vsub.f32 %v300, %v1648
        %v1650 = vand.u32 %v1649, 4294901760
        %1651 = vmatprep.subr.mxu0 %v1650
        %v1652 = vand.u32 %v299, 4294901760
        %v1653 = vsub.f32 %v299, %v1652
        %v1654 = vand.u32 %v1653, 4294901760
        %1655 = vmatpush2.msra.mxu0 %v1654
        %v1656 = vand.u32 %v298, 4294901760
        %v1657 = vsub.f32 %v298, %v1656
        %v1658 = vand.u32 %v1657, 4294901760
        %1659 = vmatprep.subr.mxu0 %v1658
        %v1660 = vand.u32 %v297, 4294901760
        %v1661 = vsub.f32 %v297, %v1660
        %v1662 = vand.u32 %v1661, 4294901760
        %1663 = vmatpush2.msra.mxu0 %v1662
        %v1664 = vand.u32 %v296, 4294901760
        %v1665 = vsub.f32 %v296, %v1664
        %v1666 = vand.u32 %v1665, 4294901760
        %1667 = vmatprep.subr.mxu0 %v1666
        %v1668 = vand.u32 %v295, 4294901760
        %v1669 = vsub.f32 %v295, %v1668
        %v1670 = vand.u32 %v1669, 4294901760
        %1671 = vmatpush2.msra.mxu0 %v1670
        %v1672 = vand.u32 %v294, 4294901760
        %v1673 = vsub.f32 %v294, %v1672
        %v1674 = vand.u32 %v1673, 4294901760
        %1675 = vmatprep.subr.mxu0 %v1674
        %v1676 = vand.u32 %v293, 4294901760
        %v1677 = vsub.f32 %v293, %v1676
        %v1678 = vand.u32 %v1677, 4294901760
        %1679 = vmatpush2.msra.mxu0 %v1678
        %v1680 = vand.u32 %v292, 4294901760
        %v1681 = vsub.f32 %v292, %v1680
        %v1682 = vand.u32 %v1681, 4294901760
        %1683 = vmatprep.subr.mxu0 %v1682
        %v1684 = vand.u32 %v291, 4294901760
        %v1685 = vsub.f32 %v291, %v1684
        %v1686 = vand.u32 %v1685, 4294901760
        %1687 = vmatpush2.msra.mxu0 %v1686
        %v1688 = vand.u32 %v240, 4294901760
        %1689 = vmatprep.mubr.f32.mxu0 %v1688
        %v1690 = vand.u32 %v239, 4294901760
        %1691 = vmatmul.mubr.f32.gmra.mxu0 %v1690
        %v1692 = vpop.f32.mrf.mxu0
        %v1693 = vadd.f32 %v1392, %v1692
        %v1694 = vpop.f32.mrf.mxu0
        %v1695 = vadd.f32 %v1394, %v1694
        %v1696 = vand.u32 %v244, 4294901760
        %1697 = vmatprep.mubr.f32.mxu0 %v1696
        %v1698 = vand.u32 %v243, 4294901760
        %1699 = vmatmul.mubr.f32.gmra.mxu0 %v1698
        %v1700 = vpop.f32.mrf.mxu0
        %v1701 = vadd.f32 %v1404, %v1700
        %v1702 = vpop.f32.mrf.mxu0
        %v1703 = vadd.f32 %v1406, %v1702
        %v1704 = vand.u32 %v248, 4294901760
        %1705 = vmatprep.mubr.f32.mxu0 %v1704
        %v1706 = vand.u32 %v247, 4294901760
        %1707 = vmatmul.mubr.f32.gmra.mxu0 %v1706
        %v1708 = vpop.f32.mrf.mxu0
        %v1709 = vadd.f32 %v1416, %v1708
        %v1710 = vpop.f32.mrf.mxu0
        %v1711 = vadd.f32 %v1418, %v1710
        %v1712 = vand.u32 %v252, 4294901760
        %1713 = vmatprep.mubr.f32.mxu0 %v1712
        %v1714 = vand.u32 %v251, 4294901760
        %1715 = vmatmul.mubr.f32.gmra.mxu0 %v1714
        %v1716 = vpop.f32.mrf.mxu0
        %v1717 = vadd.f32 %v1428, %v1716
        %v1718 = vpop.f32.mrf.mxu0
        %v1719 = vadd.f32 %v1430, %v1718
        %1720 = vdwg.mxu0
        %v1721 = vand.u32 %v290, 4294901760
        %1722 = vmatprep.subr.mxu0 %v1721
        %v1723 = vand.u32 %v289, 4294901760
        %1724 = vmatpush1.msra.mxu0 %v1723
        %v1725 = vand.u32 %v288, 4294901760
        %1726 = vmatprep.subr.mxu0 %v1725
        %v1727 = vand.u32 %v287, 4294901760
        %1728 = vmatpush1.msra.mxu0 %v1727
        %v1729 = vand.u32 %v286, 4294901760
        %1730 = vmatprep.subr.mxu0 %v1729
        %v1731 = vand.u32 %v285, 4294901760
        %1732 = vmatpush1.msra.mxu0 %v1731
        %v1733 = vand.u32 %v284, 4294901760
        %1734 = vmatprep.subr.mxu0 %v1733
        %v1735 = vand.u32 %v283, 4294901760
        %1736 = vmatpush1.msra.mxu0 %v1735
        %v1737 = vand.u32 %v282, 4294901760
        %1738 = vmatprep.subr.mxu0 %v1737
        %v1739 = vand.u32 %v281, 4294901760
        %1740 = vmatpush1.msra.mxu0 %v1739
        %v1741 = vand.u32 %v280, 4294901760
        %1742 = vmatprep.subr.mxu0 %v1741
        %v1743 = vand.u32 %v279, 4294901760
        %1744 = vmatpush1.msra.mxu0 %v1743
        %v1745 = vand.u32 %v278, 4294901760
        %1746 = vmatprep.subr.mxu0 %v1745
        %v1747 = vand.u32 %v277, 4294901760
        %1748 = vmatpush1.msra.mxu0 %v1747
        %v1749 = vand.u32 %v276, 4294901760
        %1750 = vmatprep.subr.mxu0 %v1749
        %v1751 = vand.u32 %v275, 4294901760
        %1752 = vmatpush1.msra.mxu0 %v1751
        %v1753 = vand.u32 %v274, 4294901760
        %1754 = vmatprep.subr.mxu0 %v1753
        %v1755 = vand.u32 %v273, 4294901760
        %1756 = vmatpush1.msra.mxu0 %v1755
        %v1757 = vand.u32 %v272, 4294901760
        %1758 = vmatprep.subr.mxu0 %v1757
        %v1759 = vand.u32 %v271, 4294901760
        %1760 = vmatpush1.msra.mxu0 %v1759
        %v1761 = vand.u32 %v270, 4294901760
        %1762 = vmatprep.subr.mxu0 %v1761
        %v1763 = vand.u32 %v269, 4294901760
        %1764 = vmatpush1.msra.mxu0 %v1763
        %v1765 = vand.u32 %v268, 4294901760
        %1766 = vmatprep.subr.mxu0 %v1765
        %v1767 = vand.u32 %v267, 4294901760
        %1768 = vmatpush1.msra.mxu0 %v1767
        %v1769 = vand.u32 %v266, 4294901760
        %1770 = vmatprep.subr.mxu0 %v1769
        %v1771 = vand.u32 %v265, 4294901760
        %1772 = vmatpush1.msra.mxu0 %v1771
        %v1773 = vand.u32 %v264, 4294901760
        %1774 = vmatprep.subr.mxu0 %v1773
        %v1775 = vand.u32 %v263, 4294901760
        %1776 = vmatpush1.msra.mxu0 %v1775
        %v1777 = vand.u32 %v262, 4294901760
        %1778 = vmatprep.subr.mxu0 %v1777
        %v1779 = vand.u32 %v261, 4294901760
        %1780 = vmatpush1.msra.mxu0 %v1779
        %v1781 = vand.u32 %v260, 4294901760
        %1782 = vmatprep.subr.mxu0 %v1781
        %v1783 = vand.u32 %v259, 4294901760
        %1784 = vmatpush1.msra.mxu0 %v1783
        %v1785 = vand.u32 %v322, 4294901760
        %1786 = vmatprep.subr.mxu0 %v1785
        %v1787 = vand.u32 %v321, 4294901760
        %1788 = vmatpush2.msra.mxu0 %v1787
        %v1789 = vand.u32 %v320, 4294901760
        %1790 = vmatprep.subr.mxu0 %v1789
        %v1791 = vand.u32 %v319, 4294901760
        %1792 = vmatpush2.msra.mxu0 %v1791
        %v1793 = vand.u32 %v318, 4294901760
        %1794 = vmatprep.subr.mxu0 %v1793
        %v1795 = vand.u32 %v317, 4294901760
        %1796 = vmatpush2.msra.mxu0 %v1795
        %v1797 = vand.u32 %v316, 4294901760
        %1798 = vmatprep.subr.mxu0 %v1797
        %v1799 = vand.u32 %v315, 4294901760
        %1800 = vmatpush2.msra.mxu0 %v1799
        %v1801 = vand.u32 %v314, 4294901760
        %1802 = vmatprep.subr.mxu0 %v1801
        %v1803 = vand.u32 %v313, 4294901760
        %1804 = vmatpush2.msra.mxu0 %v1803
        %v1805 = vand.u32 %v312, 4294901760
        %1806 = vmatprep.subr.mxu0 %v1805
        %v1807 = vand.u32 %v311, 4294901760
        %1808 = vmatpush2.msra.mxu0 %v1807
        %v1809 = vand.u32 %v310, 4294901760
        %1810 = vmatprep.subr.mxu0 %v1809
        %v1811 = vand.u32 %v309, 4294901760
        %1812 = vmatpush2.msra.mxu0 %v1811
        %v1813 = vand.u32 %v308, 4294901760
        %1814 = vmatprep.subr.mxu0 %v1813
        %v1815 = vand.u32 %v307, 4294901760
        %1816 = vmatpush2.msra.mxu0 %v1815
        %v1817 = vand.u32 %v306, 4294901760
        %1818 = vmatprep.subr.mxu0 %v1817
        %v1819 = vand.u32 %v305, 4294901760
        %1820 = vmatpush2.msra.mxu0 %v1819
        %v1821 = vand.u32 %v304, 4294901760
        %1822 = vmatprep.subr.mxu0 %v1821
        %v1823 = vand.u32 %v303, 4294901760
        %1824 = vmatpush2.msra.mxu0 %v1823
        %v1825 = vand.u32 %v302, 4294901760
        %1826 = vmatprep.subr.mxu0 %v1825
        %v1827 = vand.u32 %v301, 4294901760
        %1828 = vmatpush2.msra.mxu0 %v1827
        %v1829 = vand.u32 %v300, 4294901760
        %1830 = vmatprep.subr.mxu0 %v1829
        %v1831 = vand.u32 %v299, 4294901760
        %1832 = vmatpush2.msra.mxu0 %v1831
        %v1833 = vand.u32 %v298, 4294901760
        %1834 = vmatprep.subr.mxu0 %v1833
        %v1835 = vand.u32 %v297, 4294901760
        %1836 = vmatpush2.msra.mxu0 %v1835
        %v1837 = vand.u32 %v296, 4294901760
        %1838 = vmatprep.subr.mxu0 %v1837
        %v1839 = vand.u32 %v295, 4294901760
        %1840 = vmatpush2.msra.mxu0 %v1839
        %v1841 = vand.u32 %v294, 4294901760
        %1842 = vmatprep.subr.mxu0 %v1841
        %v1843 = vand.u32 %v293, 4294901760
        %1844 = vmatpush2.msra.mxu0 %v1843
        %v1845 = vand.u32 %v292, 4294901760
        %1846 = vmatprep.subr.mxu0 %v1845
        %v1847 = vand.u32 %v291, 4294901760
        %1848 = vmatpush2.msra.mxu0 %v1847
        %v1849 = vand.u32 %v240, 4294901760
        %1850 = vmatprep.mubr.f32.mxu0 %v1849
        %v1851 = vand.u32 %v239, 4294901760
        %1852 = vmatmul.mubr.f32.gmra.mxu0 %v1851
        %v1853 = vpop.f32.mrf.mxu0
        %v1854 = vadd.f32 %v1693, %v1853
        %v1855 = vpop.f32.mrf.mxu0
        %v1856 = vadd.f32 %v1695, %v1855
        %v1857 = vand.u32 %v244, 4294901760
        %1858 = vmatprep.mubr.f32.mxu0 %v1857
        %v1859 = vand.u32 %v243, 4294901760
        %1860 = vmatmul.mubr.f32.gmra.mxu0 %v1859
        %v1861 = vpop.f32.mrf.mxu0
        %v1862 = vadd.f32 %v1701, %v1861
        %v1863 = vpop.f32.mrf.mxu0
        %v1864 = vadd.f32 %v1703, %v1863
        %v1865 = vand.u32 %v248, 4294901760
        %1866 = vmatprep.mubr.f32.mxu0 %v1865
        %v1867 = vand.u32 %v247, 4294901760
        %1868 = vmatmul.mubr.f32.gmra.mxu0 %v1867
        %v1869 = vpop.f32.mrf.mxu0
        %v1870 = vadd.f32 %v1709, %v1869
        %v1871 = vpop.f32.mrf.mxu0
        %v1872 = vadd.f32 %v1711, %v1871
        %v1873 = vand.u32 %v252, 4294901760
        %1874 = vmatprep.mubr.f32.mxu0 %v1873
        %v1875 = vand.u32 %v251, 4294901760
        %1876 = vmatmul.mubr.f32.gmra.mxu0 %v1875
        %v1877 = vpop.f32.mrf.mxu0
        %v1878 = vadd.f32 %v1717, %v1877
        %v1879 = vpop.f32.mrf.mxu0
        %v1880 = vadd.f32 %v1719, %v1879
        %1881 = vdwg.mxu0
        %v1882 = vand.u32 %v354, 4294901760
        %1883 = vmatprep.subr.mxu0 %v1882
        %v1884 = vand.u32 %v353, 4294901760
        %1885 = vmatpush1.msra.mxu0 %v1884
        %v1886 = vand.u32 %v352, 4294901760
        %1887 = vmatprep.subr.mxu0 %v1886
        %v1888 = vand.u32 %v351, 4294901760
        %1889 = vmatpush1.msra.mxu0 %v1888
        %v1890 = vand.u32 %v350, 4294901760
        %1891 = vmatprep.subr.mxu0 %v1890
        %v1892 = vand.u32 %v349, 4294901760
        %1893 = vmatpush1.msra.mxu0 %v1892
        %v1894 = vand.u32 %v348, 4294901760
        %1895 = vmatprep.subr.mxu0 %v1894
        %v1896 = vand.u32 %v347, 4294901760
        %1897 = vmatpush1.msra.mxu0 %v1896
        %v1898 = vand.u32 %v346, 4294901760
        %1899 = vmatprep.subr.mxu0 %v1898
        %v1900 = vand.u32 %v345, 4294901760
        %1901 = vmatpush1.msra.mxu0 %v1900
        %v1902 = vand.u32 %v344, 4294901760
        %1903 = vmatprep.subr.mxu0 %v1902
        %v1904 = vand.u32 %v343, 4294901760
        %1905 = vmatpush1.msra.mxu0 %v1904
        %v1906 = vand.u32 %v342, 4294901760
        %1907 = vmatprep.subr.mxu0 %v1906
        %v1908 = vand.u32 %v341, 4294901760
        %1909 = vmatpush1.msra.mxu0 %v1908
        %v1910 = vand.u32 %v340, 4294901760
        %1911 = vmatprep.subr.mxu0 %v1910
        %v1912 = vand.u32 %v339, 4294901760
        %1913 = vmatpush1.msra.mxu0 %v1912
        %v1914 = vand.u32 %v338, 4294901760
        %1915 = vmatprep.subr.mxu0 %v1914
        %v1916 = vand.u32 %v337, 4294901760
        %1917 = vmatpush1.msra.mxu0 %v1916
        %v1918 = vand.u32 %v336, 4294901760
        %1919 = vmatprep.subr.mxu0 %v1918
        %v1920 = vand.u32 %v335, 4294901760
        %1921 = vmatpush1.msra.mxu0 %v1920
        %v1922 = vand.u32 %v334, 4294901760
        %1923 = vmatprep.subr.mxu0 %v1922
        %v1924 = vand.u32 %v333, 4294901760
        %1925 = vmatpush1.msra.mxu0 %v1924
        %v1926 = vand.u32 %v332, 4294901760
        %1927 = vmatprep.subr.mxu0 %v1926
        %v1928 = vand.u32 %v331, 4294901760
        %1929 = vmatpush1.msra.mxu0 %v1928
        %v1930 = vand.u32 %v330, 4294901760
        %1931 = vmatprep.subr.mxu0 %v1930
        %v1932 = vand.u32 %v329, 4294901760
        %1933 = vmatpush1.msra.mxu0 %v1932
        %v1934 = vand.u32 %v328, 4294901760
        %1935 = vmatprep.subr.mxu0 %v1934
        %v1936 = vand.u32 %v327, 4294901760
        %1937 = vmatpush1.msra.mxu0 %v1936
        %v1938 = vand.u32 %v326, 4294901760
        %1939 = vmatprep.subr.mxu0 %v1938
        %v1940 = vand.u32 %v325, 4294901760
        %1941 = vmatpush1.msra.mxu0 %v1940
        %v1942 = vand.u32 %v324, 4294901760
        %1943 = vmatprep.subr.mxu0 %v1942
        %v1944 = vand.u32 %v323, 4294901760
        %1945 = vmatpush1.msra.mxu0 %v1944
        %1946 = vmatprep.subr.mxu0 0.0
        %1947 = vmatpush2.msra.mxu0 0.0
        %1948 = vmatprep.subr.mxu0 0.0
        %1949 = vmatpush2.msra.mxu0 0.0
        %1950 = vmatprep.subr.mxu0 0.0
        %1951 = vmatpush2.msra.mxu0 0.0
        %1952 = vmatprep.subr.mxu0 0.0
        %1953 = vmatpush2.msra.mxu0 0.0
        %v1954 = vand.u32 %v378, 4294901760
        %1955 = vmatprep.subr.mxu0 %v1954
        %v1956 = vand.u32 %v377, 4294901760
        %1957 = vmatpush2.msra.mxu0 %v1956
        %v1958 = vand.u32 %v376, 4294901760
        %1959 = vmatprep.subr.mxu0 %v1958
        %v1960 = vand.u32 %v375, 4294901760
        %1961 = vmatpush2.msra.mxu0 %v1960
        %v1962 = vand.u32 %v374, 4294901760
        %1963 = vmatprep.subr.mxu0 %v1962
        %v1964 = vand.u32 %v373, 4294901760
        %1965 = vmatpush2.msra.mxu0 %v1964
        %v1966 = vand.u32 %v372, 4294901760
        %1967 = vmatprep.subr.mxu0 %v1966
        %v1968 = vand.u32 %v371, 4294901760
        %1969 = vmatpush2.msra.mxu0 %v1968
        %v1970 = vand.u32 %v370, 4294901760
        %1971 = vmatprep.subr.mxu0 %v1970
        %v1972 = vand.u32 %v369, 4294901760
        %1973 = vmatpush2.msra.mxu0 %v1972
        %v1974 = vand.u32 %v368, 4294901760
        %1975 = vmatprep.subr.mxu0 %v1974
        %v1976 = vand.u32 %v367, 4294901760
        %1977 = vmatpush2.msra.mxu0 %v1976
        %v1978 = vand.u32 %v366, 4294901760
        %1979 = vmatprep.subr.mxu0 %v1978
        %v1980 = vand.u32 %v365, 4294901760
        %1981 = vmatpush2.msra.mxu0 %v1980
        %v1982 = vand.u32 %v364, 4294901760
        %1983 = vmatprep.subr.mxu0 %v1982
        %v1984 = vand.u32 %v363, 4294901760
        %1985 = vmatpush2.msra.mxu0 %v1984
        %v1986 = vand.u32 %v362, 4294901760
        %1987 = vmatprep.subr.mxu0 %v1986
        %v1988 = vand.u32 %v361, 4294901760
        %1989 = vmatpush2.msra.mxu0 %v1988
        %v1990 = vand.u32 %v360, 4294901760
        %1991 = vmatprep.subr.mxu0 %v1990
        %v1992 = vand.u32 %v359, 4294901760
        %1993 = vmatpush2.msra.mxu0 %v1992
        %v1994 = vand.u32 %v358, 4294901760
        %1995 = vmatprep.subr.mxu0 %v1994
        %v1996 = vand.u32 %v357, 4294901760
        %1997 = vmatpush2.msra.mxu0 %v1996
        %v1998 = vand.u32 %v356, 4294901760
        %1999 = vmatprep.subr.mxu0 %v1998
        %v2000 = vand.u32 %v355, 4294901760
        %2001 = vmatpush2.msra.mxu0 %v2000
        %v2002 = vand.u32 %v401, 4294901760
        %v2003 = vsub.f32 %v401, %v2002
        %v2004 = vand.u32 %v2003, 4294901760
        %v2005 = vsub.f32 %v2003, %v2004
        %v2006 = vand.u32 %v2005, 4294901760
        %2007 = vmatprep.mubr.f32.mxu0 %v2006
        %v2008 = vand.u32 %v241, 4294901760
        %v2009 = vsub.f32 %v241, %v2008
        %v2010 = vand.u32 %v2009, 4294901760
        %v2011 = vsub.f32 %v2009, %v2010
        %v2012 = vand.u32 %v2011, 4294901760
        %2013 = vmatmul.mubr.f32.gmra.mxu0 %v2012
        %v2014 = vpop.f32.mrf.mxu0
        %v2015 = vadd.f32 %v1854, %v2014
        %v2016 = vpop.f32.mrf.mxu0
        %v2017 = vadd.f32 %v1856, %v2016
        %v2018 = vand.u32 %v404, 4294901760
        %v2019 = vsub.f32 %v404, %v2018
        %v2020 = vand.u32 %v2019, 4294901760
        %v2021 = vsub.f32 %v2019, %v2020
        %v2022 = vand.u32 %v2021, 4294901760
        %2023 = vmatprep.mubr.f32.mxu0 %v2022
        %v2024 = vand.u32 %v245, 4294901760
        %v2025 = vsub.f32 %v245, %v2024
        %v2026 = vand.u32 %v2025, 4294901760
        %v2027 = vsub.f32 %v2025, %v2026
        %v2028 = vand.u32 %v2027, 4294901760
        %2029 = vmatmul.mubr.f32.gmra.mxu0 %v2028
        %v2030 = vpop.f32.mrf.mxu0
        %v2031 = vadd.f32 %v1862, %v2030
        %v2032 = vpop.f32.mrf.mxu0
        %v2033 = vadd.f32 %v1864, %v2032
        %v2034 = vand.u32 %v407, 4294901760
        %v2035 = vsub.f32 %v407, %v2034
        %v2036 = vand.u32 %v2035, 4294901760
        %v2037 = vsub.f32 %v2035, %v2036
        %v2038 = vand.u32 %v2037, 4294901760
        %2039 = vmatprep.mubr.f32.mxu0 %v2038
        %v2040 = vand.u32 %v249, 4294901760
        %v2041 = vsub.f32 %v249, %v2040
        %v2042 = vand.u32 %v2041, 4294901760
        %v2043 = vsub.f32 %v2041, %v2042
        %v2044 = vand.u32 %v2043, 4294901760
        %2045 = vmatmul.mubr.f32.gmra.mxu0 %v2044
        %v2046 = vpop.f32.mrf.mxu0
        %v2047 = vadd.f32 %v1870, %v2046
        %v2048 = vpop.f32.mrf.mxu0
        %v2049 = vadd.f32 %v1872, %v2048
        %v2050 = vand.u32 %v410, 4294901760
        %v2051 = vsub.f32 %v410, %v2050
        %v2052 = vand.u32 %v2051, 4294901760
        %v2053 = vsub.f32 %v2051, %v2052
        %v2054 = vand.u32 %v2053, 4294901760
        %2055 = vmatprep.mubr.f32.mxu0 %v2054
        %v2056 = vand.u32 %v253, 4294901760
        %v2057 = vsub.f32 %v253, %v2056
        %v2058 = vand.u32 %v2057, 4294901760
        %v2059 = vsub.f32 %v2057, %v2058
        %v2060 = vand.u32 %v2059, 4294901760
        %2061 = vmatmul.mubr.f32.gmra.mxu0 %v2060
        %v2062 = vpop.f32.mrf.mxu0
        %v2063 = vadd.f32 %v1878, %v2062
        %v2064 = vpop.f32.mrf.mxu0
        %v2065 = vadd.f32 %v1880, %v2064
        %2066 = vdwg.mxu0
        %v2067 = vand.u32 %v354, 4294901760
        %v2068 = vsub.f32 %v354, %v2067
        %v2069 = vand.u32 %v2068, 4294901760
        %v2070 = vsub.f32 %v2068, %v2069
        %v2071 = vand.u32 %v2070, 4294901760
        %2072 = vmatprep.subr.mxu0 %v2071
        %v2073 = vand.u32 %v353, 4294901760
        %v2074 = vsub.f32 %v353, %v2073
        %v2075 = vand.u32 %v2074, 4294901760
        %v2076 = vsub.f32 %v2074, %v2075
        %v2077 = vand.u32 %v2076, 4294901760
        %2078 = vmatpush1.msra.mxu0 %v2077
        %v2079 = vand.u32 %v352, 4294901760
        %v2080 = vsub.f32 %v352, %v2079
        %v2081 = vand.u32 %v2080, 4294901760
        %v2082 = vsub.f32 %v2080, %v2081
        %v2083 = vand.u32 %v2082, 4294901760
        %2084 = vmatprep.subr.mxu0 %v2083
        %v2085 = vand.u32 %v351, 4294901760
        %v2086 = vsub.f32 %v351, %v2085
        %v2087 = vand.u32 %v2086, 4294901760
        %v2088 = vsub.f32 %v2086, %v2087
        %v2089 = vand.u32 %v2088, 4294901760
        %2090 = vmatpush1.msra.mxu0 %v2089
        %v2091 = vand.u32 %v350, 4294901760
        %v2092 = vsub.f32 %v350, %v2091
        %v2093 = vand.u32 %v2092, 4294901760
        %v2094 = vsub.f32 %v2092, %v2093
        %v2095 = vand.u32 %v2094, 4294901760
        %2096 = vmatprep.subr.mxu0 %v2095
        %v2097 = vand.u32 %v349, 4294901760
        %v2098 = vsub.f32 %v349, %v2097
        %v2099 = vand.u32 %v2098, 4294901760
        %v2100 = vsub.f32 %v2098, %v2099
        %v2101 = vand.u32 %v2100, 4294901760
        %2102 = vmatpush1.msra.mxu0 %v2101
        %v2103 = vand.u32 %v348, 4294901760
        %v2104 = vsub.f32 %v348, %v2103
        %v2105 = vand.u32 %v2104, 4294901760
        %v2106 = vsub.f32 %v2104, %v2105
        %v2107 = vand.u32 %v2106, 4294901760
        %2108 = vmatprep.subr.mxu0 %v2107
        %v2109 = vand.u32 %v347, 4294901760
        %v2110 = vsub.f32 %v347, %v2109
        %v2111 = vand.u32 %v2110, 4294901760
        %v2112 = vsub.f32 %v2110, %v2111
        %v2113 = vand.u32 %v2112, 4294901760
        %2114 = vmatpush1.msra.mxu0 %v2113
        %v2115 = vand.u32 %v346, 4294901760
        %v2116 = vsub.f32 %v346, %v2115
        %v2117 = vand.u32 %v2116, 4294901760
        %v2118 = vsub.f32 %v2116, %v2117
        %v2119 = vand.u32 %v2118, 4294901760
        %2120 = vmatprep.subr.mxu0 %v2119
        %v2121 = vand.u32 %v345, 4294901760
        %v2122 = vsub.f32 %v345, %v2121
        %v2123 = vand.u32 %v2122, 4294901760
        %v2124 = vsub.f32 %v2122, %v2123
        %v2125 = vand.u32 %v2124, 4294901760
        %2126 = vmatpush1.msra.mxu0 %v2125
        %v2127 = vand.u32 %v344, 4294901760
        %v2128 = vsub.f32 %v344, %v2127
        %v2129 = vand.u32 %v2128, 4294901760
        %v2130 = vsub.f32 %v2128, %v2129
        %v2131 = vand.u32 %v2130, 4294901760
        %2132 = vmatprep.subr.mxu0 %v2131
        %v2133 = vand.u32 %v343, 4294901760
        %v2134 = vsub.f32 %v343, %v2133
        %v2135 = vand.u32 %v2134, 4294901760
        %v2136 = vsub.f32 %v2134, %v2135
        %v2137 = vand.u32 %v2136, 4294901760
        %2138 = vmatpush1.msra.mxu0 %v2137
        %v2139 = vand.u32 %v342, 4294901760
        %v2140 = vsub.f32 %v342, %v2139
        %v2141 = vand.u32 %v2140, 4294901760
        %v2142 = vsub.f32 %v2140, %v2141
        %v2143 = vand.u32 %v2142, 4294901760
        %2144 = vmatprep.subr.mxu0 %v2143
        %v2145 = vand.u32 %v341, 4294901760
        %v2146 = vsub.f32 %v341, %v2145
        %v2147 = vand.u32 %v2146, 4294901760
        %v2148 = vsub.f32 %v2146, %v2147
        %v2149 = vand.u32 %v2148, 4294901760
        %2150 = vmatpush1.msra.mxu0 %v2149
        %v2151 = vand.u32 %v340, 4294901760
        %v2152 = vsub.f32 %v340, %v2151
        %v2153 = vand.u32 %v2152, 4294901760
        %v2154 = vsub.f32 %v2152, %v2153
        %v2155 = vand.u32 %v2154, 4294901760
        %2156 = vmatprep.subr.mxu0 %v2155
        %v2157 = vand.u32 %v339, 4294901760
        %v2158 = vsub.f32 %v339, %v2157
        %v2159 = vand.u32 %v2158, 4294901760
        %v2160 = vsub.f32 %v2158, %v2159
        %v2161 = vand.u32 %v2160, 4294901760
        %2162 = vmatpush1.msra.mxu0 %v2161
        %v2163 = vand.u32 %v338, 4294901760
        %v2164 = vsub.f32 %v338, %v2163
        %v2165 = vand.u32 %v2164, 4294901760
        %v2166 = vsub.f32 %v2164, %v2165
        %v2167 = vand.u32 %v2166, 4294901760
        %2168 = vmatprep.subr.mxu0 %v2167
        %v2169 = vand.u32 %v337, 4294901760
        %v2170 = vsub.f32 %v337, %v2169
        %v2171 = vand.u32 %v2170, 4294901760
        %v2172 = vsub.f32 %v2170, %v2171
        %v2173 = vand.u32 %v2172, 4294901760
        %2174 = vmatpush1.msra.mxu0 %v2173
        %v2175 = vand.u32 %v336, 4294901760
        %v2176 = vsub.f32 %v336, %v2175
        %v2177 = vand.u32 %v2176, 4294901760
        %v2178 = vsub.f32 %v2176, %v2177
        %v2179 = vand.u32 %v2178, 4294901760
        %2180 = vmatprep.subr.mxu0 %v2179
        %v2181 = vand.u32 %v335, 4294901760
        %v2182 = vsub.f32 %v335, %v2181
        %v2183 = vand.u32 %v2182, 4294901760
        %v2184 = vsub.f32 %v2182, %v2183
        %v2185 = vand.u32 %v2184, 4294901760
        %2186 = vmatpush1.msra.mxu0 %v2185
        %v2187 = vand.u32 %v334, 4294901760
        %v2188 = vsub.f32 %v334, %v2187
        %v2189 = vand.u32 %v2188, 4294901760
        %v2190 = vsub.f32 %v2188, %v2189
        %v2191 = vand.u32 %v2190, 4294901760
        %2192 = vmatprep.subr.mxu0 %v2191
        %v2193 = vand.u32 %v333, 4294901760
        %v2194 = vsub.f32 %v333, %v2193
        %v2195 = vand.u32 %v2194, 4294901760
        %v2196 = vsub.f32 %v2194, %v2195
        %v2197 = vand.u32 %v2196, 4294901760
        %2198 = vmatpush1.msra.mxu0 %v2197
        %v2199 = vand.u32 %v332, 4294901760
        %v2200 = vsub.f32 %v332, %v2199
        %v2201 = vand.u32 %v2200, 4294901760
        %v2202 = vsub.f32 %v2200, %v2201
        %v2203 = vand.u32 %v2202, 4294901760
        %2204 = vmatprep.subr.mxu0 %v2203
        %v2205 = vand.u32 %v331, 4294901760
        %v2206 = vsub.f32 %v331, %v2205
        %v2207 = vand.u32 %v2206, 4294901760
        %v2208 = vsub.f32 %v2206, %v2207
        %v2209 = vand.u32 %v2208, 4294901760
        %2210 = vmatpush1.msra.mxu0 %v2209
        %v2211 = vand.u32 %v330, 4294901760
        %v2212 = vsub.f32 %v330, %v2211
        %v2213 = vand.u32 %v2212, 4294901760
        %v2214 = vsub.f32 %v2212, %v2213
        %v2215 = vand.u32 %v2214, 4294901760
        %2216 = vmatprep.subr.mxu0 %v2215
        %v2217 = vand.u32 %v329, 4294901760
        %v2218 = vsub.f32 %v329, %v2217
        %v2219 = vand.u32 %v2218, 4294901760
        %v2220 = vsub.f32 %v2218, %v2219
        %v2221 = vand.u32 %v2220, 4294901760
        %2222 = vmatpush1.msra.mxu0 %v2221
        %v2223 = vand.u32 %v328, 4294901760
        %v2224 = vsub.f32 %v328, %v2223
        %v2225 = vand.u32 %v2224, 4294901760
        %v2226 = vsub.f32 %v2224, %v2225
        %v2227 = vand.u32 %v2226, 4294901760
        %2228 = vmatprep.subr.mxu0 %v2227
        %v2229 = vand.u32 %v327, 4294901760
        %v2230 = vsub.f32 %v327, %v2229
        %v2231 = vand.u32 %v2230, 4294901760
        %v2232 = vsub.f32 %v2230, %v2231
        %v2233 = vand.u32 %v2232, 4294901760
        %2234 = vmatpush1.msra.mxu0 %v2233
        %v2235 = vand.u32 %v326, 4294901760
        %v2236 = vsub.f32 %v326, %v2235
        %v2237 = vand.u32 %v2236, 4294901760
        %v2238 = vsub.f32 %v2236, %v2237
        %v2239 = vand.u32 %v2238, 4294901760
        %2240 = vmatprep.subr.mxu0 %v2239
        %v2241 = vand.u32 %v325, 4294901760
        %v2242 = vsub.f32 %v325, %v2241
        %v2243 = vand.u32 %v2242, 4294901760
        %v2244 = vsub.f32 %v2242, %v2243
        %v2245 = vand.u32 %v2244, 4294901760
        %2246 = vmatpush1.msra.mxu0 %v2245
        %v2247 = vand.u32 %v324, 4294901760
        %v2248 = vsub.f32 %v324, %v2247
        %v2249 = vand.u32 %v2248, 4294901760
        %v2250 = vsub.f32 %v2248, %v2249
        %v2251 = vand.u32 %v2250, 4294901760
        %2252 = vmatprep.subr.mxu0 %v2251
        %v2253 = vand.u32 %v323, 4294901760
        %v2254 = vsub.f32 %v323, %v2253
        %v2255 = vand.u32 %v2254, 4294901760
        %v2256 = vsub.f32 %v2254, %v2255
        %v2257 = vand.u32 %v2256, 4294901760
        %2258 = vmatpush1.msra.mxu0 %v2257
        %2259 = vmatprep.subr.mxu0 0.0
        %2260 = vmatpush2.msra.mxu0 0.0
        %2261 = vmatprep.subr.mxu0 0.0
        %2262 = vmatpush2.msra.mxu0 0.0
        %2263 = vmatprep.subr.mxu0 0.0
        %2264 = vmatpush2.msra.mxu0 0.0
        %2265 = vmatprep.subr.mxu0 0.0
        %2266 = vmatpush2.msra.mxu0 0.0
        %v2267 = vand.u32 %v378, 4294901760
        %v2268 = vsub.f32 %v378, %v2267
        %v2269 = vand.u32 %v2268, 4294901760
        %v2270 = vsub.f32 %v2268, %v2269
        %v2271 = vand.u32 %v2270, 4294901760
        %2272 = vmatprep.subr.mxu0 %v2271
        %v2273 = vand.u32 %v377, 4294901760
        %v2274 = vsub.f32 %v377, %v2273
        %v2275 = vand.u32 %v2274, 4294901760
        %v2276 = vsub.f32 %v2274, %v2275
        %v2277 = vand.u32 %v2276, 4294901760
        %2278 = vmatpush2.msra.mxu0 %v2277
        %v2279 = vand.u32 %v376, 4294901760
        %v2280 = vsub.f32 %v376, %v2279
        %v2281 = vand.u32 %v2280, 4294901760
        %v2282 = vsub.f32 %v2280, %v2281
        %v2283 = vand.u32 %v2282, 4294901760
        %2284 = vmatprep.subr.mxu0 %v2283
        %v2285 = vand.u32 %v375, 4294901760
        %v2286 = vsub.f32 %v375, %v2285
        %v2287 = vand.u32 %v2286, 4294901760
        %v2288 = vsub.f32 %v2286, %v2287
        %v2289 = vand.u32 %v2288, 4294901760
        %2290 = vmatpush2.msra.mxu0 %v2289
        %v2291 = vand.u32 %v374, 4294901760
        %v2292 = vsub.f32 %v374, %v2291
        %v2293 = vand.u32 %v2292, 4294901760
        %v2294 = vsub.f32 %v2292, %v2293
        %v2295 = vand.u32 %v2294, 4294901760
        %2296 = vmatprep.subr.mxu0 %v2295
        %v2297 = vand.u32 %v373, 4294901760
        %v2298 = vsub.f32 %v373, %v2297
        %v2299 = vand.u32 %v2298, 4294901760
        %v2300 = vsub.f32 %v2298, %v2299
        %v2301 = vand.u32 %v2300, 4294901760
        %2302 = vmatpush2.msra.mxu0 %v2301
        %v2303 = vand.u32 %v372, 4294901760
        %v2304 = vsub.f32 %v372, %v2303
        %v2305 = vand.u32 %v2304, 4294901760
        %v2306 = vsub.f32 %v2304, %v2305
        %v2307 = vand.u32 %v2306, 4294901760
        %2308 = vmatprep.subr.mxu0 %v2307
        %v2309 = vand.u32 %v371, 4294901760
        %v2310 = vsub.f32 %v371, %v2309
        %v2311 = vand.u32 %v2310, 4294901760
        %v2312 = vsub.f32 %v2310, %v2311
        %v2313 = vand.u32 %v2312, 4294901760
        %2314 = vmatpush2.msra.mxu0 %v2313
        %v2315 = vand.u32 %v370, 4294901760
        %v2316 = vsub.f32 %v370, %v2315
        %v2317 = vand.u32 %v2316, 4294901760
        %v2318 = vsub.f32 %v2316, %v2317
        %v2319 = vand.u32 %v2318, 4294901760
        %2320 = vmatprep.subr.mxu0 %v2319
        %v2321 = vand.u32 %v369, 4294901760
        %v2322 = vsub.f32 %v369, %v2321
        %v2323 = vand.u32 %v2322, 4294901760
        %v2324 = vsub.f32 %v2322, %v2323
        %v2325 = vand.u32 %v2324, 4294901760
        %2326 = vmatpush2.msra.mxu0 %v2325
        %v2327 = vand.u32 %v368, 4294901760
        %v2328 = vsub.f32 %v368, %v2327
        %v2329 = vand.u32 %v2328, 4294901760
        %v2330 = vsub.f32 %v2328, %v2329
        %v2331 = vand.u32 %v2330, 4294901760
        %2332 = vmatprep.subr.mxu0 %v2331
        %v2333 = vand.u32 %v367, 4294901760
        %v2334 = vsub.f32 %v367, %v2333
        %v2335 = vand.u32 %v2334, 4294901760
        %v2336 = vsub.f32 %v2334, %v2335
        %v2337 = vand.u32 %v2336, 4294901760
        %2338 = vmatpush2.msra.mxu0 %v2337
        %v2339 = vand.u32 %v366, 4294901760
        %v2340 = vsub.f32 %v366, %v2339
        %v2341 = vand.u32 %v2340, 4294901760
        %v2342 = vsub.f32 %v2340, %v2341
        %v2343 = vand.u32 %v2342, 4294901760
        %2344 = vmatprep.subr.mxu0 %v2343
        %v2345 = vand.u32 %v365, 4294901760
        %v2346 = vsub.f32 %v365, %v2345
        %v2347 = vand.u32 %v2346, 4294901760
        %v2348 = vsub.f32 %v2346, %v2347
        %v2349 = vand.u32 %v2348, 4294901760
        %2350 = vmatpush2.msra.mxu0 %v2349
        %v2351 = vand.u32 %v364, 4294901760
        %v2352 = vsub.f32 %v364, %v2351
        %v2353 = vand.u32 %v2352, 4294901760
        %v2354 = vsub.f32 %v2352, %v2353
        %v2355 = vand.u32 %v2354, 4294901760
        %2356 = vmatprep.subr.mxu0 %v2355
        %v2357 = vand.u32 %v363, 4294901760
        %v2358 = vsub.f32 %v363, %v2357
        %v2359 = vand.u32 %v2358, 4294901760
        %v2360 = vsub.f32 %v2358, %v2359
        %v2361 = vand.u32 %v2360, 4294901760
        %2362 = vmatpush2.msra.mxu0 %v2361
        %v2363 = vand.u32 %v362, 4294901760
        %v2364 = vsub.f32 %v362, %v2363
        %v2365 = vand.u32 %v2364, 4294901760
        %v2366 = vsub.f32 %v2364, %v2365
        %v2367 = vand.u32 %v2366, 4294901760
        %2368 = vmatprep.subr.mxu0 %v2367
        %v2369 = vand.u32 %v361, 4294901760
        %v2370 = vsub.f32 %v361, %v2369
        %v2371 = vand.u32 %v2370, 4294901760
        %v2372 = vsub.f32 %v2370, %v2371
        %v2373 = vand.u32 %v2372, 4294901760
        %2374 = vmatpush2.msra.mxu0 %v2373
        %v2375 = vand.u32 %v360, 4294901760
        %v2376 = vsub.f32 %v360, %v2375
        %v2377 = vand.u32 %v2376, 4294901760
        %v2378 = vsub.f32 %v2376, %v2377
        %v2379 = vand.u32 %v2378, 4294901760
        %2380 = vmatprep.subr.mxu0 %v2379
        %v2381 = vand.u32 %v359, 4294901760
        %v2382 = vsub.f32 %v359, %v2381
        %v2383 = vand.u32 %v2382, 4294901760
        %v2384 = vsub.f32 %v2382, %v2383
        %v2385 = vand.u32 %v2384, 4294901760
        %2386 = vmatpush2.msra.mxu0 %v2385
        %v2387 = vand.u32 %v358, 4294901760
        %v2388 = vsub.f32 %v358, %v2387
        %v2389 = vand.u32 %v2388, 4294901760
        %v2390 = vsub.f32 %v2388, %v2389
        %v2391 = vand.u32 %v2390, 4294901760
        %2392 = vmatprep.subr.mxu0 %v2391
        %v2393 = vand.u32 %v357, 4294901760
        %v2394 = vsub.f32 %v357, %v2393
        %v2395 = vand.u32 %v2394, 4294901760
        %v2396 = vsub.f32 %v2394, %v2395
        %v2397 = vand.u32 %v2396, 4294901760
        %2398 = vmatpush2.msra.mxu0 %v2397
        %v2399 = vand.u32 %v356, 4294901760
        %v2400 = vsub.f32 %v356, %v2399
        %v2401 = vand.u32 %v2400, 4294901760
        %v2402 = vsub.f32 %v2400, %v2401
        %v2403 = vand.u32 %v2402, 4294901760
        %2404 = vmatprep.subr.mxu0 %v2403
        %v2405 = vand.u32 %v355, 4294901760
        %v2406 = vsub.f32 %v355, %v2405
        %v2407 = vand.u32 %v2406, 4294901760
        %v2408 = vsub.f32 %v2406, %v2407
        %v2409 = vand.u32 %v2408, 4294901760
        %2410 = vmatpush2.msra.mxu0 %v2409
        %v2411 = vand.u32 %v401, 4294901760
        %2412 = vmatprep.mubr.f32.mxu0 %v2411
        %v2413 = vand.u32 %v241, 4294901760
        %2414 = vmatmul.mubr.f32.gmra.mxu0 %v2413
        %v2415 = vpop.f32.mrf.mxu0
        %v2416 = vadd.f32 %v2015, %v2415
        %v2417 = vpop.f32.mrf.mxu0
        %v2418 = vadd.f32 %v2017, %v2417
        %v2419 = vand.u32 %v404, 4294901760
        %2420 = vmatprep.mubr.f32.mxu0 %v2419
        %v2421 = vand.u32 %v245, 4294901760
        %2422 = vmatmul.mubr.f32.gmra.mxu0 %v2421
        %v2423 = vpop.f32.mrf.mxu0
        %v2424 = vadd.f32 %v2031, %v2423
        %v2425 = vpop.f32.mrf.mxu0
        %v2426 = vadd.f32 %v2033, %v2425
        %v2427 = vand.u32 %v407, 4294901760
        %2428 = vmatprep.mubr.f32.mxu0 %v2427
        %v2429 = vand.u32 %v249, 4294901760
        %2430 = vmatmul.mubr.f32.gmra.mxu0 %v2429
        %v2431 = vpop.f32.mrf.mxu0
        %v2432 = vadd.f32 %v2047, %v2431
        %v2433 = vpop.f32.mrf.mxu0
        %v2434 = vadd.f32 %v2049, %v2433
        %v2435 = vand.u32 %v410, 4294901760
        %2436 = vmatprep.mubr.f32.mxu0 %v2435
        %v2437 = vand.u32 %v253, 4294901760
        %2438 = vmatmul.mubr.f32.gmra.mxu0 %v2437
        %v2439 = vpop.f32.mrf.mxu0
        %v2440 = vadd.f32 %v2063, %v2439
        %v2441 = vpop.f32.mrf.mxu0
        %v2442 = vadd.f32 %v2065, %v2441
        %2443 = vdwg.mxu0
        %v2444 = vand.u32 %v354, 4294901760
        %v2445 = vsub.f32 %v354, %v2444
        %2446 = vmatprep.subr.mxu0 %v2445
        %v2447 = vand.u32 %v353, 4294901760
        %v2448 = vsub.f32 %v353, %v2447
        %2449 = vmatpush1.msra.mxu0 %v2448
        %v2450 = vand.u32 %v352, 4294901760
        %v2451 = vsub.f32 %v352, %v2450
        %2452 = vmatprep.subr.mxu0 %v2451
        %v2453 = vand.u32 %v351, 4294901760
        %v2454 = vsub.f32 %v351, %v2453
        %2455 = vmatpush1.msra.mxu0 %v2454
        %v2456 = vand.u32 %v350, 4294901760
        %v2457 = vsub.f32 %v350, %v2456
        %2458 = vmatprep.subr.mxu0 %v2457
        %v2459 = vand.u32 %v349, 4294901760
        %v2460 = vsub.f32 %v349, %v2459
        %2461 = vmatpush1.msra.mxu0 %v2460
        %v2462 = vand.u32 %v348, 4294901760
        %v2463 = vsub.f32 %v348, %v2462
        %2464 = vmatprep.subr.mxu0 %v2463
        %v2465 = vand.u32 %v347, 4294901760
        %v2466 = vsub.f32 %v347, %v2465
        %2467 = vmatpush1.msra.mxu0 %v2466
        %v2468 = vand.u32 %v346, 4294901760
        %v2469 = vsub.f32 %v346, %v2468
        %2470 = vmatprep.subr.mxu0 %v2469
        %v2471 = vand.u32 %v345, 4294901760
        %v2472 = vsub.f32 %v345, %v2471
        %2473 = vmatpush1.msra.mxu0 %v2472
        %v2474 = vand.u32 %v344, 4294901760
        %v2475 = vsub.f32 %v344, %v2474
        %2476 = vmatprep.subr.mxu0 %v2475
        %v2477 = vand.u32 %v343, 4294901760
        %v2478 = vsub.f32 %v343, %v2477
        %2479 = vmatpush1.msra.mxu0 %v2478
        %v2480 = vand.u32 %v342, 4294901760
        %v2481 = vsub.f32 %v342, %v2480
        %2482 = vmatprep.subr.mxu0 %v2481
        %v2483 = vand.u32 %v341, 4294901760
        %v2484 = vsub.f32 %v341, %v2483
        %2485 = vmatpush1.msra.mxu0 %v2484
        %v2486 = vand.u32 %v340, 4294901760
        %v2487 = vsub.f32 %v340, %v2486
        %2488 = vmatprep.subr.mxu0 %v2487
        %v2489 = vand.u32 %v339, 4294901760
        %v2490 = vsub.f32 %v339, %v2489
        %2491 = vmatpush1.msra.mxu0 %v2490
        %v2492 = vand.u32 %v338, 4294901760
        %v2493 = vsub.f32 %v338, %v2492
        %2494 = vmatprep.subr.mxu0 %v2493
        %v2495 = vand.u32 %v337, 4294901760
        %v2496 = vsub.f32 %v337, %v2495
        %2497 = vmatpush1.msra.mxu0 %v2496
        %v2498 = vand.u32 %v336, 4294901760
        %v2499 = vsub.f32 %v336, %v2498
        %2500 = vmatprep.subr.mxu0 %v2499
        %v2501 = vand.u32 %v335, 4294901760
        %v2502 = vsub.f32 %v335, %v2501
        %2503 = vmatpush1.msra.mxu0 %v2502
        %v2504 = vand.u32 %v334, 4294901760
        %v2505 = vsub.f32 %v334, %v2504
        %2506 = vmatprep.subr.mxu0 %v2505
        %v2507 = vand.u32 %v333, 4294901760
        %v2508 = vsub.f32 %v333, %v2507
        %2509 = vmatpush1.msra.mxu0 %v2508
        %v2510 = vand.u32 %v332, 4294901760
        %v2511 = vsub.f32 %v332, %v2510
        %2512 = vmatprep.subr.mxu0 %v2511
        %v2513 = vand.u32 %v331, 4294901760
        %v2514 = vsub.f32 %v331, %v2513
        %2515 = vmatpush1.msra.mxu0 %v2514
        %v2516 = vand.u32 %v330, 4294901760
        %v2517 = vsub.f32 %v330, %v2516
        %2518 = vmatprep.subr.mxu0 %v2517
        %v2519 = vand.u32 %v329, 4294901760
        %v2520 = vsub.f32 %v329, %v2519
        %2521 = vmatpush1.msra.mxu0 %v2520
        %v2522 = vand.u32 %v328, 4294901760
        %v2523 = vsub.f32 %v328, %v2522
        %2524 = vmatprep.subr.mxu0 %v2523
        %v2525 = vand.u32 %v327, 4294901760
        %v2526 = vsub.f32 %v327, %v2525
        %2527 = vmatpush1.msra.mxu0 %v2526
        %v2528 = vand.u32 %v326, 4294901760
        %v2529 = vsub.f32 %v326, %v2528
        %2530 = vmatprep.subr.mxu0 %v2529
        %v2531 = vand.u32 %v325, 4294901760
        %v2532 = vsub.f32 %v325, %v2531
        %2533 = vmatpush1.msra.mxu0 %v2532
        %v2534 = vand.u32 %v324, 4294901760
        %v2535 = vsub.f32 %v324, %v2534
        %2536 = vmatprep.subr.mxu0 %v2535
        %v2537 = vand.u32 %v323, 4294901760
        %v2538 = vsub.f32 %v323, %v2537
        %2539 = vmatpush1.msra.mxu0 %v2538
        %2540 = vmatprep.subr.mxu0 0.0
        %2541 = vmatpush2.msra.mxu0 0.0
        %2542 = vmatprep.subr.mxu0 0.0
        %2543 = vmatpush2.msra.mxu0 0.0
        %2544 = vmatprep.subr.mxu0 0.0
        %2545 = vmatpush2.msra.mxu0 0.0
        %2546 = vmatprep.subr.mxu0 0.0
        %2547 = vmatpush2.msra.mxu0 0.0
        %v2548 = vand.u32 %v378, 4294901760
        %v2549 = vsub.f32 %v378, %v2548
        %2550 = vmatprep.subr.mxu0 %v2549
        %v2551 = vand.u32 %v377, 4294901760
        %v2552 = vsub.f32 %v377, %v2551
        %2553 = vmatpush2.msra.mxu0 %v2552
        %v2554 = vand.u32 %v376, 4294901760
        %v2555 = vsub.f32 %v376, %v2554
        %2556 = vmatprep.subr.mxu0 %v2555
        %v2557 = vand.u32 %v375, 4294901760
        %v2558 = vsub.f32 %v375, %v2557
        %2559 = vmatpush2.msra.mxu0 %v2558
        %v2560 = vand.u32 %v374, 4294901760
        %v2561 = vsub.f32 %v374, %v2560
        %2562 = vmatprep.subr.mxu0 %v2561
        %v2563 = vand.u32 %v373, 4294901760
        %v2564 = vsub.f32 %v373, %v2563
        %2565 = vmatpush2.msra.mxu0 %v2564
        %v2566 = vand.u32 %v372, 4294901760
        %v2567 = vsub.f32 %v372, %v2566
        %2568 = vmatprep.subr.mxu0 %v2567
        %v2569 = vand.u32 %v371, 4294901760
        %v2570 = vsub.f32 %v371, %v2569
        %2571 = vmatpush2.msra.mxu0 %v2570
        %v2572 = vand.u32 %v370, 4294901760
        %v2573 = vsub.f32 %v370, %v2572
        %2574 = vmatprep.subr.mxu0 %v2573
        %v2575 = vand.u32 %v369, 4294901760
        %v2576 = vsub.f32 %v369, %v2575
        %2577 = vmatpush2.msra.mxu0 %v2576
        %v2578 = vand.u32 %v368, 4294901760
        %v2579 = vsub.f32 %v368, %v2578
        %2580 = vmatprep.subr.mxu0 %v2579
        %v2581 = vand.u32 %v367, 4294901760
        %v2582 = vsub.f32 %v367, %v2581
        %2583 = vmatpush2.msra.mxu0 %v2582
        %v2584 = vand.u32 %v366, 4294901760
        %v2585 = vsub.f32 %v366, %v2584
        %2586 = vmatprep.subr.mxu0 %v2585
        %v2587 = vand.u32 %v365, 4294901760
        %v2588 = vsub.f32 %v365, %v2587
        %2589 = vmatpush2.msra.mxu0 %v2588
        %v2590 = vand.u32 %v364, 4294901760
        %v2591 = vsub.f32 %v364, %v2590
        %2592 = vmatprep.subr.mxu0 %v2591
        %v2593 = vand.u32 %v363, 4294901760
        %v2594 = vsub.f32 %v363, %v2593
        %2595 = vmatpush2.msra.mxu0 %v2594
        %v2596 = vand.u32 %v362, 4294901760
        %v2597 = vsub.f32 %v362, %v2596
        %2598 = vmatprep.subr.mxu0 %v2597
        %v2599 = vand.u32 %v361, 4294901760
        %v2600 = vsub.f32 %v361, %v2599
        %2601 = vmatpush2.msra.mxu0 %v2600
        %v2602 = vand.u32 %v360, 4294901760
        %v2603 = vsub.f32 %v360, %v2602
        %2604 = vmatprep.subr.mxu0 %v2603
        %v2605 = vand.u32 %v359, 4294901760
        %v2606 = vsub.f32 %v359, %v2605
        %2607 = vmatpush2.msra.mxu0 %v2606
        %v2608 = vand.u32 %v358, 4294901760
        %v2609 = vsub.f32 %v358, %v2608
        %2610 = vmatprep.subr.mxu0 %v2609
        %v2611 = vand.u32 %v357, 4294901760
        %v2612 = vsub.f32 %v357, %v2611
        %2613 = vmatpush2.msra.mxu0 %v2612
        %v2614 = vand.u32 %v356, 4294901760
        %v2615 = vsub.f32 %v356, %v2614
        %2616 = vmatprep.subr.mxu0 %v2615
        %v2617 = vand.u32 %v355, 4294901760
        %v2618 = vsub.f32 %v355, %v2617
        %2619 = vmatpush2.msra.mxu0 %v2618
        %v2620 = vand.u32 %v401, 4294901760
        %v2621 = vsub.f32 %v401, %v2620
        %2622 = vmatprep.mubr.f32.mxu0 %v2621
        %v2623 = vand.u32 %v241, 4294901760
        %v2624 = vsub.f32 %v241, %v2623
        %2625 = vmatmul.mubr.f32.gmra.mxu0 %v2624
        %v2626 = vpop.f32.mrf.mxu0
        %v2627 = vadd.f32 %v2416, %v2626
        %v2628 = vpop.f32.mrf.mxu0
        %v2629 = vadd.f32 %v2418, %v2628
        %v2630 = vand.u32 %v404, 4294901760
        %v2631 = vsub.f32 %v404, %v2630
        %2632 = vmatprep.mubr.f32.mxu0 %v2631
        %v2633 = vand.u32 %v245, 4294901760
        %v2634 = vsub.f32 %v245, %v2633
        %2635 = vmatmul.mubr.f32.gmra.mxu0 %v2634
        %v2636 = vpop.f32.mrf.mxu0
        %v2637 = vadd.f32 %v2424, %v2636
        %v2638 = vpop.f32.mrf.mxu0
        %v2639 = vadd.f32 %v2426, %v2638
        %v2640 = vand.u32 %v407, 4294901760
        %v2641 = vsub.f32 %v407, %v2640
        %2642 = vmatprep.mubr.f32.mxu0 %v2641
        %v2643 = vand.u32 %v249, 4294901760
        %v2644 = vsub.f32 %v249, %v2643
        %2645 = vmatmul.mubr.f32.gmra.mxu0 %v2644
        %v2646 = vpop.f32.mrf.mxu0
        %v2647 = vadd.f32 %v2432, %v2646
        %v2648 = vpop.f32.mrf.mxu0
        %v2649 = vadd.f32 %v2434, %v2648
        %v2650 = vand.u32 %v410, 4294901760
        %v2651 = vsub.f32 %v410, %v2650
        %2652 = vmatprep.mubr.f32.mxu0 %v2651
        %v2653 = vand.u32 %v253, 4294901760
        %v2654 = vsub.f32 %v253, %v2653
        %2655 = vmatmul.mubr.f32.gmra.mxu0 %v2654
        %v2656 = vpop.f32.mrf.mxu0
        %v2657 = vadd.f32 %v2440, %v2656
        %v2658 = vpop.f32.mrf.mxu0
        %v2659 = vadd.f32 %v2442, %v2658
        %2660 = vdwg.mxu0
        %v2661 = vand.u32 %v354, 4294901760
        %2662 = vmatprep.subr.mxu0 %v2661
        %v2663 = vand.u32 %v353, 4294901760
        %2664 = vmatpush1.msra.mxu0 %v2663
        %v2665 = vand.u32 %v352, 4294901760
        %2666 = vmatprep.subr.mxu0 %v2665
        %v2667 = vand.u32 %v351, 4294901760
        %2668 = vmatpush1.msra.mxu0 %v2667
        %v2669 = vand.u32 %v350, 4294901760
        %2670 = vmatprep.subr.mxu0 %v2669
        %v2671 = vand.u32 %v349, 4294901760
        %2672 = vmatpush1.msra.mxu0 %v2671
        %v2673 = vand.u32 %v348, 4294901760
        %2674 = vmatprep.subr.mxu0 %v2673
        %v2675 = vand.u32 %v347, 4294901760
        %2676 = vmatpush1.msra.mxu0 %v2675
        %v2677 = vand.u32 %v346, 4294901760
        %2678 = vmatprep.subr.mxu0 %v2677
        %v2679 = vand.u32 %v345, 4294901760
        %2680 = vmatpush1.msra.mxu0 %v2679
        %v2681 = vand.u32 %v344, 4294901760
        %2682 = vmatprep.subr.mxu0 %v2681
        %v2683 = vand.u32 %v343, 4294901760
        %2684 = vmatpush1.msra.mxu0 %v2683
        %v2685 = vand.u32 %v342, 4294901760
        %2686 = vmatprep.subr.mxu0 %v2685
        %v2687 = vand.u32 %v341, 4294901760
        %2688 = vmatpush1.msra.mxu0 %v2687
        %v2689 = vand.u32 %v340, 4294901760
        %2690 = vmatprep.subr.mxu0 %v2689
        %v2691 = vand.u32 %v339, 4294901760
        %2692 = vmatpush1.msra.mxu0 %v2691
        %v2693 = vand.u32 %v338, 4294901760
        %2694 = vmatprep.subr.mxu0 %v2693
        %v2695 = vand.u32 %v337, 4294901760
        %2696 = vmatpush1.msra.mxu0 %v2695
        %v2697 = vand.u32 %v336, 4294901760
        %2698 = vmatprep.subr.mxu0 %v2697
        %v2699 = vand.u32 %v335, 4294901760
        %2700 = vmatpush1.msra.mxu0 %v2699
        %v2701 = vand.u32 %v334, 4294901760
        %2702 = vmatprep.subr.mxu0 %v2701
        %v2703 = vand.u32 %v333, 4294901760
        %2704 = vmatpush1.msra.mxu0 %v2703
        %v2705 = vand.u32 %v332, 4294901760
        %2706 = vmatprep.subr.mxu0 %v2705
        %v2707 = vand.u32 %v331, 4294901760
        %2708 = vmatpush1.msra.mxu0 %v2707
        %v2709 = vand.u32 %v330, 4294901760
        %2710 = vmatprep.subr.mxu0 %v2709
        %v2711 = vand.u32 %v329, 4294901760
        %2712 = vmatpush1.msra.mxu0 %v2711
        %v2713 = vand.u32 %v328, 4294901760
        %2714 = vmatprep.subr.mxu0 %v2713
        %v2715 = vand.u32 %v327, 4294901760
        %2716 = vmatpush1.msra.mxu0 %v2715
        %v2717 = vand.u32 %v326, 4294901760
        %2718 = vmatprep.subr.mxu0 %v2717
        %v2719 = vand.u32 %v325, 4294901760
        %2720 = vmatpush1.msra.mxu0 %v2719
        %v2721 = vand.u32 %v324, 4294901760
        %2722 = vmatprep.subr.mxu0 %v2721
        %v2723 = vand.u32 %v323, 4294901760
        %2724 = vmatpush1.msra.mxu0 %v2723
        %2725 = vmatprep.subr.mxu0 0.0
        %2726 = vmatpush2.msra.mxu0 0.0
        %2727 = vmatprep.subr.mxu0 0.0
        %2728 = vmatpush2.msra.mxu0 0.0
        %2729 = vmatprep.subr.mxu0 0.0
        %2730 = vmatpush2.msra.mxu0 0.0
        %2731 = vmatprep.subr.mxu0 0.0
        %2732 = vmatpush2.msra.mxu0 0.0
        %v2733 = vand.u32 %v378, 4294901760
        %2734 = vmatprep.subr.mxu0 %v2733
        %v2735 = vand.u32 %v377, 4294901760
        %2736 = vmatpush2.msra.mxu0 %v2735
        %v2737 = vand.u32 %v376, 4294901760
        %2738 = vmatprep.subr.mxu0 %v2737
        %v2739 = vand.u32 %v375, 4294901760
        %2740 = vmatpush2.msra.mxu0 %v2739
        %v2741 = vand.u32 %v374, 4294901760
        %2742 = vmatprep.subr.mxu0 %v2741
        %v2743 = vand.u32 %v373, 4294901760
        %2744 = vmatpush2.msra.mxu0 %v2743
        %v2745 = vand.u32 %v372, 4294901760
        %2746 = vmatprep.subr.mxu0 %v2745
        %v2747 = vand.u32 %v371, 4294901760
        %2748 = vmatpush2.msra.mxu0 %v2747
        %v2749 = vand.u32 %v370, 4294901760
        %2750 = vmatprep.subr.mxu0 %v2749
        %v2751 = vand.u32 %v369, 4294901760
        %2752 = vmatpush2.msra.mxu0 %v2751
        %v2753 = vand.u32 %v368, 4294901760
        %2754 = vmatprep.subr.mxu0 %v2753
        %v2755 = vand.u32 %v367, 4294901760
        %2756 = vmatpush2.msra.mxu0 %v2755
        %v2757 = vand.u32 %v366, 4294901760
        %2758 = vmatprep.subr.mxu0 %v2757
        %v2759 = vand.u32 %v365, 4294901760
        %2760 = vmatpush2.msra.mxu0 %v2759
        %v2761 = vand.u32 %v364, 4294901760
        %2762 = vmatprep.subr.mxu0 %v2761
        %v2763 = vand.u32 %v363, 4294901760
        %2764 = vmatpush2.msra.mxu0 %v2763
        %v2765 = vand.u32 %v362, 4294901760
        %2766 = vmatprep.subr.mxu0 %v2765
        %v2767 = vand.u32 %v361, 4294901760
        %2768 = vmatpush2.msra.mxu0 %v2767
        %v2769 = vand.u32 %v360, 4294901760
        %2770 = vmatprep.subr.mxu0 %v2769
        %v2771 = vand.u32 %v359, 4294901760
        %2772 = vmatpush2.msra.mxu0 %v2771
        %v2773 = vand.u32 %v358, 4294901760
        %2774 = vmatprep.subr.mxu0 %v2773
        %v2775 = vand.u32 %v357, 4294901760
        %2776 = vmatpush2.msra.mxu0 %v2775
        %v2777 = vand.u32 %v356, 4294901760
        %2778 = vmatprep.subr.mxu0 %v2777
        %v2779 = vand.u32 %v355, 4294901760
        %2780 = vmatpush2.msra.mxu0 %v2779
        %v2781 = vand.u32 %v401, 4294901760
        %v2782 = vsub.f32 %v401, %v2781
        %v2783 = vand.u32 %v2782, 4294901760
        %2784 = vmatprep.mubr.f32.mxu0 %v2783
        %v2785 = vand.u32 %v241, 4294901760
        %v2786 = vsub.f32 %v241, %v2785
        %v2787 = vand.u32 %v2786, 4294901760
        %2788 = vmatmul.mubr.f32.gmra.mxu0 %v2787
        %v2789 = vpop.f32.mrf.mxu0
        %v2790 = vadd.f32 %v2627, %v2789
        %v2791 = vpop.f32.mrf.mxu0
        %v2792 = vadd.f32 %v2629, %v2791
        %v2793 = vand.u32 %v404, 4294901760
        %v2794 = vsub.f32 %v404, %v2793
        %v2795 = vand.u32 %v2794, 4294901760
        %2796 = vmatprep.mubr.f32.mxu0 %v2795
        %v2797 = vand.u32 %v245, 4294901760
        %v2798 = vsub.f32 %v245, %v2797
        %v2799 = vand.u32 %v2798, 4294901760
        %2800 = vmatmul.mubr.f32.gmra.mxu0 %v2799
        %v2801 = vpop.f32.mrf.mxu0
        %v2802 = vadd.f32 %v2637, %v2801
        %v2803 = vpop.f32.mrf.mxu0
        %v2804 = vadd.f32 %v2639, %v2803
        %v2805 = vand.u32 %v407, 4294901760
        %v2806 = vsub.f32 %v407, %v2805
        %v2807 = vand.u32 %v2806, 4294901760
        %2808 = vmatprep.mubr.f32.mxu0 %v2807
        %v2809 = vand.u32 %v249, 4294901760
        %v2810 = vsub.f32 %v249, %v2809
        %v2811 = vand.u32 %v2810, 4294901760
        %2812 = vmatmul.mubr.f32.gmra.mxu0 %v2811
        %v2813 = vpop.f32.mrf.mxu0
        %v2814 = vadd.f32 %v2647, %v2813
        %v2815 = vpop.f32.mrf.mxu0
        %v2816 = vadd.f32 %v2649, %v2815
        %v2817 = vand.u32 %v410, 4294901760
        %v2818 = vsub.f32 %v410, %v2817
        %v2819 = vand.u32 %v2818, 4294901760
        %2820 = vmatprep.mubr.f32.mxu0 %v2819
        %v2821 = vand.u32 %v253, 4294901760
        %v2822 = vsub.f32 %v253, %v2821
        %v2823 = vand.u32 %v2822, 4294901760
        %2824 = vmatmul.mubr.f32.gmra.mxu0 %v2823
        %v2825 = vpop.f32.mrf.mxu0
        %v2826 = vadd.f32 %v2657, %v2825
        %v2827 = vpop.f32.mrf.mxu0
        %v2828 = vadd.f32 %v2659, %v2827
        %2829 = vdwg.mxu0
        %v2830 = vand.u32 %v354, 4294901760
        %v2831 = vsub.f32 %v354, %v2830
        %v2832 = vand.u32 %v2831, 4294901760
        %2833 = vmatprep.subr.mxu0 %v2832
        %v2834 = vand.u32 %v353, 4294901760
        %v2835 = vsub.f32 %v353, %v2834
        %v2836 = vand.u32 %v2835, 4294901760
        %2837 = vmatpush1.msra.mxu0 %v2836
        %v2838 = vand.u32 %v352, 4294901760
        %v2839 = vsub.f32 %v352, %v2838
        %v2840 = vand.u32 %v2839, 4294901760
        %2841 = vmatprep.subr.mxu0 %v2840
        %v2842 = vand.u32 %v351, 4294901760
        %v2843 = vsub.f32 %v351, %v2842
        %v2844 = vand.u32 %v2843, 4294901760
        %2845 = vmatpush1.msra.mxu0 %v2844
        %v2846 = vand.u32 %v350, 4294901760
        %v2847 = vsub.f32 %v350, %v2846
        %v2848 = vand.u32 %v2847, 4294901760
        %2849 = vmatprep.subr.mxu0 %v2848
        %v2850 = vand.u32 %v349, 4294901760
        %v2851 = vsub.f32 %v349, %v2850
        %v2852 = vand.u32 %v2851, 4294901760
        %2853 = vmatpush1.msra.mxu0 %v2852
        %v2854 = vand.u32 %v348, 4294901760
        %v2855 = vsub.f32 %v348, %v2854
        %v2856 = vand.u32 %v2855, 4294901760
        %2857 = vmatprep.subr.mxu0 %v2856
        %v2858 = vand.u32 %v347, 4294901760
        %v2859 = vsub.f32 %v347, %v2858
        %v2860 = vand.u32 %v2859, 4294901760
        %2861 = vmatpush1.msra.mxu0 %v2860
        %v2862 = vand.u32 %v346, 4294901760
        %v2863 = vsub.f32 %v346, %v2862
        %v2864 = vand.u32 %v2863, 4294901760
        %2865 = vmatprep.subr.mxu0 %v2864
        %v2866 = vand.u32 %v345, 4294901760
        %v2867 = vsub.f32 %v345, %v2866
        %v2868 = vand.u32 %v2867, 4294901760
        %2869 = vmatpush1.msra.mxu0 %v2868
        %v2870 = vand.u32 %v344, 4294901760
        %v2871 = vsub.f32 %v344, %v2870
        %v2872 = vand.u32 %v2871, 4294901760
        %2873 = vmatprep.subr.mxu0 %v2872
        %v2874 = vand.u32 %v343, 4294901760
        %v2875 = vsub.f32 %v343, %v2874
        %v2876 = vand.u32 %v2875, 4294901760
        %2877 = vmatpush1.msra.mxu0 %v2876
        %v2878 = vand.u32 %v342, 4294901760
        %v2879 = vsub.f32 %v342, %v2878
        %v2880 = vand.u32 %v2879, 4294901760
        %2881 = vmatprep.subr.mxu0 %v2880
        %v2882 = vand.u32 %v341, 4294901760
        %v2883 = vsub.f32 %v341, %v2882
        %v2884 = vand.u32 %v2883, 4294901760
        %2885 = vmatpush1.msra.mxu0 %v2884
        %v2886 = vand.u32 %v340, 4294901760
        %v2887 = vsub.f32 %v340, %v2886
        %v2888 = vand.u32 %v2887, 4294901760
        %2889 = vmatprep.subr.mxu0 %v2888
        %v2890 = vand.u32 %v339, 4294901760
        %v2891 = vsub.f32 %v339, %v2890
        %v2892 = vand.u32 %v2891, 4294901760
        %2893 = vmatpush1.msra.mxu0 %v2892
        %v2894 = vand.u32 %v338, 4294901760
        %v2895 = vsub.f32 %v338, %v2894
        %v2896 = vand.u32 %v2895, 4294901760
        %2897 = vmatprep.subr.mxu0 %v2896
        %v2898 = vand.u32 %v337, 4294901760
        %v2899 = vsub.f32 %v337, %v2898
        %v2900 = vand.u32 %v2899, 4294901760
        %2901 = vmatpush1.msra.mxu0 %v2900
        %v2902 = vand.u32 %v336, 4294901760
        %v2903 = vsub.f32 %v336, %v2902
        %v2904 = vand.u32 %v2903, 4294901760
        %2905 = vmatprep.subr.mxu0 %v2904
        %v2906 = vand.u32 %v335, 4294901760
        %v2907 = vsub.f32 %v335, %v2906
        %v2908 = vand.u32 %v2907, 4294901760
        %2909 = vmatpush1.msra.mxu0 %v2908
        %v2910 = vand.u32 %v334, 4294901760
        %v2911 = vsub.f32 %v334, %v2910
        %v2912 = vand.u32 %v2911, 4294901760
        %2913 = vmatprep.subr.mxu0 %v2912
        %v2914 = vand.u32 %v333, 4294901760
        %v2915 = vsub.f32 %v333, %v2914
        %v2916 = vand.u32 %v2915, 4294901760
        %2917 = vmatpush1.msra.mxu0 %v2916
        %v2918 = vand.u32 %v332, 4294901760
        %v2919 = vsub.f32 %v332, %v2918
        %v2920 = vand.u32 %v2919, 4294901760
        %2921 = vmatprep.subr.mxu0 %v2920
        %v2922 = vand.u32 %v331, 4294901760
        %v2923 = vsub.f32 %v331, %v2922
        %v2924 = vand.u32 %v2923, 4294901760
        %2925 = vmatpush1.msra.mxu0 %v2924
        %v2926 = vand.u32 %v330, 4294901760
        %v2927 = vsub.f32 %v330, %v2926
        %v2928 = vand.u32 %v2927, 4294901760
        %2929 = vmatprep.subr.mxu0 %v2928
        %v2930 = vand.u32 %v329, 4294901760
        %v2931 = vsub.f32 %v329, %v2930
        %v2932 = vand.u32 %v2931, 4294901760
        %2933 = vmatpush1.msra.mxu0 %v2932
        %v2934 = vand.u32 %v328, 4294901760
        %v2935 = vsub.f32 %v328, %v2934
        %v2936 = vand.u32 %v2935, 4294901760
        %2937 = vmatprep.subr.mxu0 %v2936
        %v2938 = vand.u32 %v327, 4294901760
        %v2939 = vsub.f32 %v327, %v2938
        %v2940 = vand.u32 %v2939, 4294901760
        %2941 = vmatpush1.msra.mxu0 %v2940
        %v2942 = vand.u32 %v326, 4294901760
        %v2943 = vsub.f32 %v326, %v2942
        %v2944 = vand.u32 %v2943, 4294901760
        %2945 = vmatprep.subr.mxu0 %v2944
        %v2946 = vand.u32 %v325, 4294901760
        %v2947 = vsub.f32 %v325, %v2946
        %v2948 = vand.u32 %v2947, 4294901760
        %2949 = vmatpush1.msra.mxu0 %v2948
        %v2950 = vand.u32 %v324, 4294901760
        %v2951 = vsub.f32 %v324, %v2950
        %v2952 = vand.u32 %v2951, 4294901760
        %2953 = vmatprep.subr.mxu0 %v2952
        %v2954 = vand.u32 %v323, 4294901760
        %v2955 = vsub.f32 %v323, %v2954
        %v2956 = vand.u32 %v2955, 4294901760
        %2957 = vmatpush1.msra.mxu0 %v2956
        %2958 = vmatprep.subr.mxu0 0.0
        %2959 = vmatpush2.msra.mxu0 0.0
        %2960 = vmatprep.subr.mxu0 0.0
        %2961 = vmatpush2.msra.mxu0 0.0
        %2962 = vmatprep.subr.mxu0 0.0
        %2963 = vmatpush2.msra.mxu0 0.0
        %2964 = vmatprep.subr.mxu0 0.0
        %2965 = vmatpush2.msra.mxu0 0.0
        %v2966 = vand.u32 %v378, 4294901760
        %v2967 = vsub.f32 %v378, %v2966
        %v2968 = vand.u32 %v2967, 4294901760
        %2969 = vmatprep.subr.mxu0 %v2968
        %v2970 = vand.u32 %v377, 4294901760
        %v2971 = vsub.f32 %v377, %v2970
        %v2972 = vand.u32 %v2971, 4294901760
        %2973 = vmatpush2.msra.mxu0 %v2972
        %v2974 = vand.u32 %v376, 4294901760
        %v2975 = vsub.f32 %v376, %v2974
        %v2976 = vand.u32 %v2975, 4294901760
        %2977 = vmatprep.subr.mxu0 %v2976
        %v2978 = vand.u32 %v375, 4294901760
        %v2979 = vsub.f32 %v375, %v2978
        %v2980 = vand.u32 %v2979, 4294901760
        %2981 = vmatpush2.msra.mxu0 %v2980
        %v2982 = vand.u32 %v374, 4294901760
        %v2983 = vsub.f32 %v374, %v2982
        %v2984 = vand.u32 %v2983, 4294901760
        %2985 = vmatprep.subr.mxu0 %v2984
        %v2986 = vand.u32 %v373, 4294901760
        %v2987 = vsub.f32 %v373, %v2986
        %v2988 = vand.u32 %v2987, 4294901760
        %2989 = vmatpush2.msra.mxu0 %v2988
        %v2990 = vand.u32 %v372, 4294901760
        %v2991 = vsub.f32 %v372, %v2990
        %v2992 = vand.u32 %v2991, 4294901760
        %2993 = vmatprep.subr.mxu0 %v2992
        %v2994 = vand.u32 %v371, 4294901760
        %v2995 = vsub.f32 %v371, %v2994
        %v2996 = vand.u32 %v2995, 4294901760
        %2997 = vmatpush2.msra.mxu0 %v2996
        %v2998 = vand.u32 %v370, 4294901760
        %v2999 = vsub.f32 %v370, %v2998
        %v3000 = vand.u32 %v2999, 4294901760
        %3001 = vmatprep.subr.mxu0 %v3000
        %v3002 = vand.u32 %v369, 4294901760
        %v3003 = vsub.f32 %v369, %v3002
        %v3004 = vand.u32 %v3003, 4294901760
        %3005 = vmatpush2.msra.mxu0 %v3004
        %v3006 = vand.u32 %v368, 4294901760
        %v3007 = vsub.f32 %v368, %v3006
        %v3008 = vand.u32 %v3007, 4294901760
        %3009 = vmatprep.subr.mxu0 %v3008
        %v3010 = vand.u32 %v367, 4294901760
        %v3011 = vsub.f32 %v367, %v3010
        %v3012 = vand.u32 %v3011, 4294901760
        %3013 = vmatpush2.msra.mxu0 %v3012
        %v3014 = vand.u32 %v366, 4294901760
        %v3015 = vsub.f32 %v366, %v3014
        %v3016 = vand.u32 %v3015, 4294901760
        %3017 = vmatprep.subr.mxu0 %v3016
        %v3018 = vand.u32 %v365, 4294901760
        %v3019 = vsub.f32 %v365, %v3018
        %v3020 = vand.u32 %v3019, 4294901760
        %3021 = vmatpush2.msra.mxu0 %v3020
        %v3022 = vand.u32 %v364, 4294901760
        %v3023 = vsub.f32 %v364, %v3022
        %v3024 = vand.u32 %v3023, 4294901760
        %3025 = vmatprep.subr.mxu0 %v3024
        %v3026 = vand.u32 %v363, 4294901760
        %v3027 = vsub.f32 %v363, %v3026
        %v3028 = vand.u32 %v3027, 4294901760
        %3029 = vmatpush2.msra.mxu0 %v3028
        %v3030 = vand.u32 %v362, 4294901760
        %v3031 = vsub.f32 %v362, %v3030
        %v3032 = vand.u32 %v3031, 4294901760
        %3033 = vmatprep.subr.mxu0 %v3032
        %v3034 = vand.u32 %v361, 4294901760
        %v3035 = vsub.f32 %v361, %v3034
        %v3036 = vand.u32 %v3035, 4294901760
        %3037 = vmatpush2.msra.mxu0 %v3036
        %v3038 = vand.u32 %v360, 4294901760
        %v3039 = vsub.f32 %v360, %v3038
        %v3040 = vand.u32 %v3039, 4294901760
        %3041 = vmatprep.subr.mxu0 %v3040
        %v3042 = vand.u32 %v359, 4294901760
        %v3043 = vsub.f32 %v359, %v3042
        %v3044 = vand.u32 %v3043, 4294901760
        %3045 = vmatpush2.msra.mxu0 %v3044
        %v3046 = vand.u32 %v358, 4294901760
        %v3047 = vsub.f32 %v358, %v3046
        %v3048 = vand.u32 %v3047, 4294901760
        %3049 = vmatprep.subr.mxu0 %v3048
        %v3050 = vand.u32 %v357, 4294901760
        %v3051 = vsub.f32 %v357, %v3050
        %v3052 = vand.u32 %v3051, 4294901760
        %3053 = vmatpush2.msra.mxu0 %v3052
        %v3054 = vand.u32 %v356, 4294901760
        %v3055 = vsub.f32 %v356, %v3054
        %v3056 = vand.u32 %v3055, 4294901760
        %3057 = vmatprep.subr.mxu0 %v3056
        %v3058 = vand.u32 %v355, 4294901760
        %v3059 = vsub.f32 %v355, %v3058
        %v3060 = vand.u32 %v3059, 4294901760
        %3061 = vmatpush2.msra.mxu0 %v3060
        %v3062 = vand.u32 %v401, 4294901760
        %3063 = vmatprep.mubr.f32.mxu0 %v3062
        %v3064 = vand.u32 %v241, 4294901760
        %3065 = vmatmul.mubr.f32.gmra.mxu0 %v3064
        %v3066 = vpop.f32.mrf.mxu0
        %v3067 = vadd.f32 %v2790, %v3066
        %v3068 = vpop.f32.mrf.mxu0
        %v3069 = vadd.f32 %v2792, %v3068
        %v3070 = vand.u32 %v404, 4294901760
        %3071 = vmatprep.mubr.f32.mxu0 %v3070
        %v3072 = vand.u32 %v245, 4294901760
        %3073 = vmatmul.mubr.f32.gmra.mxu0 %v3072
        %v3074 = vpop.f32.mrf.mxu0
        %v3075 = vadd.f32 %v2802, %v3074
        %v3076 = vpop.f32.mrf.mxu0
        %v3077 = vadd.f32 %v2804, %v3076
        %v3078 = vand.u32 %v407, 4294901760
        %3079 = vmatprep.mubr.f32.mxu0 %v3078
        %v3080 = vand.u32 %v249, 4294901760
        %3081 = vmatmul.mubr.f32.gmra.mxu0 %v3080
        %v3082 = vpop.f32.mrf.mxu0
        %v3083 = vadd.f32 %v2814, %v3082
        %v3084 = vpop.f32.mrf.mxu0
        %v3085 = vadd.f32 %v2816, %v3084
        %v3086 = vand.u32 %v410, 4294901760
        %3087 = vmatprep.mubr.f32.mxu0 %v3086
        %v3088 = vand.u32 %v253, 4294901760
        %3089 = vmatmul.mubr.f32.gmra.mxu0 %v3088
        %v3090 = vpop.f32.mrf.mxu0
        %v3091 = vadd.f32 %v2826, %v3090
        %v3092 = vpop.f32.mrf.mxu0
        %v3093 = vadd.f32 %v2828, %v3092
        %3094 = vdwg.mxu0
        %v3095 = vand.u32 %v354, 4294901760
        %3096 = vmatprep.subr.mxu0 %v3095
        %v3097 = vand.u32 %v353, 4294901760
        %3098 = vmatpush1.msra.mxu0 %v3097
        %v3099 = vand.u32 %v352, 4294901760
        %3100 = vmatprep.subr.mxu0 %v3099
        %v3101 = vand.u32 %v351, 4294901760
        %3102 = vmatpush1.msra.mxu0 %v3101
        %v3103 = vand.u32 %v350, 4294901760
        %3104 = vmatprep.subr.mxu0 %v3103
        %v3105 = vand.u32 %v349, 4294901760
        %3106 = vmatpush1.msra.mxu0 %v3105
        %v3107 = vand.u32 %v348, 4294901760
        %3108 = vmatprep.subr.mxu0 %v3107
        %v3109 = vand.u32 %v347, 4294901760
        %3110 = vmatpush1.msra.mxu0 %v3109
        %v3111 = vand.u32 %v346, 4294901760
        %3112 = vmatprep.subr.mxu0 %v3111
        %v3113 = vand.u32 %v345, 4294901760
        %3114 = vmatpush1.msra.mxu0 %v3113
        %v3115 = vand.u32 %v344, 4294901760
        %3116 = vmatprep.subr.mxu0 %v3115
        %v3117 = vand.u32 %v343, 4294901760
        %3118 = vmatpush1.msra.mxu0 %v3117
        %v3119 = vand.u32 %v342, 4294901760
        %3120 = vmatprep.subr.mxu0 %v3119
        %v3121 = vand.u32 %v341, 4294901760
        %3122 = vmatpush1.msra.mxu0 %v3121
        %v3123 = vand.u32 %v340, 4294901760
        %3124 = vmatprep.subr.mxu0 %v3123
        %v3125 = vand.u32 %v339, 4294901760
        %3126 = vmatpush1.msra.mxu0 %v3125
        %v3127 = vand.u32 %v338, 4294901760
        %3128 = vmatprep.subr.mxu0 %v3127
        %v3129 = vand.u32 %v337, 4294901760
        %3130 = vmatpush1.msra.mxu0 %v3129
        %v3131 = vand.u32 %v336, 4294901760
        %3132 = vmatprep.subr.mxu0 %v3131
        %v3133 = vand.u32 %v335, 4294901760
        %3134 = vmatpush1.msra.mxu0 %v3133
        %v3135 = vand.u32 %v334, 4294901760
        %3136 = vmatprep.subr.mxu0 %v3135
        %v3137 = vand.u32 %v333, 4294901760
        %3138 = vmatpush1.msra.mxu0 %v3137
        %v3139 = vand.u32 %v332, 4294901760
        %3140 = vmatprep.subr.mxu0 %v3139
        %v3141 = vand.u32 %v331, 4294901760
        %3142 = vmatpush1.msra.mxu0 %v3141
        %v3143 = vand.u32 %v330, 4294901760
        %3144 = vmatprep.subr.mxu0 %v3143
        %v3145 = vand.u32 %v329, 4294901760
        %3146 = vmatpush1.msra.mxu0 %v3145
        %v3147 = vand.u32 %v328, 4294901760
        %3148 = vmatprep.subr.mxu0 %v3147
        %v3149 = vand.u32 %v327, 4294901760
        %3150 = vmatpush1.msra.mxu0 %v3149
        %v3151 = vand.u32 %v326, 4294901760
        %3152 = vmatprep.subr.mxu0 %v3151
        %v3153 = vand.u32 %v325, 4294901760
        %3154 = vmatpush1.msra.mxu0 %v3153
        %v3155 = vand.u32 %v324, 4294901760
        %3156 = vmatprep.subr.mxu0 %v3155
        %v3157 = vand.u32 %v323, 4294901760
        %3158 = vmatpush1.msra.mxu0 %v3157
        %3159 = vmatprep.subr.mxu0 0.0
        %3160 = vmatpush2.msra.mxu0 0.0
        %3161 = vmatprep.subr.mxu0 0.0
        %3162 = vmatpush2.msra.mxu0 0.0
        %3163 = vmatprep.subr.mxu0 0.0
        %3164 = vmatpush2.msra.mxu0 0.0
        %3165 = vmatprep.subr.mxu0 0.0
        %3166 = vmatpush2.msra.mxu0 0.0
        %v3167 = vand.u32 %v378, 4294901760
        %3168 = vmatprep.subr.mxu0 %v3167
        %v3169 = vand.u32 %v377, 4294901760
        %3170 = vmatpush2.msra.mxu0 %v3169
        %v3171 = vand.u32 %v376, 4294901760
        %3172 = vmatprep.subr.mxu0 %v3171
        %v3173 = vand.u32 %v375, 4294901760
        %3174 = vmatpush2.msra.mxu0 %v3173
        %v3175 = vand.u32 %v374, 4294901760
        %3176 = vmatprep.subr.mxu0 %v3175
        %v3177 = vand.u32 %v373, 4294901760
        %3178 = vmatpush2.msra.mxu0 %v3177
        %v3179 = vand.u32 %v372, 4294901760
        %3180 = vmatprep.subr.mxu0 %v3179
        %v3181 = vand.u32 %v371, 4294901760
        %3182 = vmatpush2.msra.mxu0 %v3181
        %v3183 = vand.u32 %v370, 4294901760
        %3184 = vmatprep.subr.mxu0 %v3183
        %v3185 = vand.u32 %v369, 4294901760
        %3186 = vmatpush2.msra.mxu0 %v3185
        %v3187 = vand.u32 %v368, 4294901760
        %3188 = vmatprep.subr.mxu0 %v3187
        %v3189 = vand.u32 %v367, 4294901760
        %3190 = vmatpush2.msra.mxu0 %v3189
        %v3191 = vand.u32 %v366, 4294901760
        %3192 = vmatprep.subr.mxu0 %v3191
        %v3193 = vand.u32 %v365, 4294901760
        %3194 = vmatpush2.msra.mxu0 %v3193
        %v3195 = vand.u32 %v364, 4294901760
        %3196 = vmatprep.subr.mxu0 %v3195
        %v3197 = vand.u32 %v363, 4294901760
        %3198 = vmatpush2.msra.mxu0 %v3197
        %v3199 = vand.u32 %v362, 4294901760
        %3200 = vmatprep.subr.mxu0 %v3199
        %v3201 = vand.u32 %v361, 4294901760
        %3202 = vmatpush2.msra.mxu0 %v3201
        %v3203 = vand.u32 %v360, 4294901760
        %3204 = vmatprep.subr.mxu0 %v3203
        %v3205 = vand.u32 %v359, 4294901760
        %3206 = vmatpush2.msra.mxu0 %v3205
        %v3207 = vand.u32 %v358, 4294901760
        %3208 = vmatprep.subr.mxu0 %v3207
        %v3209 = vand.u32 %v357, 4294901760
        %3210 = vmatpush2.msra.mxu0 %v3209
        %v3211 = vand.u32 %v356, 4294901760
        %3212 = vmatprep.subr.mxu0 %v3211
        %v3213 = vand.u32 %v355, 4294901760
        %3214 = vmatpush2.msra.mxu0 %v3213
        %v3215 = vand.u32 %v401, 4294901760
        %3216 = vmatprep.mubr.f32.mxu0 %v3215
        %v3217 = vand.u32 %v241, 4294901760
        %3218 = vmatmul.mubr.f32.gmra.mxu0 %v3217
        %v3219 = vpop.f32.mrf.mxu0
        %v3220 = vadd.f32 %v3067, %v3219
        %v3221 = vpop.f32.mrf.mxu0
        %v3222 = vadd.f32 %v3069, %v3221
        %v3223 = vand.u32 %v404, 4294901760
        %3224 = vmatprep.mubr.f32.mxu0 %v3223
        %v3225 = vand.u32 %v245, 4294901760
        %3226 = vmatmul.mubr.f32.gmra.mxu0 %v3225
        %v3227 = vpop.f32.mrf.mxu0
        %v3228 = vadd.f32 %v3075, %v3227
        %v3229 = vpop.f32.mrf.mxu0
        %v3230 = vadd.f32 %v3077, %v3229
        %v3231 = vand.u32 %v407, 4294901760
        %3232 = vmatprep.mubr.f32.mxu0 %v3231
        %v3233 = vand.u32 %v249, 4294901760
        %3234 = vmatmul.mubr.f32.gmra.mxu0 %v3233
        %v3235 = vpop.f32.mrf.mxu0
        %v3236 = vadd.f32 %v3083, %v3235
        %v3237 = vpop.f32.mrf.mxu0
        %v3238 = vadd.f32 %v3085, %v3237
        %v3239 = vand.u32 %v410, 4294901760
        %3240 = vmatprep.mubr.f32.mxu0 %v3239
        %v3241 = vand.u32 %v253, 4294901760
        %3242 = vmatmul.mubr.f32.gmra.mxu0 %v3241
        %v3243 = vpop.f32.mrf.mxu0
        %v3244 = vadd.f32 %v3091, %v3243
        %v3245 = vpop.f32.mrf.mxu0
        %v3246 = vadd.f32 %v3093, %v3245
        %3247 = vdwg.mxu0
        %vm3248 = vcmp.gt.f32.partialorder %v3220, 0.0
        %vm3249 = vcmp.gt.f32.partialorder %v3222, 0.0
        %vm3250 = vcmp.gt.f32.partialorder %v3228, 0.0
        %vm3251 = vcmp.gt.f32.partialorder %v3230, 0.0
        %vm3252 = vcmp.gt.f32.partialorder %v3236, 0.0
        %vm3253 = vcmp.gt.f32.partialorder %v3238, 0.0
        %vm3254 = vcmp.gt.f32.partialorder %v3244, 0.0
        %vm3255 = vcmp.gt.f32.partialorder %v3246, 0.0
        %v3256 = vmul.f32 %v3220, -0.1
        %v3257 = vmul.f32 %v3222, -0.1
        %v3258 = vmul.f32 %v3228, -0.1
        %v3259 = vmul.f32 %v3230, -0.1
        %v3260 = vmul.f32 %v3236, -0.1
        %v3261 = vmul.f32 %v3238, -0.1
        %v3262 = vmul.f32 %v3244, -0.1
        %v3263 = vmul.f32 %v3246, -0.1
        %v3264 = vsel %vm3248, %v3220, %v3256
        %v3265 = vsel %vm3249, %v3222, %v3257
        %v3266 = vsel %vm3250, %v3228, %v3258
        %v3267 = vsel %vm3251, %v3230, %v3259
        %v3268 = vsel %vm3252, %v3236, %v3260
        %v3269 = vsel %vm3253, %v3238, %v3261
        %v3270 = vsel %vm3254, %v3244, %v3262
        %v3271 = vsel %vm3255, %v3246, %v3263
        %3272 = vst [vmem:[%s236] sm:$0xff] %v3264
        %3273 = vst [vmem:[%s236 + $0x8] sm:$0xff] %v3265
        %3274 = vst [vmem:[%s236 + $0x10] sm:$0xff] %v3266
        %3275 = vst [vmem:[%s236 + $0x18] sm:$0xff] %v3267
        %3276 = vst [vmem:[%s236 + $0x20] sm:$0xff] %v3268
        %3277 = vst [vmem:[%s236 + $0x28] sm:$0xff] %v3269
        %3278 = vst [vmem:[%s236 + $0x30] sm:$0xf] %v3270
        %3279 = vst [vmem:[%s236 + $0x38] sm:$0xf] %v3271
        %s3280 = scalar_lea.vmem %s193, 960 [#allocation2]
        %v3281 = vld [vmem:[%s3280] sm:$0xff]
        %v3282 = vld [vmem:[%s3280 + $0x8] sm:$0xff]
        %v3283 = vld [vmem:[%s3280 + $0x10] sm:$0xff]
        %v3284 = vld [vmem:[%s3280 + $0x18] sm:$0xff]
        %v3285 = vld [vmem:[%s3280 + $0x20] sm:$0xff]
        %v3286 = vld [vmem:[%s3280 + $0x28] sm:$0xff]
        %v3287 = vld [vmem:[%s3280 + $0x30] sm:$0xff]
        %v3288 = vld [vmem:[%s3280 + $0x38] sm:$0xff]
        %v3289 = vld [vmem:[%s3280 + $0x40] sm:$0xff]
        %v3290 = vld [vmem:[%s3280 + $0x48] sm:$0xff]
        %v3291 = vld [vmem:[%s3280 + $0x50] sm:$0xff]
        %v3292 = vld [vmem:[%s3280 + $0x58] sm:$0xff]
        %v3293 = vld [vmem:[%s3280 + $0x60] sm:$0xff]
        %v3294 = vld [vmem:[%s3280 + $0x68] sm:$0xff]
        %v3295 = vld [vmem:[%s3280 + $0x70] sm:$0xff]
        %v3296 = vld [vmem:[%s3280 + $0x78] sm:$0xff]
        %v3297 = vld [vmem:[%s3280 + $0x80] sm:$0xff]
        %v3298 = vld [vmem:[%s3280 + $0x88] sm:$0xff]
        %v3299 = vld [vmem:[%s3280 + $0x90] sm:$0xff]
        %v3300 = vld [vmem:[%s3280 + $0x98] sm:$0xff]
        %v3301 = vld [vmem:[%s3280 + $0xa0] sm:$0xff]
        %v3302 = vld [vmem:[%s3280 + $0xa8] sm:$0xff]
        %v3303 = vld [vmem:[%s3280 + $0xb0] sm:$0xff]
        %v3304 = vld [vmem:[%s3280 + $0xb8] sm:$0xff]
        %v3305 = vld [vmem:[%s3280 + $0xc0] sm:$0xff]
        %v3306 = vld [vmem:[%s3280 + $0xc8] sm:$0xff]
        %v3307 = vld [vmem:[%s3280 + $0xd0] sm:$0xff]
        %v3308 = vld [vmem:[%s3280 + $0xd8] sm:$0xff]
        %v3309 = vld [vmem:[%s3280 + $0xe0] sm:$0xff]
        %v3310 = vld [vmem:[%s3280 + $0xe8] sm:$0xff]
        %v3311 = vld [vmem:[%s3280 + $0xf0] sm:$0xff]
        %v3312 = vld [vmem:[%s3280 + $0xf8] sm:$0xff]
        %v3313 = vld [vmem:[%s3280 + $0x100] sm:$0xff]
        %v3314 = vld [vmem:[%s3280 + $0x108] sm:$0xff]
        %v3315 = vld [vmem:[%s3280 + $0x110] sm:$0xff]
        %v3316 = vld [vmem:[%s3280 + $0x118] sm:$0xff]
        %v3317 = vld [vmem:[%s3280 + $0x120] sm:$0xff]
        %v3318 = vld [vmem:[%s3280 + $0x128] sm:$0xff]
        %v3319 = vld [vmem:[%s3280 + $0x130] sm:$0xff]
        %v3320 = vld [vmem:[%s3280 + $0x138] sm:$0xff]
        %v3321 = vld [vmem:[%s3280 + $0x140] sm:$0xff]
        %v3322 = vld [vmem:[%s3280 + $0x148] sm:$0xff]
        %v3323 = vld [vmem:[%s3280 + $0x150] sm:$0xff]
        %v3324 = vld [vmem:[%s3280 + $0x158] sm:$0xff]
        %v3325 = vld [vmem:[%s3280 + $0x160] sm:$0xff]
        %v3326 = vld [vmem:[%s3280 + $0x168] sm:$0xff]
        %v3327 = vld [vmem:[%s3280 + $0x170] sm:$0xff]
        %v3328 = vld [vmem:[%s3280 + $0x178] sm:$0xff]
        %v3329 = vld [vmem:[%s3280 + $0x180] sm:$0xff]
        %v3330 = vld [vmem:[%s3280 + $0x188] sm:$0xff]
        %v3331 = vld [vmem:[%s3280 + $0x190] sm:$0xff]
        %v3332 = vld [vmem:[%s3280 + $0x198] sm:$0xff]
        %v3333 = vld [vmem:[%s3280 + $0x1a0] sm:$0xff]
        %v3334 = vld [vmem:[%s3280 + $0x1a8] sm:$0xff]
        %v3335 = vld [vmem:[%s3280 + $0x1b0] sm:$0xff]
        %v3336 = vld [vmem:[%s3280 + $0x1b8] sm:$0xff]
        %v3337 = vld [vmem:[%s3280 + $0x1c0] sm:$0xff]
        %v3338 = vld [vmem:[%s3280 + $0x1c8] sm:$0xff]
        %v3339 = vld [vmem:[%s3280 + $0x1d0] sm:$0xff]
        %v3340 = vld [vmem:[%s3280 + $0x1d8] sm:$0xff]
        %v3341 = vld [vmem:[%s3280 + $0x1e0] sm:$0xff]
        %v3342 = vld [vmem:[%s3280 + $0x1e8] sm:$0xff]
        %v3343 = vld [vmem:[%s3280 + $0x1f0] sm:$0xff]
        %v3344 = vld [vmem:[%s3280 + $0x1f8] sm:$0xff]
        %v3345 = vld [vmem:[%s3280 + $0x200] sm:$0xff]
        %v3346 = vld [vmem:[%s3280 + $0x208] sm:$0xff]
        %v3347 = vld [vmem:[%s3280 + $0x210] sm:$0xff]
        %v3348 = vld [vmem:[%s3280 + $0x218] sm:$0xff]
        %v3349 = vld [vmem:[%s3280 + $0x220] sm:$0xff]
        %v3350 = vld [vmem:[%s3280 + $0x228] sm:$0xff]
        %v3351 = vld [vmem:[%s3280 + $0x230] sm:$0xff]
        %v3352 = vld [vmem:[%s3280 + $0x238] sm:$0xff]
        %v3353 = vld [vmem:[%s3280 + $0x240] sm:$0xff]
        %v3354 = vld [vmem:[%s3280 + $0x248] sm:$0xff]
        %v3355 = vld [vmem:[%s3280 + $0x250] sm:$0xff]
        %v3356 = vld [vmem:[%s3280 + $0x258] sm:$0xff]
        %v3357 = vld [vmem:[%s3280 + $0x260] sm:$0xff]
        %v3358 = vld [vmem:[%s3280 + $0x268] sm:$0xff]
        %v3359 = vld [vmem:[%s3280 + $0x270] sm:$0xff]
        %v3360 = vld [vmem:[%s3280 + $0x278] sm:$0xff]
        %v3361 = vld [vmem:[%s3280 + $0x280] sm:$0xff]
        %v3362 = vld [vmem:[%s3280 + $0x288] sm:$0xff]
        %v3363 = vld [vmem:[%s3280 + $0x290] sm:$0xff]
        %v3364 = vld [vmem:[%s3280 + $0x298] sm:$0xff]
        %v3365 = vld [vmem:[%s3280 + $0x2a0] sm:$0xff]
        %v3366 = vld [vmem:[%s3280 + $0x2a8] sm:$0xff]
        %v3367 = vld [vmem:[%s3280 + $0x2b0] sm:$0xff]
        %v3368 = vld [vmem:[%s3280 + $0x2b8] sm:$0xff]
        %v3369 = vld [vmem:[%s3280 + $0x2c0] sm:$0xff]
        %v3370 = vld [vmem:[%s3280 + $0x2c8] sm:$0xff]
        %v3371 = vld [vmem:[%s3280 + $0x2d0] sm:$0xff]
        %v3372 = vld [vmem:[%s3280 + $0x2d8] sm:$0xff]
        %v3373 = vld [vmem:[%s3280 + $0x2e0] sm:$0xff]
        %v3374 = vld [vmem:[%s3280 + $0x2e8] sm:$0xff]
        %v3375 = vld [vmem:[%s3280 + $0x2f0] sm:$0xff]
        %v3376 = vld [vmem:[%s3280 + $0x2f8] sm:$0xff]
        %v3377 = vld [vmem:[%s3280 + $0x300] sm:$0xff]
        %v3378 = vld [vmem:[%s3280 + $0x308] sm:$0xff]
        %v3379 = vld [vmem:[%s3280 + $0x310] sm:$0xff]
        %v3380 = vld [vmem:[%s3280 + $0x318] sm:$0xff]
        %v3381 = vld [vmem:[%s3280 + $0x320] sm:$0xff]
        %v3382 = vld [vmem:[%s3280 + $0x328] sm:$0xff]
        %v3383 = vld [vmem:[%s3280 + $0x330] sm:$0xff]
        %v3384 = vld [vmem:[%s3280 + $0x338] sm:$0xff]
        %v3385 = vld [vmem:[%s3280 + $0x340] sm:$0xff]
        %v3386 = vld [vmem:[%s3280 + $0x348] sm:$0xff]
        %v3387 = vld [vmem:[%s3280 + $0x350] sm:$0xff]
        %v3388 = vld [vmem:[%s3280 + $0x358] sm:$0xff]
        %v3389 = vld [vmem:[%s3280 + $0x360] sm:$0xff]
        %v3390 = vld [vmem:[%s3280 + $0x368] sm:$0xff]
        %v3391 = vld [vmem:[%s3280 + $0x370] sm:$0xff]
        %v3392 = vld [vmem:[%s3280 + $0x378] sm:$0xff]
        %v3393 = vld [vmem:[%s3280 + $0x380] sm:$0xff]
        %v3394 = vld [vmem:[%s3280 + $0x388] sm:$0xff]
        %v3395 = vld [vmem:[%s3280 + $0x390] sm:$0xff]
        %v3396 = vld [vmem:[%s3280 + $0x398] sm:$0xff]
        %v3397 = vld [vmem:[%s3280 + $0x3a0] sm:$0xff]
        %v3398 = vld [vmem:[%s3280 + $0x3a8] sm:$0xff]
        %v3399 = vld [vmem:[%s3280 + $0x3b0] sm:$0xff]
        %v3400 = vld [vmem:[%s3280 + $0x3b8] sm:$0xff]
        %v3401 = vand.u32 %v3312, 4294901760
        %3402 = vmatprep.subr.mxu0 %v3401
        %v3403 = vand.u32 %v3311, 4294901760
        %3404 = vmatpush1.msra.mxu0 %v3403
        %v3405 = vand.u32 %v3310, 4294901760
        %3406 = vmatprep.subr.mxu0 %v3405
        %v3407 = vand.u32 %v3309, 4294901760
        %3408 = vmatpush1.msra.mxu0 %v3407
        %v3409 = vand.u32 %v3308, 4294901760
        %3410 = vmatprep.subr.mxu0 %v3409
        %v3411 = vand.u32 %v3307, 4294901760
        %3412 = vmatpush1.msra.mxu0 %v3411
        %v3413 = vand.u32 %v3306, 4294901760
        %3414 = vmatprep.subr.mxu0 %v3413
        %v3415 = vand.u32 %v3305, 4294901760
        %3416 = vmatpush1.msra.mxu0 %v3415
        %v3417 = vand.u32 %v3304, 4294901760
        %3418 = vmatprep.subr.mxu0 %v3417
        %v3419 = vand.u32 %v3303, 4294901760
        %3420 = vmatpush1.msra.mxu0 %v3419
        %v3421 = vand.u32 %v3302, 4294901760
        %3422 = vmatprep.subr.mxu0 %v3421
        %v3423 = vand.u32 %v3301, 4294901760
        %3424 = vmatpush1.msra.mxu0 %v3423
        %v3425 = vand.u32 %v3300, 4294901760
        %3426 = vmatprep.subr.mxu0 %v3425
        %v3427 = vand.u32 %v3299, 4294901760
        %3428 = vmatpush1.msra.mxu0 %v3427
        %v3429 = vand.u32 %v3298, 4294901760
        %3430 = vmatprep.subr.mxu0 %v3429
        %v3431 = vand.u32 %v3297, 4294901760
        %3432 = vmatpush1.msra.mxu0 %v3431
        %v3433 = vand.u32 %v3296, 4294901760
        %3434 = vmatprep.subr.mxu0 %v3433
        %v3435 = vand.u32 %v3295, 4294901760
        %3436 = vmatpush1.msra.mxu0 %v3435
        %v3437 = vand.u32 %v3294, 4294901760
        %3438 = vmatprep.subr.mxu0 %v3437
        %v3439 = vand.u32 %v3293, 4294901760
        %3440 = vmatpush1.msra.mxu0 %v3439
        %v3441 = vand.u32 %v3292, 4294901760
        %3442 = vmatprep.subr.mxu0 %v3441
        %v3443 = vand.u32 %v3291, 4294901760
        %3444 = vmatpush1.msra.mxu0 %v3443
        %v3445 = vand.u32 %v3290, 4294901760
        %3446 = vmatprep.subr.mxu0 %v3445
        %v3447 = vand.u32 %v3289, 4294901760
        %3448 = vmatpush1.msra.mxu0 %v3447
        %v3449 = vand.u32 %v3288, 4294901760
        %3450 = vmatprep.subr.mxu0 %v3449
        %v3451 = vand.u32 %v3287, 4294901760
        %3452 = vmatpush1.msra.mxu0 %v3451
        %v3453 = vand.u32 %v3286, 4294901760
        %3454 = vmatprep.subr.mxu0 %v3453
        %v3455 = vand.u32 %v3285, 4294901760
        %3456 = vmatpush1.msra.mxu0 %v3455
        %v3457 = vand.u32 %v3284, 4294901760
        %3458 = vmatprep.subr.mxu0 %v3457
        %v3459 = vand.u32 %v3283, 4294901760
        %3460 = vmatpush1.msra.mxu0 %v3459
        %v3461 = vand.u32 %v3282, 4294901760
        %3462 = vmatprep.subr.mxu0 %v3461
        %v3463 = vand.u32 %v3281, 4294901760
        %3464 = vmatpush1.msra.mxu0 %v3463
        %v3465 = vand.u32 %v3344, 4294901760
        %3466 = vmatprep.subr.mxu0 %v3465
        %v3467 = vand.u32 %v3343, 4294901760
        %3468 = vmatpush2.msra.mxu0 %v3467
        %v3469 = vand.u32 %v3342, 4294901760
        %3470 = vmatprep.subr.mxu0 %v3469
        %v3471 = vand.u32 %v3341, 4294901760
        %3472 = vmatpush2.msra.mxu0 %v3471
        %v3473 = vand.u32 %v3340, 4294901760
        %3474 = vmatprep.subr.mxu0 %v3473
        %v3475 = vand.u32 %v3339, 4294901760
        %3476 = vmatpush2.msra.mxu0 %v3475
        %v3477 = vand.u32 %v3338, 4294901760
        %3478 = vmatprep.subr.mxu0 %v3477
        %v3479 = vand.u32 %v3337, 4294901760
        %3480 = vmatpush2.msra.mxu0 %v3479
        %v3481 = vand.u32 %v3336, 4294901760
        %3482 = vmatprep.subr.mxu0 %v3481
        %v3483 = vand.u32 %v3335, 4294901760
        %3484 = vmatpush2.msra.mxu0 %v3483
        %v3485 = vand.u32 %v3334, 4294901760
        %3486 = vmatprep.subr.mxu0 %v3485
        %v3487 = vand.u32 %v3333, 4294901760
        %3488 = vmatpush2.msra.mxu0 %v3487
        %v3489 = vand.u32 %v3332, 4294901760
        %3490 = vmatprep.subr.mxu0 %v3489
        %v3491 = vand.u32 %v3331, 4294901760
        %3492 = vmatpush2.msra.mxu0 %v3491
        %v3493 = vand.u32 %v3330, 4294901760
        %3494 = vmatprep.subr.mxu0 %v3493
        %v3495 = vand.u32 %v3329, 4294901760
        %3496 = vmatpush2.msra.mxu0 %v3495
        %v3497 = vand.u32 %v3328, 4294901760
        %3498 = vmatprep.subr.mxu0 %v3497
        %v3499 = vand.u32 %v3327, 4294901760
        %3500 = vmatpush2.msra.mxu0 %v3499
        %v3501 = vand.u32 %v3326, 4294901760
        %3502 = vmatprep.subr.mxu0 %v3501
        %v3503 = vand.u32 %v3325, 4294901760
        %3504 = vmatpush2.msra.mxu0 %v3503
        %v3505 = vand.u32 %v3324, 4294901760
        %3506 = vmatprep.subr.mxu0 %v3505
        %v3507 = vand.u32 %v3323, 4294901760
        %3508 = vmatpush2.msra.mxu0 %v3507
        %v3509 = vand.u32 %v3322, 4294901760
        %3510 = vmatprep.subr.mxu0 %v3509
        %v3511 = vand.u32 %v3321, 4294901760
        %3512 = vmatpush2.msra.mxu0 %v3511
        %v3513 = vand.u32 %v3320, 4294901760
        %3514 = vmatprep.subr.mxu0 %v3513
        %v3515 = vand.u32 %v3319, 4294901760
        %3516 = vmatpush2.msra.mxu0 %v3515
        %v3517 = vand.u32 %v3318, 4294901760
        %3518 = vmatprep.subr.mxu0 %v3517
        %v3519 = vand.u32 %v3317, 4294901760
        %3520 = vmatpush2.msra.mxu0 %v3519
        %v3521 = vand.u32 %v3316, 4294901760
        %3522 = vmatprep.subr.mxu0 %v3521
        %v3523 = vand.u32 %v3315, 4294901760
        %3524 = vmatpush2.msra.mxu0 %v3523
        %v3525 = vand.u32 %v3314, 4294901760
        %3526 = vmatprep.subr.mxu0 %v3525
        %v3527 = vand.u32 %v3313, 4294901760
        %3528 = vmatpush2.msra.mxu0 %v3527
        %v3529 = vand.u32 %v240, 4294901760
        %v3530 = vsub.f32 %v240, %v3529
        %v3531 = vand.u32 %v3530, 4294901760
        %v3532 = vsub.f32 %v3530, %v3531
        %v3533 = vand.u32 %v3532, 4294901760
        %3534 = vmatprep.mubr.f32.mxu0 %v3533
        %v3535 = vand.u32 %v239, 4294901760
        %v3536 = vsub.f32 %v239, %v3535
        %v3537 = vand.u32 %v3536, 4294901760
        %v3538 = vsub.f32 %v3536, %v3537
        %v3539 = vand.u32 %v3538, 4294901760
        %3540 = vmatmul.mubr.f32.gmra.mxu0 %v3539
        %v3541 = vpop.f32.mrf.mxu0
        %v3542 = vadd.f32 %v382, %v3541
        %v3543 = vpop.f32.mrf.mxu0
        %v3544 = vadd.f32 %v382, %v3543
        %v3545 = vand.u32 %v244, 4294901760
        %v3546 = vsub.f32 %v244, %v3545
        %v3547 = vand.u32 %v3546, 4294901760
        %v3548 = vsub.f32 %v3546, %v3547
        %v3549 = vand.u32 %v3548, 4294901760
        %3550 = vmatprep.mubr.f32.mxu0 %v3549
        %v3551 = vand.u32 %v243, 4294901760
        %v3552 = vsub.f32 %v243, %v3551
        %v3553 = vand.u32 %v3552, 4294901760
        %v3554 = vsub.f32 %v3552, %v3553
        %v3555 = vand.u32 %v3554, 4294901760
        %3556 = vmatmul.mubr.f32.gmra.mxu0 %v3555
        %v3557 = vpop.f32.mrf.mxu0
        %v3558 = vadd.f32 %v387, %v3557
        %v3559 = vpop.f32.mrf.mxu0
        %v3560 = vadd.f32 %v387, %v3559
        %v3561 = vand.u32 %v248, 4294901760
        %v3562 = vsub.f32 %v248, %v3561
        %v3563 = vand.u32 %v3562, 4294901760
        %v3564 = vsub.f32 %v3562, %v3563
        %v3565 = vand.u32 %v3564, 4294901760
        %3566 = vmatprep.mubr.f32.mxu0 %v3565
        %v3567 = vand.u32 %v247, 4294901760
        %v3568 = vsub.f32 %v247, %v3567
        %v3569 = vand.u32 %v3568, 4294901760
        %v3570 = vsub.f32 %v3568, %v3569
        %v3571 = vand.u32 %v3570, 4294901760
        %3572 = vmatmul.mubr.f32.gmra.mxu0 %v3571
        %v3573 = vpop.f32.mrf.mxu0
        %v3574 = vadd.f32 %v392, %v3573
        %v3575 = vpop.f32.mrf.mxu0
        %v3576 = vadd.f32 %v392, %v3575
        %v3577 = vand.u32 %v252, 4294901760
        %v3578 = vsub.f32 %v252, %v3577
        %v3579 = vand.u32 %v3578, 4294901760
        %v3580 = vsub.f32 %v3578, %v3579
        %v3581 = vand.u32 %v3580, 4294901760
        %3582 = vmatprep.mubr.f32.mxu0 %v3581
        %v3583 = vand.u32 %v251, 4294901760
        %v3584 = vsub.f32 %v251, %v3583
        %v3585 = vand.u32 %v3584, 4294901760
        %v3586 = vsub.f32 %v3584, %v3585
        %v3587 = vand.u32 %v3586, 4294901760
        %3588 = vmatmul.mubr.f32.gmra.mxu0 %v3587
        %v3589 = vpop.f32.mrf.mxu0
        %v3590 = vadd.f32 %v397, %v3589
        %v3591 = vpop.f32.mrf.mxu0
        %v3592 = vadd.f32 %v397, %v3591
        %3593 = vdwg.mxu0
        %v3594 = vand.u32 %v3312, 4294901760
        %v3595 = vsub.f32 %v3312, %v3594
        %v3596 = vand.u32 %v3595, 4294901760
        %v3597 = vsub.f32 %v3595, %v3596
        %v3598 = vand.u32 %v3597, 4294901760
        %3599 = vmatprep.subr.mxu0 %v3598
        %v3600 = vand.u32 %v3311, 4294901760
        %v3601 = vsub.f32 %v3311, %v3600
        %v3602 = vand.u32 %v3601, 4294901760
        %v3603 = vsub.f32 %v3601, %v3602
        %v3604 = vand.u32 %v3603, 4294901760
        %3605 = vmatpush1.msra.mxu0 %v3604
        %v3606 = vand.u32 %v3310, 4294901760
        %v3607 = vsub.f32 %v3310, %v3606
        %v3608 = vand.u32 %v3607, 4294901760
        %v3609 = vsub.f32 %v3607, %v3608
        %v3610 = vand.u32 %v3609, 4294901760
        %3611 = vmatprep.subr.mxu0 %v3610
        %v3612 = vand.u32 %v3309, 4294901760
        %v3613 = vsub.f32 %v3309, %v3612
        %v3614 = vand.u32 %v3613, 4294901760
        %v3615 = vsub.f32 %v3613, %v3614
        %v3616 = vand.u32 %v3615, 4294901760
        %3617 = vmatpush1.msra.mxu0 %v3616
        %v3618 = vand.u32 %v3308, 4294901760
        %v3619 = vsub.f32 %v3308, %v3618
        %v3620 = vand.u32 %v3619, 4294901760
        %v3621 = vsub.f32 %v3619, %v3620
        %v3622 = vand.u32 %v3621, 4294901760
        %3623 = vmatprep.subr.mxu0 %v3622
        %v3624 = vand.u32 %v3307, 4294901760
        %v3625 = vsub.f32 %v3307, %v3624
        %v3626 = vand.u32 %v3625, 4294901760
        %v3627 = vsub.f32 %v3625, %v3626
        %v3628 = vand.u32 %v3627, 4294901760
        %3629 = vmatpush1.msra.mxu0 %v3628
        %v3630 = vand.u32 %v3306, 4294901760
        %v3631 = vsub.f32 %v3306, %v3630
        %v3632 = vand.u32 %v3631, 4294901760
        %v3633 = vsub.f32 %v3631, %v3632
        %v3634 = vand.u32 %v3633, 4294901760
        %3635 = vmatprep.subr.mxu0 %v3634
        %v3636 = vand.u32 %v3305, 4294901760
        %v3637 = vsub.f32 %v3305, %v3636
        %v3638 = vand.u32 %v3637, 4294901760
        %v3639 = vsub.f32 %v3637, %v3638
        %v3640 = vand.u32 %v3639, 4294901760
        %3641 = vmatpush1.msra.mxu0 %v3640
        %v3642 = vand.u32 %v3304, 4294901760
        %v3643 = vsub.f32 %v3304, %v3642
        %v3644 = vand.u32 %v3643, 4294901760
        %v3645 = vsub.f32 %v3643, %v3644
        %v3646 = vand.u32 %v3645, 4294901760
        %3647 = vmatprep.subr.mxu0 %v3646
        %v3648 = vand.u32 %v3303, 4294901760
        %v3649 = vsub.f32 %v3303, %v3648
        %v3650 = vand.u32 %v3649, 4294901760
        %v3651 = vsub.f32 %v3649, %v3650
        %v3652 = vand.u32 %v3651, 4294901760
        %3653 = vmatpush1.msra.mxu0 %v3652
        %v3654 = vand.u32 %v3302, 4294901760
        %v3655 = vsub.f32 %v3302, %v3654
        %v3656 = vand.u32 %v3655, 4294901760
        %v3657 = vsub.f32 %v3655, %v3656
        %v3658 = vand.u32 %v3657, 4294901760
        %3659 = vmatprep.subr.mxu0 %v3658
        %v3660 = vand.u32 %v3301, 4294901760
        %v3661 = vsub.f32 %v3301, %v3660
        %v3662 = vand.u32 %v3661, 4294901760
        %v3663 = vsub.f32 %v3661, %v3662
        %v3664 = vand.u32 %v3663, 4294901760
        %3665 = vmatpush1.msra.mxu0 %v3664
        %v3666 = vand.u32 %v3300, 4294901760
        %v3667 = vsub.f32 %v3300, %v3666
        %v3668 = vand.u32 %v3667, 4294901760
        %v3669 = vsub.f32 %v3667, %v3668
        %v3670 = vand.u32 %v3669, 4294901760
        %3671 = vmatprep.subr.mxu0 %v3670
        %v3672 = vand.u32 %v3299, 4294901760
        %v3673 = vsub.f32 %v3299, %v3672
        %v3674 = vand.u32 %v3673, 4294901760
        %v3675 = vsub.f32 %v3673, %v3674
        %v3676 = vand.u32 %v3675, 4294901760
        %3677 = vmatpush1.msra.mxu0 %v3676
        %v3678 = vand.u32 %v3298, 4294901760
        %v3679 = vsub.f32 %v3298, %v3678
        %v3680 = vand.u32 %v3679, 4294901760
        %v3681 = vsub.f32 %v3679, %v3680
        %v3682 = vand.u32 %v3681, 4294901760
        %3683 = vmatprep.subr.mxu0 %v3682
        %v3684 = vand.u32 %v3297, 4294901760
        %v3685 = vsub.f32 %v3297, %v3684
        %v3686 = vand.u32 %v3685, 4294901760
        %v3687 = vsub.f32 %v3685, %v3686
        %v3688 = vand.u32 %v3687, 4294901760
        %3689 = vmatpush1.msra.mxu0 %v3688
        %v3690 = vand.u32 %v3296, 4294901760
        %v3691 = vsub.f32 %v3296, %v3690
        %v3692 = vand.u32 %v3691, 4294901760
        %v3693 = vsub.f32 %v3691, %v3692
        %v3694 = vand.u32 %v3693, 4294901760
        %3695 = vmatprep.subr.mxu0 %v3694
        %v3696 = vand.u32 %v3295, 4294901760
        %v3697 = vsub.f32 %v3295, %v3696
        %v3698 = vand.u32 %v3697, 4294901760
        %v3699 = vsub.f32 %v3697, %v3698
        %v3700 = vand.u32 %v3699, 4294901760
        %3701 = vmatpush1.msra.mxu0 %v3700
        %v3702 = vand.u32 %v3294, 4294901760
        %v3703 = vsub.f32 %v3294, %v3702
        %v3704 = vand.u32 %v3703, 4294901760
        %v3705 = vsub.f32 %v3703, %v3704
        %v3706 = vand.u32 %v3705, 4294901760
        %3707 = vmatprep.subr.mxu0 %v3706
        %v3708 = vand.u32 %v3293, 4294901760
        %v3709 = vsub.f32 %v3293, %v3708
        %v3710 = vand.u32 %v3709, 4294901760
        %v3711 = vsub.f32 %v3709, %v3710
        %v3712 = vand.u32 %v3711, 4294901760
        %3713 = vmatpush1.msra.mxu0 %v3712
        %v3714 = vand.u32 %v3292, 4294901760
        %v3715 = vsub.f32 %v3292, %v3714
        %v3716 = vand.u32 %v3715, 4294901760
        %v3717 = vsub.f32 %v3715, %v3716
        %v3718 = vand.u32 %v3717, 4294901760
        %3719 = vmatprep.subr.mxu0 %v3718
        %v3720 = vand.u32 %v3291, 4294901760
        %v3721 = vsub.f32 %v3291, %v3720
        %v3722 = vand.u32 %v3721, 4294901760
        %v3723 = vsub.f32 %v3721, %v3722
        %v3724 = vand.u32 %v3723, 4294901760
        %3725 = vmatpush1.msra.mxu0 %v3724
        %v3726 = vand.u32 %v3290, 4294901760
        %v3727 = vsub.f32 %v3290, %v3726
        %v3728 = vand.u32 %v3727, 4294901760
        %v3729 = vsub.f32 %v3727, %v3728
        %v3730 = vand.u32 %v3729, 4294901760
        %3731 = vmatprep.subr.mxu0 %v3730
        %v3732 = vand.u32 %v3289, 4294901760
        %v3733 = vsub.f32 %v3289, %v3732
        %v3734 = vand.u32 %v3733, 4294901760
        %v3735 = vsub.f32 %v3733, %v3734
        %v3736 = vand.u32 %v3735, 4294901760
        %3737 = vmatpush1.msra.mxu0 %v3736
        %v3738 = vand.u32 %v3288, 4294901760
        %v3739 = vsub.f32 %v3288, %v3738
        %v3740 = vand.u32 %v3739, 4294901760
        %v3741 = vsub.f32 %v3739, %v3740
        %v3742 = vand.u32 %v3741, 4294901760
        %3743 = vmatprep.subr.mxu0 %v3742
        %v3744 = vand.u32 %v3287, 4294901760
        %v3745 = vsub.f32 %v3287, %v3744
        %v3746 = vand.u32 %v3745, 4294901760
        %v3747 = vsub.f32 %v3745, %v3746
        %v3748 = vand.u32 %v3747, 4294901760
        %3749 = vmatpush1.msra.mxu0 %v3748
        %v3750 = vand.u32 %v3286, 4294901760
        %v3751 = vsub.f32 %v3286, %v3750
        %v3752 = vand.u32 %v3751, 4294901760
        %v3753 = vsub.f32 %v3751, %v3752
        %v3754 = vand.u32 %v3753, 4294901760
        %3755 = vmatprep.subr.mxu0 %v3754
        %v3756 = vand.u32 %v3285, 4294901760
        %v3757 = vsub.f32 %v3285, %v3756
        %v3758 = vand.u32 %v3757, 4294901760
        %v3759 = vsub.f32 %v3757, %v3758
        %v3760 = vand.u32 %v3759, 4294901760
        %3761 = vmatpush1.msra.mxu0 %v3760
        %v3762 = vand.u32 %v3284, 4294901760
        %v3763 = vsub.f32 %v3284, %v3762
        %v3764 = vand.u32 %v3763, 4294901760
        %v3765 = vsub.f32 %v3763, %v3764
        %v3766 = vand.u32 %v3765, 4294901760
        %3767 = vmatprep.subr.mxu0 %v3766
        %v3768 = vand.u32 %v3283, 4294901760
        %v3769 = vsub.f32 %v3283, %v3768
        %v3770 = vand.u32 %v3769, 4294901760
        %v3771 = vsub.f32 %v3769, %v3770
        %v3772 = vand.u32 %v3771, 4294901760
        %3773 = vmatpush1.msra.mxu0 %v3772
        %v3774 = vand.u32 %v3282, 4294901760
        %v3775 = vsub.f32 %v3282, %v3774
        %v3776 = vand.u32 %v3775, 4294901760
        %v3777 = vsub.f32 %v3775, %v3776
        %v3778 = vand.u32 %v3777, 4294901760
        %3779 = vmatprep.subr.mxu0 %v3778
        %v3780 = vand.u32 %v3281, 4294901760
        %v3781 = vsub.f32 %v3281, %v3780
        %v3782 = vand.u32 %v3781, 4294901760
        %v3783 = vsub.f32 %v3781, %v3782
        %v3784 = vand.u32 %v3783, 4294901760
        %3785 = vmatpush1.msra.mxu0 %v3784
        %v3786 = vand.u32 %v3344, 4294901760
        %v3787 = vsub.f32 %v3344, %v3786
        %v3788 = vand.u32 %v3787, 4294901760
        %v3789 = vsub.f32 %v3787, %v3788
        %v3790 = vand.u32 %v3789, 4294901760
        %3791 = vmatprep.subr.mxu0 %v3790
        %v3792 = vand.u32 %v3343, 4294901760
        %v3793 = vsub.f32 %v3343, %v3792
        %v3794 = vand.u32 %v3793, 4294901760
        %v3795 = vsub.f32 %v3793, %v3794
        %v3796 = vand.u32 %v3795, 4294901760
        %3797 = vmatpush2.msra.mxu0 %v3796
        %v3798 = vand.u32 %v3342, 4294901760
        %v3799 = vsub.f32 %v3342, %v3798
        %v3800 = vand.u32 %v3799, 4294901760
        %v3801 = vsub.f32 %v3799, %v3800
        %v3802 = vand.u32 %v3801, 4294901760
        %3803 = vmatprep.subr.mxu0 %v3802
        %v3804 = vand.u32 %v3341, 4294901760
        %v3805 = vsub.f32 %v3341, %v3804
        %v3806 = vand.u32 %v3805, 4294901760
        %v3807 = vsub.f32 %v3805, %v3806
        %v3808 = vand.u32 %v3807, 4294901760
        %3809 = vmatpush2.msra.mxu0 %v3808
        %v3810 = vand.u32 %v3340, 4294901760
        %v3811 = vsub.f32 %v3340, %v3810
        %v3812 = vand.u32 %v3811, 4294901760
        %v3813 = vsub.f32 %v3811, %v3812
        %v3814 = vand.u32 %v3813, 4294901760
        %3815 = vmatprep.subr.mxu0 %v3814
        %v3816 = vand.u32 %v3339, 4294901760
        %v3817 = vsub.f32 %v3339, %v3816
        %v3818 = vand.u32 %v3817, 4294901760
        %v3819 = vsub.f32 %v3817, %v3818
        %v3820 = vand.u32 %v3819, 4294901760
        %3821 = vmatpush2.msra.mxu0 %v3820
        %v3822 = vand.u32 %v3338, 4294901760
        %v3823 = vsub.f32 %v3338, %v3822
        %v3824 = vand.u32 %v3823, 4294901760
        %v3825 = vsub.f32 %v3823, %v3824
        %v3826 = vand.u32 %v3825, 4294901760
        %3827 = vmatprep.subr.mxu0 %v3826
        %v3828 = vand.u32 %v3337, 4294901760
        %v3829 = vsub.f32 %v3337, %v3828
        %v3830 = vand.u32 %v3829, 4294901760
        %v3831 = vsub.f32 %v3829, %v3830
        %v3832 = vand.u32 %v3831, 4294901760
        %3833 = vmatpush2.msra.mxu0 %v3832
        %v3834 = vand.u32 %v3336, 4294901760
        %v3835 = vsub.f32 %v3336, %v3834
        %v3836 = vand.u32 %v3835, 4294901760
        %v3837 = vsub.f32 %v3835, %v3836
        %v3838 = vand.u32 %v3837, 4294901760
        %3839 = vmatprep.subr.mxu0 %v3838
        %v3840 = vand.u32 %v3335, 4294901760
        %v3841 = vsub.f32 %v3335, %v3840
        %v3842 = vand.u32 %v3841, 4294901760
        %v3843 = vsub.f32 %v3841, %v3842
        %v3844 = vand.u32 %v3843, 4294901760
        %3845 = vmatpush2.msra.mxu0 %v3844
        %v3846 = vand.u32 %v3334, 4294901760
        %v3847 = vsub.f32 %v3334, %v3846
        %v3848 = vand.u32 %v3847, 4294901760
        %v3849 = vsub.f32 %v3847, %v3848
        %v3850 = vand.u32 %v3849, 4294901760
        %3851 = vmatprep.subr.mxu0 %v3850
        %v3852 = vand.u32 %v3333, 4294901760
        %v3853 = vsub.f32 %v3333, %v3852
        %v3854 = vand.u32 %v3853, 4294901760
        %v3855 = vsub.f32 %v3853, %v3854
        %v3856 = vand.u32 %v3855, 4294901760
        %3857 = vmatpush2.msra.mxu0 %v3856
        %v3858 = vand.u32 %v3332, 4294901760
        %v3859 = vsub.f32 %v3332, %v3858
        %v3860 = vand.u32 %v3859, 4294901760
        %v3861 = vsub.f32 %v3859, %v3860
        %v3862 = vand.u32 %v3861, 4294901760
        %3863 = vmatprep.subr.mxu0 %v3862
        %v3864 = vand.u32 %v3331, 4294901760
        %v3865 = vsub.f32 %v3331, %v3864
        %v3866 = vand.u32 %v3865, 4294901760
        %v3867 = vsub.f32 %v3865, %v3866
        %v3868 = vand.u32 %v3867, 4294901760
        %3869 = vmatpush2.msra.mxu0 %v3868
        %v3870 = vand.u32 %v3330, 4294901760
        %v3871 = vsub.f32 %v3330, %v3870
        %v3872 = vand.u32 %v3871, 4294901760
        %v3873 = vsub.f32 %v3871, %v3872
        %v3874 = vand.u32 %v3873, 4294901760
        %3875 = vmatprep.subr.mxu0 %v3874
        %v3876 = vand.u32 %v3329, 4294901760
        %v3877 = vsub.f32 %v3329, %v3876
        %v3878 = vand.u32 %v3877, 4294901760
        %v3879 = vsub.f32 %v3877, %v3878
        %v3880 = vand.u32 %v3879, 4294901760
        %3881 = vmatpush2.msra.mxu0 %v3880
        %v3882 = vand.u32 %v3328, 4294901760
        %v3883 = vsub.f32 %v3328, %v3882
        %v3884 = vand.u32 %v3883, 4294901760
        %v3885 = vsub.f32 %v3883, %v3884
        %v3886 = vand.u32 %v3885, 4294901760
        %3887 = vmatprep.subr.mxu0 %v3886
        %v3888 = vand.u32 %v3327, 4294901760
        %v3889 = vsub.f32 %v3327, %v3888
        %v3890 = vand.u32 %v3889, 4294901760
        %v3891 = vsub.f32 %v3889, %v3890
        %v3892 = vand.u32 %v3891, 4294901760
        %3893 = vmatpush2.msra.mxu0 %v3892
        %v3894 = vand.u32 %v3326, 4294901760
        %v3895 = vsub.f32 %v3326, %v3894
        %v3896 = vand.u32 %v3895, 4294901760
        %v3897 = vsub.f32 %v3895, %v3896
        %v3898 = vand.u32 %v3897, 4294901760
        %3899 = vmatprep.subr.mxu0 %v3898
        %v3900 = vand.u32 %v3325, 4294901760
        %v3901 = vsub.f32 %v3325, %v3900
        %v3902 = vand.u32 %v3901, 4294901760
        %v3903 = vsub.f32 %v3901, %v3902
        %v3904 = vand.u32 %v3903, 4294901760
        %3905 = vmatpush2.msra.mxu0 %v3904
        %v3906 = vand.u32 %v3324, 4294901760
        %v3907 = vsub.f32 %v3324, %v3906
        %v3908 = vand.u32 %v3907, 4294901760
        %v3909 = vsub.f32 %v3907, %v3908
        %v3910 = vand.u32 %v3909, 4294901760
        %3911 = vmatprep.subr.mxu0 %v3910
        %v3912 = vand.u32 %v3323, 4294901760
        %v3913 = vsub.f32 %v3323, %v3912
        %v3914 = vand.u32 %v3913, 4294901760
        %v3915 = vsub.f32 %v3913, %v3914
        %v3916 = vand.u32 %v3915, 4294901760
        %3917 = vmatpush2.msra.mxu0 %v3916
        %v3918 = vand.u32 %v3322, 4294901760
        %v3919 = vsub.f32 %v3322, %v3918
        %v3920 = vand.u32 %v3919, 4294901760
        %v3921 = vsub.f32 %v3919, %v3920
        %v3922 = vand.u32 %v3921, 4294901760
        %3923 = vmatprep.subr.mxu0 %v3922
        %v3924 = vand.u32 %v3321, 4294901760
        %v3925 = vsub.f32 %v3321, %v3924
        %v3926 = vand.u32 %v3925, 4294901760
        %v3927 = vsub.f32 %v3925, %v3926
        %v3928 = vand.u32 %v3927, 4294901760
        %3929 = vmatpush2.msra.mxu0 %v3928
        %v3930 = vand.u32 %v3320, 4294901760
        %v3931 = vsub.f32 %v3320, %v3930
        %v3932 = vand.u32 %v3931, 4294901760
        %v3933 = vsub.f32 %v3931, %v3932
        %v3934 = vand.u32 %v3933, 4294901760
        %3935 = vmatprep.subr.mxu0 %v3934
        %v3936 = vand.u32 %v3319, 4294901760
        %v3937 = vsub.f32 %v3319, %v3936
        %v3938 = vand.u32 %v3937, 4294901760
        %v3939 = vsub.f32 %v3937, %v3938
        %v3940 = vand.u32 %v3939, 4294901760
        %3941 = vmatpush2.msra.mxu0 %v3940
        %v3942 = vand.u32 %v3318, 4294901760
        %v3943 = vsub.f32 %v3318, %v3942
        %v3944 = vand.u32 %v3943, 4294901760
        %v3945 = vsub.f32 %v3943, %v3944
        %v3946 = vand.u32 %v3945, 4294901760
        %3947 = vmatprep.subr.mxu0 %v3946
        %v3948 = vand.u32 %v3317, 4294901760
        %v3949 = vsub.f32 %v3317, %v3948
        %v3950 = vand.u32 %v3949, 4294901760
        %v3951 = vsub.f32 %v3949, %v3950
        %v3952 = vand.u32 %v3951, 4294901760
        %3953 = vmatpush2.msra.mxu0 %v3952
        %v3954 = vand.u32 %v3316, 4294901760
        %v3955 = vsub.f32 %v3316, %v3954
        %v3956 = vand.u32 %v3955, 4294901760
        %v3957 = vsub.f32 %v3955, %v3956
        %v3958 = vand.u32 %v3957, 4294901760
        %3959 = vmatprep.subr.mxu0 %v3958
        %v3960 = vand.u32 %v3315, 4294901760
        %v3961 = vsub.f32 %v3315, %v3960
        %v3962 = vand.u32 %v3961, 4294901760
        %v3963 = vsub.f32 %v3961, %v3962
        %v3964 = vand.u32 %v3963, 4294901760
        %3965 = vmatpush2.msra.mxu0 %v3964
        %v3966 = vand.u32 %v3314, 4294901760
        %v3967 = vsub.f32 %v3314, %v3966
        %v3968 = vand.u32 %v3967, 4294901760
        %v3969 = vsub.f32 %v3967, %v3968
        %v3970 = vand.u32 %v3969, 4294901760
        %3971 = vmatprep.subr.mxu0 %v3970
        %v3972 = vand.u32 %v3313, 4294901760
        %v3973 = vsub.f32 %v3313, %v3972
        %v3974 = vand.u32 %v3973, 4294901760
        %v3975 = vsub.f32 %v3973, %v3974
        %v3976 = vand.u32 %v3975, 4294901760
        %3977 = vmatpush2.msra.mxu0 %v3976
        %v3978 = vand.u32 %v240, 4294901760
        %3979 = vmatprep.mubr.f32.mxu0 %v3978
        %v3980 = vand.u32 %v239, 4294901760
        %3981 = vmatmul.mubr.f32.gmra.mxu0 %v3980
        %v3982 = vpop.f32.mrf.mxu0
        %v3983 = vadd.f32 %v3542, %v3982
        %v3984 = vpop.f32.mrf.mxu0
        %v3985 = vadd.f32 %v3544, %v3984
        %v3986 = vand.u32 %v244, 4294901760
        %3987 = vmatprep.mubr.f32.mxu0 %v3986
        %v3988 = vand.u32 %v243, 4294901760
        %3989 = vmatmul.mubr.f32.gmra.mxu0 %v3988
        %v3990 = vpop.f32.mrf.mxu0
        %v3991 = vadd.f32 %v3558, %v3990
        %v3992 = vpop.f32.mrf.mxu0
        %v3993 = vadd.f32 %v3560, %v3992
        %v3994 = vand.u32 %v248, 4294901760
        %3995 = vmatprep.mubr.f32.mxu0 %v3994
        %v3996 = vand.u32 %v247, 4294901760
        %3997 = vmatmul.mubr.f32.gmra.mxu0 %v3996
        %v3998 = vpop.f32.mrf.mxu0
        %v3999 = vadd.f32 %v3574, %v3998
        %v4000 = vpop.f32.mrf.mxu0
        %v4001 = vadd.f32 %v3576, %v4000
        %v4002 = vand.u32 %v252, 4294901760
        %4003 = vmatprep.mubr.f32.mxu0 %v4002
        %v4004 = vand.u32 %v251, 4294901760
        %4005 = vmatmul.mubr.f32.gmra.mxu0 %v4004
        %v4006 = vpop.f32.mrf.mxu0
        %v4007 = vadd.f32 %v3590, %v4006
        %v4008 = vpop.f32.mrf.mxu0
        %v4009 = vadd.f32 %v3592, %v4008
        %4010 = vdwg.mxu0
        %v4011 = vand.u32 %v3312, 4294901760
        %v4012 = vsub.f32 %v3312, %v4011
        %4013 = vmatprep.subr.mxu0 %v4012
        %v4014 = vand.u32 %v3311, 4294901760
        %v4015 = vsub.f32 %v3311, %v4014
        %4016 = vmatpush1.msra.mxu0 %v4015
        %v4017 = vand.u32 %v3310, 4294901760
        %v4018 = vsub.f32 %v3310, %v4017
        %4019 = vmatprep.subr.mxu0 %v4018
        %v4020 = vand.u32 %v3309, 4294901760
        %v4021 = vsub.f32 %v3309, %v4020
        %4022 = vmatpush1.msra.mxu0 %v4021
        %v4023 = vand.u32 %v3308, 4294901760
        %v4024 = vsub.f32 %v3308, %v4023
        %4025 = vmatprep.subr.mxu0 %v4024
        %v4026 = vand.u32 %v3307, 4294901760
        %v4027 = vsub.f32 %v3307, %v4026
        %4028 = vmatpush1.msra.mxu0 %v4027
        %v4029 = vand.u32 %v3306, 4294901760
        %v4030 = vsub.f32 %v3306, %v4029
        %4031 = vmatprep.subr.mxu0 %v4030
        %v4032 = vand.u32 %v3305, 4294901760
        %v4033 = vsub.f32 %v3305, %v4032
        %4034 = vmatpush1.msra.mxu0 %v4033
        %v4035 = vand.u32 %v3304, 4294901760
        %v4036 = vsub.f32 %v3304, %v4035
        %4037 = vmatprep.subr.mxu0 %v4036
        %v4038 = vand.u32 %v3303, 4294901760
        %v4039 = vsub.f32 %v3303, %v4038
        %4040 = vmatpush1.msra.mxu0 %v4039
        %v4041 = vand.u32 %v3302, 4294901760
        %v4042 = vsub.f32 %v3302, %v4041
        %4043 = vmatprep.subr.mxu0 %v4042
        %v4044 = vand.u32 %v3301, 4294901760
        %v4045 = vsub.f32 %v3301, %v4044
        %4046 = vmatpush1.msra.mxu0 %v4045
        %v4047 = vand.u32 %v3300, 4294901760
        %v4048 = vsub.f32 %v3300, %v4047
        %4049 = vmatprep.subr.mxu0 %v4048
        %v4050 = vand.u32 %v3299, 4294901760
        %v4051 = vsub.f32 %v3299, %v4050
        %4052 = vmatpush1.msra.mxu0 %v4051
        %v4053 = vand.u32 %v3298, 4294901760
        %v4054 = vsub.f32 %v3298, %v4053
        %4055 = vmatprep.subr.mxu0 %v4054
        %v4056 = vand.u32 %v3297, 4294901760
        %v4057 = vsub.f32 %v3297, %v4056
        %4058 = vmatpush1.msra.mxu0 %v4057
        %v4059 = vand.u32 %v3296, 4294901760
        %v4060 = vsub.f32 %v3296, %v4059
        %4061 = vmatprep.subr.mxu0 %v4060
        %v4062 = vand.u32 %v3295, 4294901760
        %v4063 = vsub.f32 %v3295, %v4062
        %4064 = vmatpush1.msra.mxu0 %v4063
        %v4065 = vand.u32 %v3294, 4294901760
        %v4066 = vsub.f32 %v3294, %v4065
        %4067 = vmatprep.subr.mxu0 %v4066
        %v4068 = vand.u32 %v3293, 4294901760
        %v4069 = vsub.f32 %v3293, %v4068
        %4070 = vmatpush1.msra.mxu0 %v4069
        %v4071 = vand.u32 %v3292, 4294901760
        %v4072 = vsub.f32 %v3292, %v4071
        %4073 = vmatprep.subr.mxu0 %v4072
        %v4074 = vand.u32 %v3291, 4294901760
        %v4075 = vsub.f32 %v3291, %v4074
        %4076 = vmatpush1.msra.mxu0 %v4075
        %v4077 = vand.u32 %v3290, 4294901760
        %v4078 = vsub.f32 %v3290, %v4077
        %4079 = vmatprep.subr.mxu0 %v4078
        %v4080 = vand.u32 %v3289, 4294901760
        %v4081 = vsub.f32 %v3289, %v4080
        %4082 = vmatpush1.msra.mxu0 %v4081
        %v4083 = vand.u32 %v3288, 4294901760
        %v4084 = vsub.f32 %v3288, %v4083
        %4085 = vmatprep.subr.mxu0 %v4084
        %v4086 = vand.u32 %v3287, 4294901760
        %v4087 = vsub.f32 %v3287, %v4086
        %4088 = vmatpush1.msra.mxu0 %v4087
        %v4089 = vand.u32 %v3286, 4294901760
        %v4090 = vsub.f32 %v3286, %v4089
        %4091 = vmatprep.subr.mxu0 %v4090
        %v4092 = vand.u32 %v3285, 4294901760
        %v4093 = vsub.f32 %v3285, %v4092
        %4094 = vmatpush1.msra.mxu0 %v4093
        %v4095 = vand.u32 %v3284, 4294901760
        %v4096 = vsub.f32 %v3284, %v4095
        %4097 = vmatprep.subr.mxu0 %v4096
        %v4098 = vand.u32 %v3283, 4294901760
        %v4099 = vsub.f32 %v3283, %v4098
        %4100 = vmatpush1.msra.mxu0 %v4099
        %v4101 = vand.u32 %v3282, 4294901760
        %v4102 = vsub.f32 %v3282, %v4101
        %4103 = vmatprep.subr.mxu0 %v4102
        %v4104 = vand.u32 %v3281, 4294901760
        %v4105 = vsub.f32 %v3281, %v4104
        %4106 = vmatpush1.msra.mxu0 %v4105
        %v4107 = vand.u32 %v3344, 4294901760
        %v4108 = vsub.f32 %v3344, %v4107
        %4109 = vmatprep.subr.mxu0 %v4108
        %v4110 = vand.u32 %v3343, 4294901760
        %v4111 = vsub.f32 %v3343, %v4110
        %4112 = vmatpush2.msra.mxu0 %v4111
        %v4113 = vand.u32 %v3342, 4294901760
        %v4114 = vsub.f32 %v3342, %v4113
        %4115 = vmatprep.subr.mxu0 %v4114
        %v4116 = vand.u32 %v3341, 4294901760
        %v4117 = vsub.f32 %v3341, %v4116
        %4118 = vmatpush2.msra.mxu0 %v4117
        %v4119 = vand.u32 %v3340, 4294901760
        %v4120 = vsub.f32 %v3340, %v4119
        %4121 = vmatprep.subr.mxu0 %v4120
        %v4122 = vand.u32 %v3339, 4294901760
        %v4123 = vsub.f32 %v3339, %v4122
        %4124 = vmatpush2.msra.mxu0 %v4123
        %v4125 = vand.u32 %v3338, 4294901760
        %v4126 = vsub.f32 %v3338, %v4125
        %4127 = vmatprep.subr.mxu0 %v4126
        %v4128 = vand.u32 %v3337, 4294901760
        %v4129 = vsub.f32 %v3337, %v4128
        %4130 = vmatpush2.msra.mxu0 %v4129
        %v4131 = vand.u32 %v3336, 4294901760
        %v4132 = vsub.f32 %v3336, %v4131
        %4133 = vmatprep.subr.mxu0 %v4132
        %v4134 = vand.u32 %v3335, 4294901760
        %v4135 = vsub.f32 %v3335, %v4134
        %4136 = vmatpush2.msra.mxu0 %v4135
        %v4137 = vand.u32 %v3334, 4294901760
        %v4138 = vsub.f32 %v3334, %v4137
        %4139 = vmatprep.subr.mxu0 %v4138
        %v4140 = vand.u32 %v3333, 4294901760
        %v4141 = vsub.f32 %v3333, %v4140
        %4142 = vmatpush2.msra.mxu0 %v4141
        %v4143 = vand.u32 %v3332, 4294901760
        %v4144 = vsub.f32 %v3332, %v4143
        %4145 = vmatprep.subr.mxu0 %v4144
        %v4146 = vand.u32 %v3331, 4294901760
        %v4147 = vsub.f32 %v3331, %v4146
        %4148 = vmatpush2.msra.mxu0 %v4147
        %v4149 = vand.u32 %v3330, 4294901760
        %v4150 = vsub.f32 %v3330, %v4149
        %4151 = vmatprep.subr.mxu0 %v4150
        %v4152 = vand.u32 %v3329, 4294901760
        %v4153 = vsub.f32 %v3329, %v4152
        %4154 = vmatpush2.msra.mxu0 %v4153
        %v4155 = vand.u32 %v3328, 4294901760
        %v4156 = vsub.f32 %v3328, %v4155
        %4157 = vmatprep.subr.mxu0 %v4156
        %v4158 = vand.u32 %v3327, 4294901760
        %v4159 = vsub.f32 %v3327, %v4158
        %4160 = vmatpush2.msra.mxu0 %v4159
        %v4161 = vand.u32 %v3326, 4294901760
        %v4162 = vsub.f32 %v3326, %v4161
        %4163 = vmatprep.subr.mxu0 %v4162
        %v4164 = vand.u32 %v3325, 4294901760
        %v4165 = vsub.f32 %v3325, %v4164
        %4166 = vmatpush2.msra.mxu0 %v4165
        %v4167 = vand.u32 %v3324, 4294901760
        %v4168 = vsub.f32 %v3324, %v4167
        %4169 = vmatprep.subr.mxu0 %v4168
        %v4170 = vand.u32 %v3323, 4294901760
        %v4171 = vsub.f32 %v3323, %v4170
        %4172 = vmatpush2.msra.mxu0 %v4171
        %v4173 = vand.u32 %v3322, 4294901760
        %v4174 = vsub.f32 %v3322, %v4173
        %4175 = vmatprep.subr.mxu0 %v4174
        %v4176 = vand.u32 %v3321, 4294901760
        %v4177 = vsub.f32 %v3321, %v4176
        %4178 = vmatpush2.msra.mxu0 %v4177
        %v4179 = vand.u32 %v3320, 4294901760
        %v4180 = vsub.f32 %v3320, %v4179
        %4181 = vmatprep.subr.mxu0 %v4180
        %v4182 = vand.u32 %v3319, 4294901760
        %v4183 = vsub.f32 %v3319, %v4182
        %4184 = vmatpush2.msra.mxu0 %v4183
        %v4185 = vand.u32 %v3318, 4294901760
        %v4186 = vsub.f32 %v3318, %v4185
        %4187 = vmatprep.subr.mxu0 %v4186
        %v4188 = vand.u32 %v3317, 4294901760
        %v4189 = vsub.f32 %v3317, %v4188
        %4190 = vmatpush2.msra.mxu0 %v4189
        %v4191 = vand.u32 %v3316, 4294901760
        %v4192 = vsub.f32 %v3316, %v4191
        %4193 = vmatprep.subr.mxu0 %v4192
        %v4194 = vand.u32 %v3315, 4294901760
        %v4195 = vsub.f32 %v3315, %v4194
        %4196 = vmatpush2.msra.mxu0 %v4195
        %v4197 = vand.u32 %v3314, 4294901760
        %v4198 = vsub.f32 %v3314, %v4197
        %4199 = vmatprep.subr.mxu0 %v4198
        %v4200 = vand.u32 %v3313, 4294901760
        %v4201 = vsub.f32 %v3313, %v4200
        %4202 = vmatpush2.msra.mxu0 %v4201
        %v4203 = vand.u32 %v240, 4294901760
        %v4204 = vsub.f32 %v240, %v4203
        %4205 = vmatprep.mubr.f32.mxu0 %v4204
        %v4206 = vand.u32 %v239, 4294901760
        %v4207 = vsub.f32 %v239, %v4206
        %4208 = vmatmul.mubr.f32.gmra.mxu0 %v4207
        %v4209 = vpop.f32.mrf.mxu0
        %v4210 = vadd.f32 %v3983, %v4209
        %v4211 = vpop.f32.mrf.mxu0
        %v4212 = vadd.f32 %v3985, %v4211
        %v4213 = vand.u32 %v244, 4294901760
        %v4214 = vsub.f32 %v244, %v4213
        %4215 = vmatprep.mubr.f32.mxu0 %v4214
        %v4216 = vand.u32 %v243, 4294901760
        %v4217 = vsub.f32 %v243, %v4216
        %4218 = vmatmul.mubr.f32.gmra.mxu0 %v4217
        %v4219 = vpop.f32.mrf.mxu0
        %v4220 = vadd.f32 %v3991, %v4219
        %v4221 = vpop.f32.mrf.mxu0
        %v4222 = vadd.f32 %v3993, %v4221
        %v4223 = vand.u32 %v248, 4294901760
        %v4224 = vsub.f32 %v248, %v4223
        %4225 = vmatprep.mubr.f32.mxu0 %v4224
        %v4226 = vand.u32 %v247, 4294901760
        %v4227 = vsub.f32 %v247, %v4226
        %4228 = vmatmul.mubr.f32.gmra.mxu0 %v4227
        %v4229 = vpop.f32.mrf.mxu0
        %v4230 = vadd.f32 %v3999, %v4229
        %v4231 = vpop.f32.mrf.mxu0
        %v4232 = vadd.f32 %v4001, %v4231
        %v4233 = vand.u32 %v252, 4294901760
        %v4234 = vsub.f32 %v252, %v4233
        %4235 = vmatprep.mubr.f32.mxu0 %v4234
        %v4236 = vand.u32 %v251, 4294901760
        %v4237 = vsub.f32 %v251, %v4236
        %4238 = vmatmul.mubr.f32.gmra.mxu0 %v4237
        %v4239 = vpop.f32.mrf.mxu0
        %v4240 = vadd.f32 %v4007, %v4239
        %v4241 = vpop.f32.mrf.mxu0
        %v4242 = vadd.f32 %v4009, %v4241
        %4243 = vdwg.mxu0
        %v4244 = vand.u32 %v3312, 4294901760
        %4245 = vmatprep.subr.mxu0 %v4244
        %v4246 = vand.u32 %v3311, 4294901760
        %4247 = vmatpush1.msra.mxu0 %v4246
        %v4248 = vand.u32 %v3310, 4294901760
        %4249 = vmatprep.subr.mxu0 %v4248
        %v4250 = vand.u32 %v3309, 4294901760
        %4251 = vmatpush1.msra.mxu0 %v4250
        %v4252 = vand.u32 %v3308, 4294901760
        %4253 = vmatprep.subr.mxu0 %v4252
        %v4254 = vand.u32 %v3307, 4294901760
        %4255 = vmatpush1.msra.mxu0 %v4254
        %v4256 = vand.u32 %v3306, 4294901760
        %4257 = vmatprep.subr.mxu0 %v4256
        %v4258 = vand.u32 %v3305, 4294901760
        %4259 = vmatpush1.msra.mxu0 %v4258
        %v4260 = vand.u32 %v3304, 4294901760
        %4261 = vmatprep.subr.mxu0 %v4260
        %v4262 = vand.u32 %v3303, 4294901760
        %4263 = vmatpush1.msra.mxu0 %v4262
        %v4264 = vand.u32 %v3302, 4294901760
        %4265 = vmatprep.subr.mxu0 %v4264
        %v4266 = vand.u32 %v3301, 4294901760
        %4267 = vmatpush1.msra.mxu0 %v4266
        %v4268 = vand.u32 %v3300, 4294901760
        %4269 = vmatprep.subr.mxu0 %v4268
        %v4270 = vand.u32 %v3299, 4294901760
        %4271 = vmatpush1.msra.mxu0 %v4270
        %v4272 = vand.u32 %v3298, 4294901760
        %4273 = vmatprep.subr.mxu0 %v4272
        %v4274 = vand.u32 %v3297, 4294901760
        %4275 = vmatpush1.msra.mxu0 %v4274
        %v4276 = vand.u32 %v3296, 4294901760
        %4277 = vmatprep.subr.mxu0 %v4276
        %v4278 = vand.u32 %v3295, 4294901760
        %4279 = vmatpush1.msra.mxu0 %v4278
        %v4280 = vand.u32 %v3294, 4294901760
        %4281 = vmatprep.subr.mxu0 %v4280
        %v4282 = vand.u32 %v3293, 4294901760
        %4283 = vmatpush1.msra.mxu0 %v4282
        %v4284 = vand.u32 %v3292, 4294901760
        %4285 = vmatprep.subr.mxu0 %v4284
        %v4286 = vand.u32 %v3291, 4294901760
        %4287 = vmatpush1.msra.mxu0 %v4286
        %v4288 = vand.u32 %v3290, 4294901760
        %4289 = vmatprep.subr.mxu0 %v4288
        %v4290 = vand.u32 %v3289, 4294901760
        %4291 = vmatpush1.msra.mxu0 %v4290
        %v4292 = vand.u32 %v3288, 4294901760
        %4293 = vmatprep.subr.mxu0 %v4292
        %v4294 = vand.u32 %v3287, 4294901760
        %4295 = vmatpush1.msra.mxu0 %v4294
        %v4296 = vand.u32 %v3286, 4294901760
        %4297 = vmatprep.subr.mxu0 %v4296
        %v4298 = vand.u32 %v3285, 4294901760
        %4299 = vmatpush1.msra.mxu0 %v4298
        %v4300 = vand.u32 %v3284, 4294901760
        %4301 = vmatprep.subr.mxu0 %v4300
        %v4302 = vand.u32 %v3283, 4294901760
        %4303 = vmatpush1.msra.mxu0 %v4302
        %v4304 = vand.u32 %v3282, 4294901760
        %4305 = vmatprep.subr.mxu0 %v4304
        %v4306 = vand.u32 %v3281, 4294901760
        %4307 = vmatpush1.msra.mxu0 %v4306
        %v4308 = vand.u32 %v3344, 4294901760
        %4309 = vmatprep.subr.mxu0 %v4308
        %v4310 = vand.u32 %v3343, 4294901760
        %4311 = vmatpush2.msra.mxu0 %v4310
        %v4312 = vand.u32 %v3342, 4294901760
        %4313 = vmatprep.subr.mxu0 %v4312
        %v4314 = vand.u32 %v3341, 4294901760
        %4315 = vmatpush2.msra.mxu0 %v4314
        %v4316 = vand.u32 %v3340, 4294901760
        %4317 = vmatprep.subr.mxu0 %v4316
        %v4318 = vand.u32 %v3339, 4294901760
        %4319 = vmatpush2.msra.mxu0 %v4318
        %v4320 = vand.u32 %v3338, 4294901760
        %4321 = vmatprep.subr.mxu0 %v4320
        %v4322 = vand.u32 %v3337, 4294901760
        %4323 = vmatpush2.msra.mxu0 %v4322
        %v4324 = vand.u32 %v3336, 4294901760
        %4325 = vmatprep.subr.mxu0 %v4324
        %v4326 = vand.u32 %v3335, 4294901760
        %4327 = vmatpush2.msra.mxu0 %v4326
        %v4328 = vand.u32 %v3334, 4294901760
        %4329 = vmatprep.subr.mxu0 %v4328
        %v4330 = vand.u32 %v3333, 4294901760
        %4331 = vmatpush2.msra.mxu0 %v4330
        %v4332 = vand.u32 %v3332, 4294901760
        %4333 = vmatprep.subr.mxu0 %v4332
        %v4334 = vand.u32 %v3331, 4294901760
        %4335 = vmatpush2.msra.mxu0 %v4334
        %v4336 = vand.u32 %v3330, 4294901760
        %4337 = vmatprep.subr.mxu0 %v4336
        %v4338 = vand.u32 %v3329, 4294901760
        %4339 = vmatpush2.msra.mxu0 %v4338
        %v4340 = vand.u32 %v3328, 4294901760
        %4341 = vmatprep.subr.mxu0 %v4340
        %v4342 = vand.u32 %v3327, 4294901760
        %4343 = vmatpush2.msra.mxu0 %v4342
        %v4344 = vand.u32 %v3326, 4294901760
        %4345 = vmatprep.subr.mxu0 %v4344
        %v4346 = vand.u32 %v3325, 4294901760
        %4347 = vmatpush2.msra.mxu0 %v4346
        %v4348 = vand.u32 %v3324, 4294901760
        %4349 = vmatprep.subr.mxu0 %v4348
        %v4350 = vand.u32 %v3323, 4294901760
        %4351 = vmatpush2.msra.mxu0 %v4350
        %v4352 = vand.u32 %v3322, 4294901760
        %4353 = vmatprep.subr.mxu0 %v4352
        %v4354 = vand.u32 %v3321, 4294901760
        %4355 = vmatpush2.msra.mxu0 %v4354
        %v4356 = vand.u32 %v3320, 4294901760
        %4357 = vmatprep.subr.mxu0 %v4356
        %v4358 = vand.u32 %v3319, 4294901760
        %4359 = vmatpush2.msra.mxu0 %v4358
        %v4360 = vand.u32 %v3318, 4294901760
        %4361 = vmatprep.subr.mxu0 %v4360
        %v4362 = vand.u32 %v3317, 4294901760
        %4363 = vmatpush2.msra.mxu0 %v4362
        %v4364 = vand.u32 %v3316, 4294901760
        %4365 = vmatprep.subr.mxu0 %v4364
        %v4366 = vand.u32 %v3315, 4294901760
        %4367 = vmatpush2.msra.mxu0 %v4366
        %v4368 = vand.u32 %v3314, 4294901760
        %4369 = vmatprep.subr.mxu0 %v4368
        %v4370 = vand.u32 %v3313, 4294901760
        %4371 = vmatpush2.msra.mxu0 %v4370
        %v4372 = vand.u32 %v240, 4294901760
        %v4373 = vsub.f32 %v240, %v4372
        %v4374 = vand.u32 %v4373, 4294901760
        %4375 = vmatprep.mubr.f32.mxu0 %v4374
        %v4376 = vand.u32 %v239, 4294901760
        %v4377 = vsub.f32 %v239, %v4376
        %v4378 = vand.u32 %v4377, 4294901760
        %4379 = vmatmul.mubr.f32.gmra.mxu0 %v4378
        %v4380 = vpop.f32.mrf.mxu0
        %v4381 = vadd.f32 %v4210, %v4380
        %v4382 = vpop.f32.mrf.mxu0
        %v4383 = vadd.f32 %v4212, %v4382
        %v4384 = vand.u32 %v244, 4294901760
        %v4385 = vsub.f32 %v244, %v4384
        %v4386 = vand.u32 %v4385, 4294901760
        %4387 = vmatprep.mubr.f32.mxu0 %v4386
        %v4388 = vand.u32 %v243, 4294901760
        %v4389 = vsub.f32 %v243, %v4388
        %v4390 = vand.u32 %v4389, 4294901760
        %4391 = vmatmul.mubr.f32.gmra.mxu0 %v4390
        %v4392 = vpop.f32.mrf.mxu0
        %v4393 = vadd.f32 %v4220, %v4392
        %v4394 = vpop.f32.mrf.mxu0
        %v4395 = vadd.f32 %v4222, %v4394
        %v4396 = vand.u32 %v248, 4294901760
        %v4397 = vsub.f32 %v248, %v4396
        %v4398 = vand.u32 %v4397, 4294901760
        %4399 = vmatprep.mubr.f32.mxu0 %v4398
        %v4400 = vand.u32 %v247, 4294901760
        %v4401 = vsub.f32 %v247, %v4400
        %v4402 = vand.u32 %v4401, 4294901760
        %4403 = vmatmul.mubr.f32.gmra.mxu0 %v4402
        %v4404 = vpop.f32.mrf.mxu0
        %v4405 = vadd.f32 %v4230, %v4404
        %v4406 = vpop.f32.mrf.mxu0
        %v4407 = vadd.f32 %v4232, %v4406
        %v4408 = vand.u32 %v252, 4294901760
        %v4409 = vsub.f32 %v252, %v4408
        %v4410 = vand.u32 %v4409, 4294901760
        %4411 = vmatprep.mubr.f32.mxu0 %v4410
        %v4412 = vand.u32 %v251, 4294901760
        %v4413 = vsub.f32 %v251, %v4412
        %v4414 = vand.u32 %v4413, 4294901760
        %4415 = vmatmul.mubr.f32.gmra.mxu0 %v4414
        %v4416 = vpop.f32.mrf.mxu0
        %v4417 = vadd.f32 %v4240, %v4416
        %v4418 = vpop.f32.mrf.mxu0
        %v4419 = vadd.f32 %v4242, %v4418
        %4420 = vdwg.mxu0
        %v4421 = vand.u32 %v3312, 4294901760
        %v4422 = vsub.f32 %v3312, %v4421
        %v4423 = vand.u32 %v4422, 4294901760
        %4424 = vmatprep.subr.mxu0 %v4423
        %v4425 = vand.u32 %v3311, 4294901760
        %v4426 = vsub.f32 %v3311, %v4425
        %v4427 = vand.u32 %v4426, 4294901760
        %4428 = vmatpush1.msra.mxu0 %v4427
        %v4429 = vand.u32 %v3310, 4294901760
        %v4430 = vsub.f32 %v3310, %v4429
        %v4431 = vand.u32 %v4430, 4294901760
        %4432 = vmatprep.subr.mxu0 %v4431
        %v4433 = vand.u32 %v3309, 4294901760
        %v4434 = vsub.f32 %v3309, %v4433
        %v4435 = vand.u32 %v4434, 4294901760
        %4436 = vmatpush1.msra.mxu0 %v4435
        %v4437 = vand.u32 %v3308, 4294901760
        %v4438 = vsub.f32 %v3308, %v4437
        %v4439 = vand.u32 %v4438, 4294901760
        %4440 = vmatprep.subr.mxu0 %v4439
        %v4441 = vand.u32 %v3307, 4294901760
        %v4442 = vsub.f32 %v3307, %v4441
        %v4443 = vand.u32 %v4442, 4294901760
        %4444 = vmatpush1.msra.mxu0 %v4443
        %v4445 = vand.u32 %v3306, 4294901760
        %v4446 = vsub.f32 %v3306, %v4445
        %v4447 = vand.u32 %v4446, 4294901760
        %4448 = vmatprep.subr.mxu0 %v4447
        %v4449 = vand.u32 %v3305, 4294901760
        %v4450 = vsub.f32 %v3305, %v4449
        %v4451 = vand.u32 %v4450, 4294901760
        %4452 = vmatpush1.msra.mxu0 %v4451
        %v4453 = vand.u32 %v3304, 4294901760
        %v4454 = vsub.f32 %v3304, %v4453
        %v4455 = vand.u32 %v4454, 4294901760
        %4456 = vmatprep.subr.mxu0 %v4455
        %v4457 = vand.u32 %v3303, 4294901760
        %v4458 = vsub.f32 %v3303, %v4457
        %v4459 = vand.u32 %v4458, 4294901760
        %4460 = vmatpush1.msra.mxu0 %v4459
        %v4461 = vand.u32 %v3302, 4294901760
        %v4462 = vsub.f32 %v3302, %v4461
        %v4463 = vand.u32 %v4462, 4294901760
        %4464 = vmatprep.subr.mxu0 %v4463
        %v4465 = vand.u32 %v3301, 4294901760
        %v4466 = vsub.f32 %v3301, %v4465
        %v4467 = vand.u32 %v4466, 4294901760
        %4468 = vmatpush1.msra.mxu0 %v4467
        %v4469 = vand.u32 %v3300, 4294901760
        %v4470 = vsub.f32 %v3300, %v4469
        %v4471 = vand.u32 %v4470, 4294901760
        %4472 = vmatprep.subr.mxu0 %v4471
        %v4473 = vand.u32 %v3299, 4294901760
        %v4474 = vsub.f32 %v3299, %v4473
        %v4475 = vand.u32 %v4474, 4294901760
        %4476 = vmatpush1.msra.mxu0 %v4475
        %v4477 = vand.u32 %v3298, 4294901760
        %v4478 = vsub.f32 %v3298, %v4477
        %v4479 = vand.u32 %v4478, 4294901760
        %4480 = vmatprep.subr.mxu0 %v4479
        %v4481 = vand.u32 %v3297, 4294901760
        %v4482 = vsub.f32 %v3297, %v4481
        %v4483 = vand.u32 %v4482, 4294901760
        %4484 = vmatpush1.msra.mxu0 %v4483
        %v4485 = vand.u32 %v3296, 4294901760
        %v4486 = vsub.f32 %v3296, %v4485
        %v4487 = vand.u32 %v4486, 4294901760
        %4488 = vmatprep.subr.mxu0 %v4487
        %v4489 = vand.u32 %v3295, 4294901760
        %v4490 = vsub.f32 %v3295, %v4489
        %v4491 = vand.u32 %v4490, 4294901760
        %4492 = vmatpush1.msra.mxu0 %v4491
        %v4493 = vand.u32 %v3294, 4294901760
        %v4494 = vsub.f32 %v3294, %v4493
        %v4495 = vand.u32 %v4494, 4294901760
        %4496 = vmatprep.subr.mxu0 %v4495
        %v4497 = vand.u32 %v3293, 4294901760
        %v4498 = vsub.f32 %v3293, %v4497
        %v4499 = vand.u32 %v4498, 4294901760
        %4500 = vmatpush1.msra.mxu0 %v4499
        %v4501 = vand.u32 %v3292, 4294901760
        %v4502 = vsub.f32 %v3292, %v4501
        %v4503 = vand.u32 %v4502, 4294901760
        %4504 = vmatprep.subr.mxu0 %v4503
        %v4505 = vand.u32 %v3291, 4294901760
        %v4506 = vsub.f32 %v3291, %v4505
        %v4507 = vand.u32 %v4506, 4294901760
        %4508 = vmatpush1.msra.mxu0 %v4507
        %v4509 = vand.u32 %v3290, 4294901760
        %v4510 = vsub.f32 %v3290, %v4509
        %v4511 = vand.u32 %v4510, 4294901760
        %4512 = vmatprep.subr.mxu0 %v4511
        %v4513 = vand.u32 %v3289, 4294901760
        %v4514 = vsub.f32 %v3289, %v4513
        %v4515 = vand.u32 %v4514, 4294901760
        %4516 = vmatpush1.msra.mxu0 %v4515
        %v4517 = vand.u32 %v3288, 4294901760
        %v4518 = vsub.f32 %v3288, %v4517
        %v4519 = vand.u32 %v4518, 4294901760
        %4520 = vmatprep.subr.mxu0 %v4519
        %v4521 = vand.u32 %v3287, 4294901760
        %v4522 = vsub.f32 %v3287, %v4521
        %v4523 = vand.u32 %v4522, 4294901760
        %4524 = vmatpush1.msra.mxu0 %v4523
        %v4525 = vand.u32 %v3286, 4294901760
        %v4526 = vsub.f32 %v3286, %v4525
        %v4527 = vand.u32 %v4526, 4294901760
        %4528 = vmatprep.subr.mxu0 %v4527
        %v4529 = vand.u32 %v3285, 4294901760
        %v4530 = vsub.f32 %v3285, %v4529
        %v4531 = vand.u32 %v4530, 4294901760
        %4532 = vmatpush1.msra.mxu0 %v4531
        %v4533 = vand.u32 %v3284, 4294901760
        %v4534 = vsub.f32 %v3284, %v4533
        %v4535 = vand.u32 %v4534, 4294901760
        %4536 = vmatprep.subr.mxu0 %v4535
        %v4537 = vand.u32 %v3283, 4294901760
        %v4538 = vsub.f32 %v3283, %v4537
        %v4539 = vand.u32 %v4538, 4294901760
        %4540 = vmatpush1.msra.mxu0 %v4539
        %v4541 = vand.u32 %v3282, 4294901760
        %v4542 = vsub.f32 %v3282, %v4541
        %v4543 = vand.u32 %v4542, 4294901760
        %4544 = vmatprep.subr.mxu0 %v4543
        %v4545 = vand.u32 %v3281, 4294901760
        %v4546 = vsub.f32 %v3281, %v4545
        %v4547 = vand.u32 %v4546, 4294901760
        %4548 = vmatpush1.msra.mxu0 %v4547
        %v4549 = vand.u32 %v3344, 4294901760
        %v4550 = vsub.f32 %v3344, %v4549
        %v4551 = vand.u32 %v4550, 4294901760
        %4552 = vmatprep.subr.mxu0 %v4551
        %v4553 = vand.u32 %v3343, 4294901760
        %v4554 = vsub.f32 %v3343, %v4553
        %v4555 = vand.u32 %v4554, 4294901760
        %4556 = vmatpush2.msra.mxu0 %v4555
        %v4557 = vand.u32 %v3342, 4294901760
        %v4558 = vsub.f32 %v3342, %v4557
        %v4559 = vand.u32 %v4558, 4294901760
        %4560 = vmatprep.subr.mxu0 %v4559
        %v4561 = vand.u32 %v3341, 4294901760
        %v4562 = vsub.f32 %v3341, %v4561
        %v4563 = vand.u32 %v4562, 4294901760
        %4564 = vmatpush2.msra.mxu0 %v4563
        %v4565 = vand.u32 %v3340, 4294901760
        %v4566 = vsub.f32 %v3340, %v4565
        %v4567 = vand.u32 %v4566, 4294901760
        %4568 = vmatprep.subr.mxu0 %v4567
        %v4569 = vand.u32 %v3339, 4294901760
        %v4570 = vsub.f32 %v3339, %v4569
        %v4571 = vand.u32 %v4570, 4294901760
        %4572 = vmatpush2.msra.mxu0 %v4571
        %v4573 = vand.u32 %v3338, 4294901760
        %v4574 = vsub.f32 %v3338, %v4573
        %v4575 = vand.u32 %v4574, 4294901760
        %4576 = vmatprep.subr.mxu0 %v4575
        %v4577 = vand.u32 %v3337, 4294901760
        %v4578 = vsub.f32 %v3337, %v4577
        %v4579 = vand.u32 %v4578, 4294901760
        %4580 = vmatpush2.msra.mxu0 %v4579
        %v4581 = vand.u32 %v3336, 4294901760
        %v4582 = vsub.f32 %v3336, %v4581
        %v4583 = vand.u32 %v4582, 4294901760
        %4584 = vmatprep.subr.mxu0 %v4583
        %v4585 = vand.u32 %v3335, 4294901760
        %v4586 = vsub.f32 %v3335, %v4585
        %v4587 = vand.u32 %v4586, 4294901760
        %4588 = vmatpush2.msra.mxu0 %v4587
        %v4589 = vand.u32 %v3334, 4294901760
        %v4590 = vsub.f32 %v3334, %v4589
        %v4591 = vand.u32 %v4590, 4294901760
        %4592 = vmatprep.subr.mxu0 %v4591
        %v4593 = vand.u32 %v3333, 4294901760
        %v4594 = vsub.f32 %v3333, %v4593
        %v4595 = vand.u32 %v4594, 4294901760
        %4596 = vmatpush2.msra.mxu0 %v4595
        %v4597 = vand.u32 %v3332, 4294901760
        %v4598 = vsub.f32 %v3332, %v4597
        %v4599 = vand.u32 %v4598, 4294901760
        %4600 = vmatprep.subr.mxu0 %v4599
        %v4601 = vand.u32 %v3331, 4294901760
        %v4602 = vsub.f32 %v3331, %v4601
        %v4603 = vand.u32 %v4602, 4294901760
        %4604 = vmatpush2.msra.mxu0 %v4603
        %v4605 = vand.u32 %v3330, 4294901760
        %v4606 = vsub.f32 %v3330, %v4605
        %v4607 = vand.u32 %v4606, 4294901760
        %4608 = vmatprep.subr.mxu0 %v4607
        %v4609 = vand.u32 %v3329, 4294901760
        %v4610 = vsub.f32 %v3329, %v4609
        %v4611 = vand.u32 %v4610, 4294901760
        %4612 = vmatpush2.msra.mxu0 %v4611
        %v4613 = vand.u32 %v3328, 4294901760
        %v4614 = vsub.f32 %v3328, %v4613
        %v4615 = vand.u32 %v4614, 4294901760
        %4616 = vmatprep.subr.mxu0 %v4615
        %v4617 = vand.u32 %v3327, 4294901760
        %v4618 = vsub.f32 %v3327, %v4617
        %v4619 = vand.u32 %v4618, 4294901760
        %4620 = vmatpush2.msra.mxu0 %v4619
        %v4621 = vand.u32 %v3326, 4294901760
        %v4622 = vsub.f32 %v3326, %v4621
        %v4623 = vand.u32 %v4622, 4294901760
        %4624 = vmatprep.subr.mxu0 %v4623
        %v4625 = vand.u32 %v3325, 4294901760
        %v4626 = vsub.f32 %v3325, %v4625
        %v4627 = vand.u32 %v4626, 4294901760
        %4628 = vmatpush2.msra.mxu0 %v4627
        %v4629 = vand.u32 %v3324, 4294901760
        %v4630 = vsub.f32 %v3324, %v4629
        %v4631 = vand.u32 %v4630, 4294901760
        %4632 = vmatprep.subr.mxu0 %v4631
        %v4633 = vand.u32 %v3323, 4294901760
        %v4634 = vsub.f32 %v3323, %v4633
        %v4635 = vand.u32 %v4634, 4294901760
        %4636 = vmatpush2.msra.mxu0 %v4635
        %v4637 = vand.u32 %v3322, 4294901760
        %v4638 = vsub.f32 %v3322, %v4637
        %v4639 = vand.u32 %v4638, 4294901760
        %4640 = vmatprep.subr.mxu0 %v4639
        %v4641 = vand.u32 %v3321, 4294901760
        %v4642 = vsub.f32 %v3321, %v4641
        %v4643 = vand.u32 %v4642, 4294901760
        %4644 = vmatpush2.msra.mxu0 %v4643
        %v4645 = vand.u32 %v3320, 4294901760
        %v4646 = vsub.f32 %v3320, %v4645
        %v4647 = vand.u32 %v4646, 4294901760
        %4648 = vmatprep.subr.mxu0 %v4647
        %v4649 = vand.u32 %v3319, 4294901760
        %v4650 = vsub.f32 %v3319, %v4649
        %v4651 = vand.u32 %v4650, 4294901760
        %4652 = vmatpush2.msra.mxu0 %v4651
        %v4653 = vand.u32 %v3318, 4294901760
        %v4654 = vsub.f32 %v3318, %v4653
        %v4655 = vand.u32 %v4654, 4294901760
        %4656 = vmatprep.subr.mxu0 %v4655
        %v4657 = vand.u32 %v3317, 4294901760
        %v4658 = vsub.f32 %v3317, %v4657
        %v4659 = vand.u32 %v4658, 4294901760
        %4660 = vmatpush2.msra.mxu0 %v4659
        %v4661 = vand.u32 %v3316, 4294901760
        %v4662 = vsub.f32 %v3316, %v4661
        %v4663 = vand.u32 %v4662, 4294901760
        %4664 = vmatprep.subr.mxu0 %v4663
        %v4665 = vand.u32 %v3315, 4294901760
        %v4666 = vsub.f32 %v3315, %v4665
        %v4667 = vand.u32 %v4666, 4294901760
        %4668 = vmatpush2.msra.mxu0 %v4667
        %v4669 = vand.u32 %v3314, 4294901760
        %v4670 = vsub.f32 %v3314, %v4669
        %v4671 = vand.u32 %v4670, 4294901760
        %4672 = vmatprep.subr.mxu0 %v4671
        %v4673 = vand.u32 %v3313, 4294901760
        %v4674 = vsub.f32 %v3313, %v4673
        %v4675 = vand.u32 %v4674, 4294901760
        %4676 = vmatpush2.msra.mxu0 %v4675
        %v4677 = vand.u32 %v240, 4294901760
        %4678 = vmatprep.mubr.f32.mxu0 %v4677
        %v4679 = vand.u32 %v239, 4294901760
        %4680 = vmatmul.mubr.f32.gmra.mxu0 %v4679
        %v4681 = vpop.f32.mrf.mxu0
        %v4682 = vadd.f32 %v4381, %v4681
        %v4683 = vpop.f32.mrf.mxu0
        %v4684 = vadd.f32 %v4383, %v4683
        %v4685 = vand.u32 %v244, 4294901760
        %4686 = vmatprep.mubr.f32.mxu0 %v4685
        %v4687 = vand.u32 %v243, 4294901760
        %4688 = vmatmul.mubr.f32.gmra.mxu0 %v4687
        %v4689 = vpop.f32.mrf.mxu0
        %v4690 = vadd.f32 %v4393, %v4689
        %v4691 = vpop.f32.mrf.mxu0
        %v4692 = vadd.f32 %v4395, %v4691
        %v4693 = vand.u32 %v248, 4294901760
        %4694 = vmatprep.mubr.f32.mxu0 %v4693
        %v4695 = vand.u32 %v247, 4294901760
        %4696 = vmatmul.mubr.f32.gmra.mxu0 %v4695
        %v4697 = vpop.f32.mrf.mxu0
        %v4698 = vadd.f32 %v4405, %v4697
        %v4699 = vpop.f32.mrf.mxu0
        %v4700 = vadd.f32 %v4407, %v4699
        %v4701 = vand.u32 %v252, 4294901760
        %4702 = vmatprep.mubr.f32.mxu0 %v4701
        %v4703 = vand.u32 %v251, 4294901760
        %4704 = vmatmul.mubr.f32.gmra.mxu0 %v4703
        %v4705 = vpop.f32.mrf.mxu0
        %v4706 = vadd.f32 %v4417, %v4705
        %v4707 = vpop.f32.mrf.mxu0
        %v4708 = vadd.f32 %v4419, %v4707
        %4709 = vdwg.mxu0
        %v4710 = vand.u32 %v3312, 4294901760
        %4711 = vmatprep.subr.mxu0 %v4710
        %v4712 = vand.u32 %v3311, 4294901760
        %4713 = vmatpush1.msra.mxu0 %v4712
        %v4714 = vand.u32 %v3310, 4294901760
        %4715 = vmatprep.subr.mxu0 %v4714
        %v4716 = vand.u32 %v3309, 4294901760
        %4717 = vmatpush1.msra.mxu0 %v4716
        %v4718 = vand.u32 %v3308, 4294901760
        %4719 = vmatprep.subr.mxu0 %v4718
        %v4720 = vand.u32 %v3307, 4294901760
        %4721 = vmatpush1.msra.mxu0 %v4720
        %v4722 = vand.u32 %v3306, 4294901760
        %4723 = vmatprep.subr.mxu0 %v4722
        %v4724 = vand.u32 %v3305, 4294901760
        %4725 = vmatpush1.msra.mxu0 %v4724
        %v4726 = vand.u32 %v3304, 4294901760
        %4727 = vmatprep.subr.mxu0 %v4726
        %v4728 = vand.u32 %v3303, 4294901760
        %4729 = vmatpush1.msra.mxu0 %v4728
        %v4730 = vand.u32 %v3302, 4294901760
        %4731 = vmatprep.subr.mxu0 %v4730
        %v4732 = vand.u32 %v3301, 4294901760
        %4733 = vmatpush1.msra.mxu0 %v4732
        %v4734 = vand.u32 %v3300, 4294901760
        %4735 = vmatprep.subr.mxu0 %v4734
        %v4736 = vand.u32 %v3299, 4294901760
        %4737 = vmatpush1.msra.mxu0 %v4736
        %v4738 = vand.u32 %v3298, 4294901760
        %4739 = vmatprep.subr.mxu0 %v4738
        %v4740 = vand.u32 %v3297, 4294901760
        %4741 = vmatpush1.msra.mxu0 %v4740
        %v4742 = vand.u32 %v3296, 4294901760
        %4743 = vmatprep.subr.mxu0 %v4742
        %v4744 = vand.u32 %v3295, 4294901760
        %4745 = vmatpush1.msra.mxu0 %v4744
        %v4746 = vand.u32 %v3294, 4294901760
        %4747 = vmatprep.subr.mxu0 %v4746
        %v4748 = vand.u32 %v3293, 4294901760
        %4749 = vmatpush1.msra.mxu0 %v4748
        %v4750 = vand.u32 %v3292, 4294901760
        %4751 = vmatprep.subr.mxu0 %v4750
        %v4752 = vand.u32 %v3291, 4294901760
        %4753 = vmatpush1.msra.mxu0 %v4752
        %v4754 = vand.u32 %v3290, 4294901760
        %4755 = vmatprep.subr.mxu0 %v4754
        %v4756 = vand.u32 %v3289, 4294901760
        %4757 = vmatpush1.msra.mxu0 %v4756
        %v4758 = vand.u32 %v3288, 4294901760
        %4759 = vmatprep.subr.mxu0 %v4758
        %v4760 = vand.u32 %v3287, 4294901760
        %4761 = vmatpush1.msra.mxu0 %v4760
        %v4762 = vand.u32 %v3286, 4294901760
        %4763 = vmatprep.subr.mxu0 %v4762
        %v4764 = vand.u32 %v3285, 4294901760
        %4765 = vmatpush1.msra.mxu0 %v4764
        %v4766 = vand.u32 %v3284, 4294901760
        %4767 = vmatprep.subr.mxu0 %v4766
        %v4768 = vand.u32 %v3283, 4294901760
        %4769 = vmatpush1.msra.mxu0 %v4768
        %v4770 = vand.u32 %v3282, 4294901760
        %4771 = vmatprep.subr.mxu0 %v4770
        %v4772 = vand.u32 %v3281, 4294901760
        %4773 = vmatpush1.msra.mxu0 %v4772
        %v4774 = vand.u32 %v3344, 4294901760
        %4775 = vmatprep.subr.mxu0 %v4774
        %v4776 = vand.u32 %v3343, 4294901760
        %4777 = vmatpush2.msra.mxu0 %v4776
        %v4778 = vand.u32 %v3342, 4294901760
        %4779 = vmatprep.subr.mxu0 %v4778
        %v4780 = vand.u32 %v3341, 4294901760
        %4781 = vmatpush2.msra.mxu0 %v4780
        %v4782 = vand.u32 %v3340, 4294901760
        %4783 = vmatprep.subr.mxu0 %v4782
        %v4784 = vand.u32 %v3339, 4294901760
        %4785 = vmatpush2.msra.mxu0 %v4784
        %v4786 = vand.u32 %v3338, 4294901760
        %4787 = vmatprep.subr.mxu0 %v4786
        %v4788 = vand.u32 %v3337, 4294901760
        %4789 = vmatpush2.msra.mxu0 %v4788
        %v4790 = vand.u32 %v3336, 4294901760
        %4791 = vmatprep.subr.mxu0 %v4790
        %v4792 = vand.u32 %v3335, 4294901760
        %4793 = vmatpush2.msra.mxu0 %v4792
        %v4794 = vand.u32 %v3334, 4294901760
        %4795 = vmatprep.subr.mxu0 %v4794
        %v4796 = vand.u32 %v3333, 4294901760
        %4797 = vmatpush2.msra.mxu0 %v4796
        %v4798 = vand.u32 %v3332, 4294901760
        %4799 = vmatprep.subr.mxu0 %v4798
        %v4800 = vand.u32 %v3331, 4294901760
        %4801 = vmatpush2.msra.mxu0 %v4800
        %v4802 = vand.u32 %v3330, 4294901760
        %4803 = vmatprep.subr.mxu0 %v4802
        %v4804 = vand.u32 %v3329, 4294901760
        %4805 = vmatpush2.msra.mxu0 %v4804
        %v4806 = vand.u32 %v3328, 4294901760
        %4807 = vmatprep.subr.mxu0 %v4806
        %v4808 = vand.u32 %v3327, 4294901760
        %4809 = vmatpush2.msra.mxu0 %v4808
        %v4810 = vand.u32 %v3326, 4294901760
        %4811 = vmatprep.subr.mxu0 %v4810
        %v4812 = vand.u32 %v3325, 4294901760
        %4813 = vmatpush2.msra.mxu0 %v4812
        %v4814 = vand.u32 %v3324, 4294901760
        %4815 = vmatprep.subr.mxu0 %v4814
        %v4816 = vand.u32 %v3323, 4294901760
        %4817 = vmatpush2.msra.mxu0 %v4816
        %v4818 = vand.u32 %v3322, 4294901760
        %4819 = vmatprep.subr.mxu0 %v4818
        %v4820 = vand.u32 %v3321, 4294901760
        %4821 = vmatpush2.msra.mxu0 %v4820
        %v4822 = vand.u32 %v3320, 4294901760
        %4823 = vmatprep.subr.mxu0 %v4822
        %v4824 = vand.u32 %v3319, 4294901760
        %4825 = vmatpush2.msra.mxu0 %v4824
        %v4826 = vand.u32 %v3318, 4294901760
        %4827 = vmatprep.subr.mxu0 %v4826
        %v4828 = vand.u32 %v3317, 4294901760
        %4829 = vmatpush2.msra.mxu0 %v4828
        %v4830 = vand.u32 %v3316, 4294901760
        %4831 = vmatprep.subr.mxu0 %v4830
        %v4832 = vand.u32 %v3315, 4294901760
        %4833 = vmatpush2.msra.mxu0 %v4832
        %v4834 = vand.u32 %v3314, 4294901760
        %4835 = vmatprep.subr.mxu0 %v4834
        %v4836 = vand.u32 %v3313, 4294901760
        %4837 = vmatpush2.msra.mxu0 %v4836
        %v4838 = vand.u32 %v240, 4294901760
        %4839 = vmatprep.mubr.f32.mxu0 %v4838
        %v4840 = vand.u32 %v239, 4294901760
        %4841 = vmatmul.mubr.f32.gmra.mxu0 %v4840
        %v4842 = vpop.f32.mrf.mxu0
        %v4843 = vadd.f32 %v4682, %v4842
        %v4844 = vpop.f32.mrf.mxu0
        %v4845 = vadd.f32 %v4684, %v4844
        %v4846 = vand.u32 %v244, 4294901760
        %4847 = vmatprep.mubr.f32.mxu0 %v4846
        %v4848 = vand.u32 %v243, 4294901760
        %4849 = vmatmul.mubr.f32.gmra.mxu0 %v4848
        %v4850 = vpop.f32.mrf.mxu0
        %v4851 = vadd.f32 %v4690, %v4850
        %v4852 = vpop.f32.mrf.mxu0
        %v4853 = vadd.f32 %v4692, %v4852
        %v4854 = vand.u32 %v248, 4294901760
        %4855 = vmatprep.mubr.f32.mxu0 %v4854
        %v4856 = vand.u32 %v247, 4294901760
        %4857 = vmatmul.mubr.f32.gmra.mxu0 %v4856
        %v4858 = vpop.f32.mrf.mxu0
        %v4859 = vadd.f32 %v4698, %v4858
        %v4860 = vpop.f32.mrf.mxu0
        %v4861 = vadd.f32 %v4700, %v4860
        %v4862 = vand.u32 %v252, 4294901760
        %4863 = vmatprep.mubr.f32.mxu0 %v4862
        %v4864 = vand.u32 %v251, 4294901760
        %4865 = vmatmul.mubr.f32.gmra.mxu0 %v4864
        %v4866 = vpop.f32.mrf.mxu0
        %v4867 = vadd.f32 %v4706, %v4866
        %v4868 = vpop.f32.mrf.mxu0
        %v4869 = vadd.f32 %v4708, %v4868
        %4870 = vdwg.mxu0
        %v4871 = vand.u32 %v3376, 4294901760
        %4872 = vmatprep.subr.mxu0 %v4871
        %v4873 = vand.u32 %v3375, 4294901760
        %4874 = vmatpush1.msra.mxu0 %v4873
        %v4875 = vand.u32 %v3374, 4294901760
        %4876 = vmatprep.subr.mxu0 %v4875
        %v4877 = vand.u32 %v3373, 4294901760
        %4878 = vmatpush1.msra.mxu0 %v4877
        %v4879 = vand.u32 %v3372, 4294901760
        %4880 = vmatprep.subr.mxu0 %v4879
        %v4881 = vand.u32 %v3371, 4294901760
        %4882 = vmatpush1.msra.mxu0 %v4881
        %v4883 = vand.u32 %v3370, 4294901760
        %4884 = vmatprep.subr.mxu0 %v4883
        %v4885 = vand.u32 %v3369, 4294901760
        %4886 = vmatpush1.msra.mxu0 %v4885
        %v4887 = vand.u32 %v3368, 4294901760
        %4888 = vmatprep.subr.mxu0 %v4887
        %v4889 = vand.u32 %v3367, 4294901760
        %4890 = vmatpush1.msra.mxu0 %v4889
        %v4891 = vand.u32 %v3366, 4294901760
        %4892 = vmatprep.subr.mxu0 %v4891
        %v4893 = vand.u32 %v3365, 4294901760
        %4894 = vmatpush1.msra.mxu0 %v4893
        %v4895 = vand.u32 %v3364, 4294901760
        %4896 = vmatprep.subr.mxu0 %v4895
        %v4897 = vand.u32 %v3363, 4294901760
        %4898 = vmatpush1.msra.mxu0 %v4897
        %v4899 = vand.u32 %v3362, 4294901760
        %4900 = vmatprep.subr.mxu0 %v4899
        %v4901 = vand.u32 %v3361, 4294901760
        %4902 = vmatpush1.msra.mxu0 %v4901
        %v4903 = vand.u32 %v3360, 4294901760
        %4904 = vmatprep.subr.mxu0 %v4903
        %v4905 = vand.u32 %v3359, 4294901760
        %4906 = vmatpush1.msra.mxu0 %v4905
        %v4907 = vand.u32 %v3358, 4294901760
        %4908 = vmatprep.subr.mxu0 %v4907
        %v4909 = vand.u32 %v3357, 4294901760
        %4910 = vmatpush1.msra.mxu0 %v4909
        %v4911 = vand.u32 %v3356, 4294901760
        %4912 = vmatprep.subr.mxu0 %v4911
        %v4913 = vand.u32 %v3355, 4294901760
        %4914 = vmatpush1.msra.mxu0 %v4913
        %v4915 = vand.u32 %v3354, 4294901760
        %4916 = vmatprep.subr.mxu0 %v4915
        %v4917 = vand.u32 %v3353, 4294901760
        %4918 = vmatpush1.msra.mxu0 %v4917
        %v4919 = vand.u32 %v3352, 4294901760
        %4920 = vmatprep.subr.mxu0 %v4919
        %v4921 = vand.u32 %v3351, 4294901760
        %4922 = vmatpush1.msra.mxu0 %v4921
        %v4923 = vand.u32 %v3350, 4294901760
        %4924 = vmatprep.subr.mxu0 %v4923
        %v4925 = vand.u32 %v3349, 4294901760
        %4926 = vmatpush1.msra.mxu0 %v4925
        %v4927 = vand.u32 %v3348, 4294901760
        %4928 = vmatprep.subr.mxu0 %v4927
        %v4929 = vand.u32 %v3347, 4294901760
        %4930 = vmatpush1.msra.mxu0 %v4929
        %v4931 = vand.u32 %v3346, 4294901760
        %4932 = vmatprep.subr.mxu0 %v4931
        %v4933 = vand.u32 %v3345, 4294901760
        %4934 = vmatpush1.msra.mxu0 %v4933
        %4935 = vmatprep.subr.mxu0 0.0
        %4936 = vmatpush2.msra.mxu0 0.0
        %4937 = vmatprep.subr.mxu0 0.0
        %4938 = vmatpush2.msra.mxu0 0.0
        %4939 = vmatprep.subr.mxu0 0.0
        %4940 = vmatpush2.msra.mxu0 0.0
        %4941 = vmatprep.subr.mxu0 0.0
        %4942 = vmatpush2.msra.mxu0 0.0
        %v4943 = vand.u32 %v3400, 4294901760
        %4944 = vmatprep.subr.mxu0 %v4943
        %v4945 = vand.u32 %v3399, 4294901760
        %4946 = vmatpush2.msra.mxu0 %v4945
        %v4947 = vand.u32 %v3398, 4294901760
        %4948 = vmatprep.subr.mxu0 %v4947
        %v4949 = vand.u32 %v3397, 4294901760
        %4950 = vmatpush2.msra.mxu0 %v4949
        %v4951 = vand.u32 %v3396, 4294901760
        %4952 = vmatprep.subr.mxu0 %v4951
        %v4953 = vand.u32 %v3395, 4294901760
        %4954 = vmatpush2.msra.mxu0 %v4953
        %v4955 = vand.u32 %v3394, 4294901760
        %4956 = vmatprep.subr.mxu0 %v4955
        %v4957 = vand.u32 %v3393, 4294901760
        %4958 = vmatpush2.msra.mxu0 %v4957
        %v4959 = vand.u32 %v3392, 4294901760
        %4960 = vmatprep.subr.mxu0 %v4959
        %v4961 = vand.u32 %v3391, 4294901760
        %4962 = vmatpush2.msra.mxu0 %v4961
        %v4963 = vand.u32 %v3390, 4294901760
        %4964 = vmatprep.subr.mxu0 %v4963
        %v4965 = vand.u32 %v3389, 4294901760
        %4966 = vmatpush2.msra.mxu0 %v4965
        %v4967 = vand.u32 %v3388, 4294901760
        %4968 = vmatprep.subr.mxu0 %v4967
        %v4969 = vand.u32 %v3387, 4294901760
        %4970 = vmatpush2.msra.mxu0 %v4969
        %v4971 = vand.u32 %v3386, 4294901760
        %4972 = vmatprep.subr.mxu0 %v4971
        %v4973 = vand.u32 %v3385, 4294901760
        %4974 = vmatpush2.msra.mxu0 %v4973
        %v4975 = vand.u32 %v3384, 4294901760
        %4976 = vmatprep.subr.mxu0 %v4975
        %v4977 = vand.u32 %v3383, 4294901760
        %4978 = vmatpush2.msra.mxu0 %v4977
        %v4979 = vand.u32 %v3382, 4294901760
        %4980 = vmatprep.subr.mxu0 %v4979
        %v4981 = vand.u32 %v3381, 4294901760
        %4982 = vmatpush2.msra.mxu0 %v4981
        %v4983 = vand.u32 %v3380, 4294901760
        %4984 = vmatprep.subr.mxu0 %v4983
        %v4985 = vand.u32 %v3379, 4294901760
        %4986 = vmatpush2.msra.mxu0 %v4985
        %v4987 = vand.u32 %v3378, 4294901760
        %4988 = vmatprep.subr.mxu0 %v4987
        %v4989 = vand.u32 %v3377, 4294901760
        %4990 = vmatpush2.msra.mxu0 %v4989
        %v4991 = vand.u32 %v401, 4294901760
        %v4992 = vsub.f32 %v401, %v4991
        %v4993 = vand.u32 %v4992, 4294901760
        %v4994 = vsub.f32 %v4992, %v4993
        %v4995 = vand.u32 %v4994, 4294901760
        %4996 = vmatprep.mubr.f32.mxu0 %v4995
        %v4997 = vand.u32 %v241, 4294901760
        %v4998 = vsub.f32 %v241, %v4997
        %v4999 = vand.u32 %v4998, 4294901760
        %v5000 = vsub.f32 %v4998, %v4999
        %v5001 = vand.u32 %v5000, 4294901760
        %5002 = vmatmul.mubr.f32.gmra.mxu0 %v5001
        %v5003 = vpop.f32.mrf.mxu0
        %v5004 = vadd.f32 %v4843, %v5003
        %v5005 = vpop.f32.mrf.mxu0
        %v5006 = vadd.f32 %v4845, %v5005
        %v5007 = vand.u32 %v404, 4294901760
        %v5008 = vsub.f32 %v404, %v5007
        %v5009 = vand.u32 %v5008, 4294901760
        %v5010 = vsub.f32 %v5008, %v5009
        %v5011 = vand.u32 %v5010, 4294901760
        %5012 = vmatprep.mubr.f32.mxu0 %v5011
        %v5013 = vand.u32 %v245, 4294901760
        %v5014 = vsub.f32 %v245, %v5013
        %v5015 = vand.u32 %v5014, 4294901760
        %v5016 = vsub.f32 %v5014, %v5015
        %v5017 = vand.u32 %v5016, 4294901760
        %5018 = vmatmul.mubr.f32.gmra.mxu0 %v5017
        %v5019 = vpop.f32.mrf.mxu0
        %v5020 = vadd.f32 %v4851, %v5019
        %v5021 = vpop.f32.mrf.mxu0
        %v5022 = vadd.f32 %v4853, %v5021
        %v5023 = vand.u32 %v407, 4294901760
        %v5024 = vsub.f32 %v407, %v5023
        %v5025 = vand.u32 %v5024, 4294901760
        %v5026 = vsub.f32 %v5024, %v5025
        %v5027 = vand.u32 %v5026, 4294901760
        %5028 = vmatprep.mubr.f32.mxu0 %v5027
        %v5029 = vand.u32 %v249, 4294901760
        %v5030 = vsub.f32 %v249, %v5029
        %v5031 = vand.u32 %v5030, 4294901760
        %v5032 = vsub.f32 %v5030, %v5031
        %v5033 = vand.u32 %v5032, 4294901760
        %5034 = vmatmul.mubr.f32.gmra.mxu0 %v5033
        %v5035 = vpop.f32.mrf.mxu0
        %v5036 = vadd.f32 %v4859, %v5035
        %v5037 = vpop.f32.mrf.mxu0
        %v5038 = vadd.f32 %v4861, %v5037
        %v5039 = vand.u32 %v410, 4294901760
        %v5040 = vsub.f32 %v410, %v5039
        %v5041 = vand.u32 %v5040, 4294901760
        %v5042 = vsub.f32 %v5040, %v5041
        %v5043 = vand.u32 %v5042, 4294901760
        %5044 = vmatprep.mubr.f32.mxu0 %v5043
        %v5045 = vand.u32 %v253, 4294901760
        %v5046 = vsub.f32 %v253, %v5045
        %v5047 = vand.u32 %v5046, 4294901760
        %v5048 = vsub.f32 %v5046, %v5047
        %v5049 = vand.u32 %v5048, 4294901760
        %5050 = vmatmul.mubr.f32.gmra.mxu0 %v5049
        %v5051 = vpop.f32.mrf.mxu0
        %v5052 = vadd.f32 %v4867, %v5051
        %v5053 = vpop.f32.mrf.mxu0
        %v5054 = vadd.f32 %v4869, %v5053
        %5055 = vdwg.mxu0
        %v5056 = vand.u32 %v3376, 4294901760
        %v5057 = vsub.f32 %v3376, %v5056
        %v5058 = vand.u32 %v5057, 4294901760
        %v5059 = vsub.f32 %v5057, %v5058
        %v5060 = vand.u32 %v5059, 4294901760
        %5061 = vmatprep.subr.mxu0 %v5060
        %v5062 = vand.u32 %v3375, 4294901760
        %v5063 = vsub.f32 %v3375, %v5062
        %v5064 = vand.u32 %v5063, 4294901760
        %v5065 = vsub.f32 %v5063, %v5064
        %v5066 = vand.u32 %v5065, 4294901760
        %5067 = vmatpush1.msra.mxu0 %v5066
        %v5068 = vand.u32 %v3374, 4294901760
        %v5069 = vsub.f32 %v3374, %v5068
        %v5070 = vand.u32 %v5069, 4294901760
        %v5071 = vsub.f32 %v5069, %v5070
        %v5072 = vand.u32 %v5071, 4294901760
        %5073 = vmatprep.subr.mxu0 %v5072
        %v5074 = vand.u32 %v3373, 4294901760
        %v5075 = vsub.f32 %v3373, %v5074
        %v5076 = vand.u32 %v5075, 4294901760
        %v5077 = vsub.f32 %v5075, %v5076
        %v5078 = vand.u32 %v5077, 4294901760
        %5079 = vmatpush1.msra.mxu0 %v5078
        %v5080 = vand.u32 %v3372, 4294901760
        %v5081 = vsub.f32 %v3372, %v5080
        %v5082 = vand.u32 %v5081, 4294901760
        %v5083 = vsub.f32 %v5081, %v5082
        %v5084 = vand.u32 %v5083, 4294901760
        %5085 = vmatprep.subr.mxu0 %v5084
        %v5086 = vand.u32 %v3371, 4294901760
        %v5087 = vsub.f32 %v3371, %v5086
        %v5088 = vand.u32 %v5087, 4294901760
        %v5089 = vsub.f32 %v5087, %v5088
        %v5090 = vand.u32 %v5089, 4294901760
        %5091 = vmatpush1.msra.mxu0 %v5090
        %v5092 = vand.u32 %v3370, 4294901760
        %v5093 = vsub.f32 %v3370, %v5092
        %v5094 = vand.u32 %v5093, 4294901760
        %v5095 = vsub.f32 %v5093, %v5094
        %v5096 = vand.u32 %v5095, 4294901760
        %5097 = vmatprep.subr.mxu0 %v5096
        %v5098 = vand.u32 %v3369, 4294901760
        %v5099 = vsub.f32 %v3369, %v5098
        %v5100 = vand.u32 %v5099, 4294901760
        %v5101 = vsub.f32 %v5099, %v5100
        %v5102 = vand.u32 %v5101, 4294901760
        %5103 = vmatpush1.msra.mxu0 %v5102
        %v5104 = vand.u32 %v3368, 4294901760
        %v5105 = vsub.f32 %v3368, %v5104
        %v5106 = vand.u32 %v5105, 4294901760
        %v5107 = vsub.f32 %v5105, %v5106
        %v5108 = vand.u32 %v5107, 4294901760
        %5109 = vmatprep.subr.mxu0 %v5108
        %v5110 = vand.u32 %v3367, 4294901760
        %v5111 = vsub.f32 %v3367, %v5110
        %v5112 = vand.u32 %v5111, 4294901760
        %v5113 = vsub.f32 %v5111, %v5112
        %v5114 = vand.u32 %v5113, 4294901760
        %5115 = vmatpush1.msra.mxu0 %v5114
        %v5116 = vand.u32 %v3366, 4294901760
        %v5117 = vsub.f32 %v3366, %v5116
        %v5118 = vand.u32 %v5117, 4294901760
        %v5119 = vsub.f32 %v5117, %v5118
        %v5120 = vand.u32 %v5119, 4294901760
        %5121 = vmatprep.subr.mxu0 %v5120
        %v5122 = vand.u32 %v3365, 4294901760
        %v5123 = vsub.f32 %v3365, %v5122
        %v5124 = vand.u32 %v5123, 4294901760
        %v5125 = vsub.f32 %v5123, %v5124
        %v5126 = vand.u32 %v5125, 4294901760
        %5127 = vmatpush1.msra.mxu0 %v5126
        %v5128 = vand.u32 %v3364, 4294901760
        %v5129 = vsub.f32 %v3364, %v5128
        %v5130 = vand.u32 %v5129, 4294901760
        %v5131 = vsub.f32 %v5129, %v5130
        %v5132 = vand.u32 %v5131, 4294901760
        %5133 = vmatprep.subr.mxu0 %v5132
        %v5134 = vand.u32 %v3363, 4294901760
        %v5135 = vsub.f32 %v3363, %v5134
        %v5136 = vand.u32 %v5135, 4294901760
        %v5137 = vsub.f32 %v5135, %v5136
        %v5138 = vand.u32 %v5137, 4294901760
        %5139 = vmatpush1.msra.mxu0 %v5138
        %v5140 = vand.u32 %v3362, 4294901760
        %v5141 = vsub.f32 %v3362, %v5140
        %v5142 = vand.u32 %v5141, 4294901760
        %v5143 = vsub.f32 %v5141, %v5142
        %v5144 = vand.u32 %v5143, 4294901760
        %5145 = vmatprep.subr.mxu0 %v5144
        %v5146 = vand.u32 %v3361, 4294901760
        %v5147 = vsub.f32 %v3361, %v5146
        %v5148 = vand.u32 %v5147, 4294901760
        %v5149 = vsub.f32 %v5147, %v5148
        %v5150 = vand.u32 %v5149, 4294901760
        %5151 = vmatpush1.msra.mxu0 %v5150
        %v5152 = vand.u32 %v3360, 4294901760
        %v5153 = vsub.f32 %v3360, %v5152
        %v5154 = vand.u32 %v5153, 4294901760
        %v5155 = vsub.f32 %v5153, %v5154
        %v5156 = vand.u32 %v5155, 4294901760
        %5157 = vmatprep.subr.mxu0 %v5156
        %v5158 = vand.u32 %v3359, 4294901760
        %v5159 = vsub.f32 %v3359, %v5158
        %v5160 = vand.u32 %v5159, 4294901760
        %v5161 = vsub.f32 %v5159, %v5160
        %v5162 = vand.u32 %v5161, 4294901760
        %5163 = vmatpush1.msra.mxu0 %v5162
        %v5164 = vand.u32 %v3358, 4294901760
        %v5165 = vsub.f32 %v3358, %v5164
        %v5166 = vand.u32 %v5165, 4294901760
        %v5167 = vsub.f32 %v5165, %v5166
        %v5168 = vand.u32 %v5167, 4294901760
        %5169 = vmatprep.subr.mxu0 %v5168
        %v5170 = vand.u32 %v3357, 4294901760
        %v5171 = vsub.f32 %v3357, %v5170
        %v5172 = vand.u32 %v5171, 4294901760
        %v5173 = vsub.f32 %v5171, %v5172
        %v5174 = vand.u32 %v5173, 4294901760
        %5175 = vmatpush1.msra.mxu0 %v5174
        %v5176 = vand.u32 %v3356, 4294901760
        %v5177 = vsub.f32 %v3356, %v5176
        %v5178 = vand.u32 %v5177, 4294901760
        %v5179 = vsub.f32 %v5177, %v5178
        %v5180 = vand.u32 %v5179, 4294901760
        %5181 = vmatprep.subr.mxu0 %v5180
        %v5182 = vand.u32 %v3355, 4294901760
        %v5183 = vsub.f32 %v3355, %v5182
        %v5184 = vand.u32 %v5183, 4294901760
        %v5185 = vsub.f32 %v5183, %v5184
        %v5186 = vand.u32 %v5185, 4294901760
        %5187 = vmatpush1.msra.mxu0 %v5186
        %v5188 = vand.u32 %v3354, 4294901760
        %v5189 = vsub.f32 %v3354, %v5188
        %v5190 = vand.u32 %v5189, 4294901760
        %v5191 = vsub.f32 %v5189, %v5190
        %v5192 = vand.u32 %v5191, 4294901760
        %5193 = vmatprep.subr.mxu0 %v5192
        %v5194 = vand.u32 %v3353, 4294901760
        %v5195 = vsub.f32 %v3353, %v5194
        %v5196 = vand.u32 %v5195, 4294901760
        %v5197 = vsub.f32 %v5195, %v5196
        %v5198 = vand.u32 %v5197, 4294901760
        %5199 = vmatpush1.msra.mxu0 %v5198
        %v5200 = vand.u32 %v3352, 4294901760
        %v5201 = vsub.f32 %v3352, %v5200
        %v5202 = vand.u32 %v5201, 4294901760
        %v5203 = vsub.f32 %v5201, %v5202
        %v5204 = vand.u32 %v5203, 4294901760
        %5205 = vmatprep.subr.mxu0 %v5204
        %v5206 = vand.u32 %v3351, 4294901760
        %v5207 = vsub.f32 %v3351, %v5206
        %v5208 = vand.u32 %v5207, 4294901760
        %v5209 = vsub.f32 %v5207, %v5208
        %v5210 = vand.u32 %v5209, 4294901760
        %5211 = vmatpush1.msra.mxu0 %v5210
        %v5212 = vand.u32 %v3350, 4294901760
        %v5213 = vsub.f32 %v3350, %v5212
        %v5214 = vand.u32 %v5213, 4294901760
        %v5215 = vsub.f32 %v5213, %v5214
        %v5216 = vand.u32 %v5215, 4294901760
        %5217 = vmatprep.subr.mxu0 %v5216
        %v5218 = vand.u32 %v3349, 4294901760
        %v5219 = vsub.f32 %v3349, %v5218
        %v5220 = vand.u32 %v5219, 4294901760
        %v5221 = vsub.f32 %v5219, %v5220
        %v5222 = vand.u32 %v5221, 4294901760
        %5223 = vmatpush1.msra.mxu0 %v5222
        %v5224 = vand.u32 %v3348, 4294901760
        %v5225 = vsub.f32 %v3348, %v5224
        %v5226 = vand.u32 %v5225, 4294901760
        %v5227 = vsub.f32 %v5225, %v5226
        %v5228 = vand.u32 %v5227, 4294901760
        %5229 = vmatprep.subr.mxu0 %v5228
        %v5230 = vand.u32 %v3347, 4294901760
        %v5231 = vsub.f32 %v3347, %v5230
        %v5232 = vand.u32 %v5231, 4294901760
        %v5233 = vsub.f32 %v5231, %v5232
        %v5234 = vand.u32 %v5233, 4294901760
        %5235 = vmatpush1.msra.mxu0 %v5234
        %v5236 = vand.u32 %v3346, 4294901760
        %v5237 = vsub.f32 %v3346, %v5236
        %v5238 = vand.u32 %v5237, 4294901760
        %v5239 = vsub.f32 %v5237, %v5238
        %v5240 = vand.u32 %v5239, 4294901760
        %5241 = vmatprep.subr.mxu0 %v5240
        %v5242 = vand.u32 %v3345, 4294901760
        %v5243 = vsub.f32 %v3345, %v5242
        %v5244 = vand.u32 %v5243, 4294901760
        %v5245 = vsub.f32 %v5243, %v5244
        %v5246 = vand.u32 %v5245, 4294901760
        %5247 = vmatpush1.msra.mxu0 %v5246
        %5248 = vmatprep.subr.mxu0 0.0
        %5249 = vmatpush2.msra.mxu0 0.0
        %5250 = vmatprep.subr.mxu0 0.0
        %5251 = vmatpush2.msra.mxu0 0.0
        %5252 = vmatprep.subr.mxu0 0.0
        %5253 = vmatpush2.msra.mxu0 0.0
        %5254 = vmatprep.subr.mxu0 0.0
        %5255 = vmatpush2.msra.mxu0 0.0
        %v5256 = vand.u32 %v3400, 4294901760
        %v5257 = vsub.f32 %v3400, %v5256
        %v5258 = vand.u32 %v5257, 4294901760
        %v5259 = vsub.f32 %v5257, %v5258
        %v5260 = vand.u32 %v5259, 4294901760
        %5261 = vmatprep.subr.mxu0 %v5260
        %v5262 = vand.u32 %v3399, 4294901760
        %v5263 = vsub.f32 %v3399, %v5262
        %v5264 = vand.u32 %v5263, 4294901760
        %v5265 = vsub.f32 %v5263, %v5264
        %v5266 = vand.u32 %v5265, 4294901760
        %5267 = vmatpush2.msra.mxu0 %v5266
        %v5268 = vand.u32 %v3398, 4294901760
        %v5269 = vsub.f32 %v3398, %v5268
        %v5270 = vand.u32 %v5269, 4294901760
        %v5271 = vsub.f32 %v5269, %v5270
        %v5272 = vand.u32 %v5271, 4294901760
        %5273 = vmatprep.subr.mxu0 %v5272
        %v5274 = vand.u32 %v3397, 4294901760
        %v5275 = vsub.f32 %v3397, %v5274
        %v5276 = vand.u32 %v5275, 4294901760
        %v5277 = vsub.f32 %v5275, %v5276
        %v5278 = vand.u32 %v5277, 4294901760
        %5279 = vmatpush2.msra.mxu0 %v5278
        %v5280 = vand.u32 %v3396, 4294901760
        %v5281 = vsub.f32 %v3396, %v5280
        %v5282 = vand.u32 %v5281, 4294901760
        %v5283 = vsub.f32 %v5281, %v5282
        %v5284 = vand.u32 %v5283, 4294901760
        %5285 = vmatprep.subr.mxu0 %v5284
        %v5286 = vand.u32 %v3395, 4294901760
        %v5287 = vsub.f32 %v3395, %v5286
        %v5288 = vand.u32 %v5287, 4294901760
        %v5289 = vsub.f32 %v5287, %v5288
        %v5290 = vand.u32 %v5289, 4294901760
        %5291 = vmatpush2.msra.mxu0 %v5290
        %v5292 = vand.u32 %v3394, 4294901760
        %v5293 = vsub.f32 %v3394, %v5292
        %v5294 = vand.u32 %v5293, 4294901760
        %v5295 = vsub.f32 %v5293, %v5294
        %v5296 = vand.u32 %v5295, 4294901760
        %5297 = vmatprep.subr.mxu0 %v5296
        %v5298 = vand.u32 %v3393, 4294901760
        %v5299 = vsub.f32 %v3393, %v5298
        %v5300 = vand.u32 %v5299, 4294901760
        %v5301 = vsub.f32 %v5299, %v5300
        %v5302 = vand.u32 %v5301, 4294901760
        %5303 = vmatpush2.msra.mxu0 %v5302
        %v5304 = vand.u32 %v3392, 4294901760
        %v5305 = vsub.f32 %v3392, %v5304
        %v5306 = vand.u32 %v5305, 4294901760
        %v5307 = vsub.f32 %v5305, %v5306
        %v5308 = vand.u32 %v5307, 4294901760
        %5309 = vmatprep.subr.mxu0 %v5308
        %v5310 = vand.u32 %v3391, 4294901760
        %v5311 = vsub.f32 %v3391, %v5310
        %v5312 = vand.u32 %v5311, 4294901760
        %v5313 = vsub.f32 %v5311, %v5312
        %v5314 = vand.u32 %v5313, 4294901760
        %5315 = vmatpush2.msra.mxu0 %v5314
        %v5316 = vand.u32 %v3390, 4294901760
        %v5317 = vsub.f32 %v3390, %v5316
        %v5318 = vand.u32 %v5317, 4294901760
        %v5319 = vsub.f32 %v5317, %v5318
        %v5320 = vand.u32 %v5319, 4294901760
        %5321 = vmatprep.subr.mxu0 %v5320
        %v5322 = vand.u32 %v3389, 4294901760
        %v5323 = vsub.f32 %v3389, %v5322
        %v5324 = vand.u32 %v5323, 4294901760
        %v5325 = vsub.f32 %v5323, %v5324
        %v5326 = vand.u32 %v5325, 4294901760
        %5327 = vmatpush2.msra.mxu0 %v5326
        %v5328 = vand.u32 %v3388, 4294901760
        %v5329 = vsub.f32 %v3388, %v5328
        %v5330 = vand.u32 %v5329, 4294901760
        %v5331 = vsub.f32 %v5329, %v5330
        %v5332 = vand.u32 %v5331, 4294901760
        %5333 = vmatprep.subr.mxu0 %v5332
        %v5334 = vand.u32 %v3387, 4294901760
        %v5335 = vsub.f32 %v3387, %v5334
        %v5336 = vand.u32 %v5335, 4294901760
        %v5337 = vsub.f32 %v5335, %v5336
        %v5338 = vand.u32 %v5337, 4294901760
        %5339 = vmatpush2.msra.mxu0 %v5338
        %v5340 = vand.u32 %v3386, 4294901760
        %v5341 = vsub.f32 %v3386, %v5340
        %v5342 = vand.u32 %v5341, 4294901760
        %v5343 = vsub.f32 %v5341, %v5342
        %v5344 = vand.u32 %v5343, 4294901760
        %5345 = vmatprep.subr.mxu0 %v5344
        %v5346 = vand.u32 %v3385, 4294901760
        %v5347 = vsub.f32 %v3385, %v5346
        %v5348 = vand.u32 %v5347, 4294901760
        %v5349 = vsub.f32 %v5347, %v5348
        %v5350 = vand.u32 %v5349, 4294901760
        %5351 = vmatpush2.msra.mxu0 %v5350
        %v5352 = vand.u32 %v3384, 4294901760
        %v5353 = vsub.f32 %v3384, %v5352
        %v5354 = vand.u32 %v5353, 4294901760
        %v5355 = vsub.f32 %v5353, %v5354
        %v5356 = vand.u32 %v5355, 4294901760
        %5357 = vmatprep.subr.mxu0 %v5356
        %v5358 = vand.u32 %v3383, 4294901760
        %v5359 = vsub.f32 %v3383, %v5358
        %v5360 = vand.u32 %v5359, 4294901760
        %v5361 = vsub.f32 %v5359, %v5360
        %v5362 = vand.u32 %v5361, 4294901760
        %5363 = vmatpush2.msra.mxu0 %v5362
        %v5364 = vand.u32 %v3382, 4294901760
        %v5365 = vsub.f32 %v3382, %v5364
        %v5366 = vand.u32 %v5365, 4294901760
        %v5367 = vsub.f32 %v5365, %v5366
        %v5368 = vand.u32 %v5367, 4294901760
        %5369 = vmatprep.subr.mxu0 %v5368
        %v5370 = vand.u32 %v3381, 4294901760
        %v5371 = vsub.f32 %v3381, %v5370
        %v5372 = vand.u32 %v5371, 4294901760
        %v5373 = vsub.f32 %v5371, %v5372
        %v5374 = vand.u32 %v5373, 4294901760
        %5375 = vmatpush2.msra.mxu0 %v5374
        %v5376 = vand.u32 %v3380, 4294901760
        %v5377 = vsub.f32 %v3380, %v5376
        %v5378 = vand.u32 %v5377, 4294901760
        %v5379 = vsub.f32 %v5377, %v5378
        %v5380 = vand.u32 %v5379, 4294901760
        %5381 = vmatprep.subr.mxu0 %v5380
        %v5382 = vand.u32 %v3379, 4294901760
        %v5383 = vsub.f32 %v3379, %v5382
        %v5384 = vand.u32 %v5383, 4294901760
        %v5385 = vsub.f32 %v5383, %v5384
        %v5386 = vand.u32 %v5385, 4294901760
        %5387 = vmatpush2.msra.mxu0 %v5386
        %v5388 = vand.u32 %v3378, 4294901760
        %v5389 = vsub.f32 %v3378, %v5388
        %v5390 = vand.u32 %v5389, 4294901760
        %v5391 = vsub.f32 %v5389, %v5390
        %v5392 = vand.u32 %v5391, 4294901760
        %5393 = vmatprep.subr.mxu0 %v5392
        %v5394 = vand.u32 %v3377, 4294901760
        %v5395 = vsub.f32 %v3377, %v5394
        %v5396 = vand.u32 %v5395, 4294901760
        %v5397 = vsub.f32 %v5395, %v5396
        %v5398 = vand.u32 %v5397, 4294901760
        %5399 = vmatpush2.msra.mxu0 %v5398
        %v5400 = vand.u32 %v401, 4294901760
        %5401 = vmatprep.mubr.f32.mxu0 %v5400
        %v5402 = vand.u32 %v241, 4294901760
        %5403 = vmatmul.mubr.f32.gmra.mxu0 %v5402
        %v5404 = vpop.f32.mrf.mxu0
        %v5405 = vadd.f32 %v5004, %v5404
        %v5406 = vpop.f32.mrf.mxu0
        %v5407 = vadd.f32 %v5006, %v5406
        %v5408 = vand.u32 %v404, 4294901760
        %5409 = vmatprep.mubr.f32.mxu0 %v5408
        %v5410 = vand.u32 %v245, 4294901760
        %5411 = vmatmul.mubr.f32.gmra.mxu0 %v5410
        %v5412 = vpop.f32.mrf.mxu0
        %v5413 = vadd.f32 %v5020, %v5412
        %v5414 = vpop.f32.mrf.mxu0
        %v5415 = vadd.f32 %v5022, %v5414
        %v5416 = vand.u32 %v407, 4294901760
        %5417 = vmatprep.mubr.f32.mxu0 %v5416
        %v5418 = vand.u32 %v249, 4294901760
        %5419 = vmatmul.mubr.f32.gmra.mxu0 %v5418
        %v5420 = vpop.f32.mrf.mxu0
        %v5421 = vadd.f32 %v5036, %v5420
        %v5422 = vpop.f32.mrf.mxu0
        %v5423 = vadd.f32 %v5038, %v5422
        %v5424 = vand.u32 %v410, 4294901760
        %5425 = vmatprep.mubr.f32.mxu0 %v5424
        %v5426 = vand.u32 %v253, 4294901760
        %5427 = vmatmul.mubr.f32.gmra.mxu0 %v5426
        %v5428 = vpop.f32.mrf.mxu0
        %v5429 = vadd.f32 %v5052, %v5428
        %v5430 = vpop.f32.mrf.mxu0
        %v5431 = vadd.f32 %v5054, %v5430
        %5432 = vdwg.mxu0
        %v5433 = vand.u32 %v3376, 4294901760
        %v5434 = vsub.f32 %v3376, %v5433
        %5435 = vmatprep.subr.mxu0 %v5434
        %v5436 = vand.u32 %v3375, 4294901760
        %v5437 = vsub.f32 %v3375, %v5436
        %5438 = vmatpush1.msra.mxu0 %v5437
        %v5439 = vand.u32 %v3374, 4294901760
        %v5440 = vsub.f32 %v3374, %v5439
        %5441 = vmatprep.subr.mxu0 %v5440
        %v5442 = vand.u32 %v3373, 4294901760
        %v5443 = vsub.f32 %v3373, %v5442
        %5444 = vmatpush1.msra.mxu0 %v5443
        %v5445 = vand.u32 %v3372, 4294901760
        %v5446 = vsub.f32 %v3372, %v5445
        %5447 = vmatprep.subr.mxu0 %v5446
        %v5448 = vand.u32 %v3371, 4294901760
        %v5449 = vsub.f32 %v3371, %v5448
        %5450 = vmatpush1.msra.mxu0 %v5449
        %v5451 = vand.u32 %v3370, 4294901760
        %v5452 = vsub.f32 %v3370, %v5451
        %5453 = vmatprep.subr.mxu0 %v5452
        %v5454 = vand.u32 %v3369, 4294901760
        %v5455 = vsub.f32 %v3369, %v5454
        %5456 = vmatpush1.msra.mxu0 %v5455
        %v5457 = vand.u32 %v3368, 4294901760
        %v5458 = vsub.f32 %v3368, %v5457
        %5459 = vmatprep.subr.mxu0 %v5458
        %v5460 = vand.u32 %v3367, 4294901760
        %v5461 = vsub.f32 %v3367, %v5460
        %5462 = vmatpush1.msra.mxu0 %v5461
        %v5463 = vand.u32 %v3366, 4294901760
        %v5464 = vsub.f32 %v3366, %v5463
        %5465 = vmatprep.subr.mxu0 %v5464
        %v5466 = vand.u32 %v3365, 4294901760
        %v5467 = vsub.f32 %v3365, %v5466
        %5468 = vmatpush1.msra.mxu0 %v5467
        %v5469 = vand.u32 %v3364, 4294901760
        %v5470 = vsub.f32 %v3364, %v5469
        %5471 = vmatprep.subr.mxu0 %v5470
        %v5472 = vand.u32 %v3363, 4294901760
        %v5473 = vsub.f32 %v3363, %v5472
        %5474 = vmatpush1.msra.mxu0 %v5473
        %v5475 = vand.u32 %v3362, 4294901760
        %v5476 = vsub.f32 %v3362, %v5475
        %5477 = vmatprep.subr.mxu0 %v5476
        %v5478 = vand.u32 %v3361, 4294901760
        %v5479 = vsub.f32 %v3361, %v5478
        %5480 = vmatpush1.msra.mxu0 %v5479
        %v5481 = vand.u32 %v3360, 4294901760
        %v5482 = vsub.f32 %v3360, %v5481
        %5483 = vmatprep.subr.mxu0 %v5482
        %v5484 = vand.u32 %v3359, 4294901760
        %v5485 = vsub.f32 %v3359, %v5484
        %5486 = vmatpush1.msra.mxu0 %v5485
        %v5487 = vand.u32 %v3358, 4294901760
        %v5488 = vsub.f32 %v3358, %v5487
        %5489 = vmatprep.subr.mxu0 %v5488
        %v5490 = vand.u32 %v3357, 4294901760
        %v5491 = vsub.f32 %v3357, %v5490
        %5492 = vmatpush1.msra.mxu0 %v5491
        %v5493 = vand.u32 %v3356, 4294901760
        %v5494 = vsub.f32 %v3356, %v5493
        %5495 = vmatprep.subr.mxu0 %v5494
        %v5496 = vand.u32 %v3355, 4294901760
        %v5497 = vsub.f32 %v3355, %v5496
        %5498 = vmatpush1.msra.mxu0 %v5497
        %v5499 = vand.u32 %v3354, 4294901760
        %v5500 = vsub.f32 %v3354, %v5499
        %5501 = vmatprep.subr.mxu0 %v5500
        %v5502 = vand.u32 %v3353, 4294901760
        %v5503 = vsub.f32 %v3353, %v5502
        %5504 = vmatpush1.msra.mxu0 %v5503
        %v5505 = vand.u32 %v3352, 4294901760
        %v5506 = vsub.f32 %v3352, %v5505
        %5507 = vmatprep.subr.mxu0 %v5506
        %v5508 = vand.u32 %v3351, 4294901760
        %v5509 = vsub.f32 %v3351, %v5508
        %5510 = vmatpush1.msra.mxu0 %v5509
        %v5511 = vand.u32 %v3350, 4294901760
        %v5512 = vsub.f32 %v3350, %v5511
        %5513 = vmatprep.subr.mxu0 %v5512
        %v5514 = vand.u32 %v3349, 4294901760
        %v5515 = vsub.f32 %v3349, %v5514
        %5516 = vmatpush1.msra.mxu0 %v5515
        %v5517 = vand.u32 %v3348, 4294901760
        %v5518 = vsub.f32 %v3348, %v5517
        %5519 = vmatprep.subr.mxu0 %v5518
        %v5520 = vand.u32 %v3347, 4294901760
        %v5521 = vsub.f32 %v3347, %v5520
        %5522 = vmatpush1.msra.mxu0 %v5521
        %v5523 = vand.u32 %v3346, 4294901760
        %v5524 = vsub.f32 %v3346, %v5523
        %5525 = vmatprep.subr.mxu0 %v5524
        %v5526 = vand.u32 %v3345, 4294901760
        %v5527 = vsub.f32 %v3345, %v5526
        %5528 = vmatpush1.msra.mxu0 %v5527
        %5529 = vmatprep.subr.mxu0 0.0
        %5530 = vmatpush2.msra.mxu0 0.0
        %5531 = vmatprep.subr.mxu0 0.0
        %5532 = vmatpush2.msra.mxu0 0.0
        %5533 = vmatprep.subr.mxu0 0.0
        %5534 = vmatpush2.msra.mxu0 0.0
        %5535 = vmatprep.subr.mxu0 0.0
        %5536 = vmatpush2.msra.mxu0 0.0
        %v5537 = vand.u32 %v3400, 4294901760
        %v5538 = vsub.f32 %v3400, %v5537
        %5539 = vmatprep.subr.mxu0 %v5538
        %v5540 = vand.u32 %v3399, 4294901760
        %v5541 = vsub.f32 %v3399, %v5540
        %5542 = vmatpush2.msra.mxu0 %v5541
        %v5543 = vand.u32 %v3398, 4294901760
        %v5544 = vsub.f32 %v3398, %v5543
        %5545 = vmatprep.subr.mxu0 %v5544
        %v5546 = vand.u32 %v3397, 4294901760
        %v5547 = vsub.f32 %v3397, %v5546
        %5548 = vmatpush2.msra.mxu0 %v5547
        %v5549 = vand.u32 %v3396, 4294901760
        %v5550 = vsub.f32 %v3396, %v5549
        %5551 = vmatprep.subr.mxu0 %v5550
        %v5552 = vand.u32 %v3395, 4294901760
        %v5553 = vsub.f32 %v3395, %v5552
        %5554 = vmatpush2.msra.mxu0 %v5553
        %v5555 = vand.u32 %v3394, 4294901760
        %v5556 = vsub.f32 %v3394, %v5555
        %5557 = vmatprep.subr.mxu0 %v5556
        %v5558 = vand.u32 %v3393, 4294901760
        %v5559 = vsub.f32 %v3393, %v5558
        %5560 = vmatpush2.msra.mxu0 %v5559
        %v5561 = vand.u32 %v3392, 4294901760
        %v5562 = vsub.f32 %v3392, %v5561
        %5563 = vmatprep.subr.mxu0 %v5562
        %v5564 = vand.u32 %v3391, 4294901760
        %v5565 = vsub.f32 %v3391, %v5564
        %5566 = vmatpush2.msra.mxu0 %v5565
        %v5567 = vand.u32 %v3390, 4294901760
        %v5568 = vsub.f32 %v3390, %v5567
        %5569 = vmatprep.subr.mxu0 %v5568
        %v5570 = vand.u32 %v3389, 4294901760
        %v5571 = vsub.f32 %v3389, %v5570
        %5572 = vmatpush2.msra.mxu0 %v5571
        %v5573 = vand.u32 %v3388, 4294901760
        %v5574 = vsub.f32 %v3388, %v5573
        %5575 = vmatprep.subr.mxu0 %v5574
        %v5576 = vand.u32 %v3387, 4294901760
        %v5577 = vsub.f32 %v3387, %v5576
        %5578 = vmatpush2.msra.mxu0 %v5577
        %v5579 = vand.u32 %v3386, 4294901760
        %v5580 = vsub.f32 %v3386, %v5579
        %5581 = vmatprep.subr.mxu0 %v5580
        %v5582 = vand.u32 %v3385, 4294901760
        %v5583 = vsub.f32 %v3385, %v5582
        %5584 = vmatpush2.msra.mxu0 %v5583
        %v5585 = vand.u32 %v3384, 4294901760
        %v5586 = vsub.f32 %v3384, %v5585
        %5587 = vmatprep.subr.mxu0 %v5586
        %v5588 = vand.u32 %v3383, 4294901760
        %v5589 = vsub.f32 %v3383, %v5588
        %5590 = vmatpush2.msra.mxu0 %v5589
        %v5591 = vand.u32 %v3382, 4294901760
        %v5592 = vsub.f32 %v3382, %v5591
        %5593 = vmatprep.subr.mxu0 %v5592
        %v5594 = vand.u32 %v3381, 4294901760
        %v5595 = vsub.f32 %v3381, %v5594
        %5596 = vmatpush2.msra.mxu0 %v5595
        %v5597 = vand.u32 %v3380, 4294901760
        %v5598 = vsub.f32 %v3380, %v5597
        %5599 = vmatprep.subr.mxu0 %v5598
        %v5600 = vand.u32 %v3379, 4294901760
        %v5601 = vsub.f32 %v3379, %v5600
        %5602 = vmatpush2.msra.mxu0 %v5601
        %v5603 = vand.u32 %v3378, 4294901760
        %v5604 = vsub.f32 %v3378, %v5603
        %5605 = vmatprep.subr.mxu0 %v5604
        %v5606 = vand.u32 %v3377, 4294901760
        %v5607 = vsub.f32 %v3377, %v5606
        %5608 = vmatpush2.msra.mxu0 %v5607
        %v5609 = vand.u32 %v401, 4294901760
        %v5610 = vsub.f32 %v401, %v5609
        %5611 = vmatprep.mubr.f32.mxu0 %v5610
        %v5612 = vand.u32 %v241, 4294901760
        %v5613 = vsub.f32 %v241, %v5612
        %5614 = vmatmul.mubr.f32.gmra.mxu0 %v5613
        %v5615 = vpop.f32.mrf.mxu0
        %v5616 = vadd.f32 %v5405, %v5615
        %v5617 = vpop.f32.mrf.mxu0
        %v5618 = vadd.f32 %v5407, %v5617
        %v5619 = vand.u32 %v404, 4294901760
        %v5620 = vsub.f32 %v404, %v5619
        %5621 = vmatprep.mubr.f32.mxu0 %v5620
        %v5622 = vand.u32 %v245, 4294901760
        %v5623 = vsub.f32 %v245, %v5622
        %5624 = vmatmul.mubr.f32.gmra.mxu0 %v5623
        %v5625 = vpop.f32.mrf.mxu0
        %v5626 = vadd.f32 %v5413, %v5625
        %v5627 = vpop.f32.mrf.mxu0
        %v5628 = vadd.f32 %v5415, %v5627
        %v5629 = vand.u32 %v407, 4294901760
        %v5630 = vsub.f32 %v407, %v5629
        %5631 = vmatprep.mubr.f32.mxu0 %v5630
        %v5632 = vand.u32 %v249, 4294901760
        %v5633 = vsub.f32 %v249, %v5632
        %5634 = vmatmul.mubr.f32.gmra.mxu0 %v5633
        %v5635 = vpop.f32.mrf.mxu0
        %v5636 = vadd.f32 %v5421, %v5635
        %v5637 = vpop.f32.mrf.mxu0
        %v5638 = vadd.f32 %v5423, %v5637
        %v5639 = vand.u32 %v410, 4294901760
        %v5640 = vsub.f32 %v410, %v5639
        %5641 = vmatprep.mubr.f32.mxu0 %v5640
        %v5642 = vand.u32 %v253, 4294901760
        %v5643 = vsub.f32 %v253, %v5642
        %5644 = vmatmul.mubr.f32.gmra.mxu0 %v5643
        %v5645 = vpop.f32.mrf.mxu0
        %v5646 = vadd.f32 %v5429, %v5645
        %v5647 = vpop.f32.mrf.mxu0
        %v5648 = vadd.f32 %v5431, %v5647
        %5649 = vdwg.mxu0
        %v5650 = vand.u32 %v3376, 4294901760
        %5651 = vmatprep.subr.mxu0 %v5650
        %v5652 = vand.u32 %v3375, 4294901760
        %5653 = vmatpush1.msra.mxu0 %v5652
        %v5654 = vand.u32 %v3374, 4294901760
        %5655 = vmatprep.subr.mxu0 %v5654
        %v5656 = vand.u32 %v3373, 4294901760
        %5657 = vmatpush1.msra.mxu0 %v5656
        %v5658 = vand.u32 %v3372, 4294901760
        %5659 = vmatprep.subr.mxu0 %v5658
        %v5660 = vand.u32 %v3371, 4294901760
        %5661 = vmatpush1.msra.mxu0 %v5660
        %v5662 = vand.u32 %v3370, 4294901760
        %5663 = vmatprep.subr.mxu0 %v5662
        %v5664 = vand.u32 %v3369, 4294901760
        %5665 = vmatpush1.msra.mxu0 %v5664
        %v5666 = vand.u32 %v3368, 4294901760
        %5667 = vmatprep.subr.mxu0 %v5666
        %v5668 = vand.u32 %v3367, 4294901760
        %5669 = vmatpush1.msra.mxu0 %v5668
        %v5670 = vand.u32 %v3366, 4294901760
        %5671 = vmatprep.subr.mxu0 %v5670
        %v5672 = vand.u32 %v3365, 4294901760
        %5673 = vmatpush1.msra.mxu0 %v5672
        %v5674 = vand.u32 %v3364, 4294901760
        %5675 = vmatprep.subr.mxu0 %v5674
        %v5676 = vand.u32 %v3363, 4294901760
        %5677 = vmatpush1.msra.mxu0 %v5676
        %v5678 = vand.u32 %v3362, 4294901760
        %5679 = vmatprep.subr.mxu0 %v5678
        %v5680 = vand.u32 %v3361, 4294901760
        %5681 = vmatpush1.msra.mxu0 %v5680
        %v5682 = vand.u32 %v3360, 4294901760
        %5683 = vmatprep.subr.mxu0 %v5682
        %v5684 = vand.u32 %v3359, 4294901760
        %5685 = vmatpush1.msra.mxu0 %v5684
        %v5686 = vand.u32 %v3358, 4294901760
        %5687 = vmatprep.subr.mxu0 %v5686
        %v5688 = vand.u32 %v3357, 4294901760
        %5689 = vmatpush1.msra.mxu0 %v5688
        %v5690 = vand.u32 %v3356, 4294901760
        %5691 = vmatprep.subr.mxu0 %v5690
        %v5692 = vand.u32 %v3355, 4294901760
        %5693 = vmatpush1.msra.mxu0 %v5692
        %v5694 = vand.u32 %v3354, 4294901760
        %5695 = vmatprep.subr.mxu0 %v5694
        %v5696 = vand.u32 %v3353, 4294901760
        %5697 = vmatpush1.msra.mxu0 %v5696
        %v5698 = vand.u32 %v3352, 4294901760
        %5699 = vmatprep.subr.mxu0 %v5698
        %v5700 = vand.u32 %v3351, 4294901760
        %5701 = vmatpush1.msra.mxu0 %v5700
        %v5702 = vand.u32 %v3350, 4294901760
        %5703 = vmatprep.subr.mxu0 %v5702
        %v5704 = vand.u32 %v3349, 4294901760
        %5705 = vmatpush1.msra.mxu0 %v5704
        %v5706 = vand.u32 %v3348, 4294901760
        %5707 = vmatprep.subr.mxu0 %v5706
        %v5708 = vand.u32 %v3347, 4294901760
        %5709 = vmatpush1.msra.mxu0 %v5708
        %v5710 = vand.u32 %v3346, 4294901760
        %5711 = vmatprep.subr.mxu0 %v5710
        %v5712 = vand.u32 %v3345, 4294901760
        %5713 = vmatpush1.msra.mxu0 %v5712
        %5714 = vmatprep.subr.mxu0 0.0
        %5715 = vmatpush2.msra.mxu0 0.0
        %5716 = vmatprep.subr.mxu0 0.0
        %5717 = vmatpush2.msra.mxu0 0.0
        %5718 = vmatprep.subr.mxu0 0.0
        %5719 = vmatpush2.msra.mxu0 0.0
        %5720 = vmatprep.subr.mxu0 0.0
        %5721 = vmatpush2.msra.mxu0 0.0
        %v5722 = vand.u32 %v3400, 4294901760
        %5723 = vmatprep.subr.mxu0 %v5722
        %v5724 = vand.u32 %v3399, 4294901760
        %5725 = vmatpush2.msra.mxu0 %v5724
        %v5726 = vand.u32 %v3398, 4294901760
        %5727 = vmatprep.subr.mxu0 %v5726
        %v5728 = vand.u32 %v3397, 4294901760
        %5729 = vmatpush2.msra.mxu0 %v5728
        %v5730 = vand.u32 %v3396, 4294901760
        %5731 = vmatprep.subr.mxu0 %v5730
        %v5732 = vand.u32 %v3395, 4294901760
        %5733 = vmatpush2.msra.mxu0 %v5732
        %v5734 = vand.u32 %v3394, 4294901760
        %5735 = vmatprep.subr.mxu0 %v5734
        %v5736 = vand.u32 %v3393, 4294901760
        %5737 = vmatpush2.msra.mxu0 %v5736
        %v5738 = vand.u32 %v3392, 4294901760
        %5739 = vmatprep.subr.mxu0 %v5738
        %v5740 = vand.u32 %v3391, 4294901760
        %5741 = vmatpush2.msra.mxu0 %v5740
        %v5742 = vand.u32 %v3390, 4294901760
        %5743 = vmatprep.subr.mxu0 %v5742
        %v5744 = vand.u32 %v3389, 4294901760
        %5745 = vmatpush2.msra.mxu0 %v5744
        %v5746 = vand.u32 %v3388, 4294901760
        %5747 = vmatprep.subr.mxu0 %v5746
        %v5748 = vand.u32 %v3387, 4294901760
        %5749 = vmatpush2.msra.mxu0 %v5748
        %v5750 = vand.u32 %v3386, 4294901760
        %5751 = vmatprep.subr.mxu0 %v5750
        %v5752 = vand.u32 %v3385, 4294901760
        %5753 = vmatpush2.msra.mxu0 %v5752
        %v5754 = vand.u32 %v3384, 4294901760
        %5755 = vmatprep.subr.mxu0 %v5754
        %v5756 = vand.u32 %v3383, 4294901760
        %5757 = vmatpush2.msra.mxu0 %v5756
        %v5758 = vand.u32 %v3382, 4294901760
        %5759 = vmatprep.subr.mxu0 %v5758
        %v5760 = vand.u32 %v3381, 4294901760
        %5761 = vmatpush2.msra.mxu0 %v5760
        %v5762 = vand.u32 %v3380, 4294901760
        %5763 = vmatprep.subr.mxu0 %v5762
        %v5764 = vand.u32 %v3379, 4294901760
        %5765 = vmatpush2.msra.mxu0 %v5764
        %v5766 = vand.u32 %v3378, 4294901760
        %5767 = vmatprep.subr.mxu0 %v5766
        %v5768 = vand.u32 %v3377, 4294901760
        %5769 = vmatpush2.msra.mxu0 %v5768
        %v5770 = vand.u32 %v401, 4294901760
        %v5771 = vsub.f32 %v401, %v5770
        %v5772 = vand.u32 %v5771, 4294901760
        %5773 = vmatprep.mubr.f32.mxu0 %v5772
        %v5774 = vand.u32 %v241, 4294901760
        %v5775 = vsub.f32 %v241, %v5774
        %v5776 = vand.u32 %v5775, 4294901760
        %5777 = vmatmul.mubr.f32.gmra.mxu0 %v5776
        %v5778 = vpop.f32.mrf.mxu0
        %v5779 = vadd.f32 %v5616, %v5778
        %v5780 = vpop.f32.mrf.mxu0
        %v5781 = vadd.f32 %v5618, %v5780
        %v5782 = vand.u32 %v404, 4294901760
        %v5783 = vsub.f32 %v404, %v5782
        %v5784 = vand.u32 %v5783, 4294901760
        %5785 = vmatprep.mubr.f32.mxu0 %v5784
        %v5786 = vand.u32 %v245, 4294901760
        %v5787 = vsub.f32 %v245, %v5786
        %v5788 = vand.u32 %v5787, 4294901760
        %5789 = vmatmul.mubr.f32.gmra.mxu0 %v5788
        %v5790 = vpop.f32.mrf.mxu0
        %v5791 = vadd.f32 %v5626, %v5790
        %v5792 = vpop.f32.mrf.mxu0
        %v5793 = vadd.f32 %v5628, %v5792
        %v5794 = vand.u32 %v407, 4294901760
        %v5795 = vsub.f32 %v407, %v5794
        %v5796 = vand.u32 %v5795, 4294901760
        %5797 = vmatprep.mubr.f32.mxu0 %v5796
        %v5798 = vand.u32 %v249, 4294901760
        %v5799 = vsub.f32 %v249, %v5798
        %v5800 = vand.u32 %v5799, 4294901760
        %5801 = vmatmul.mubr.f32.gmra.mxu0 %v5800
        %v5802 = vpop.f32.mrf.mxu0
        %v5803 = vadd.f32 %v5636, %v5802
        %v5804 = vpop.f32.mrf.mxu0
        %v5805 = vadd.f32 %v5638, %v5804
        %v5806 = vand.u32 %v410, 4294901760
        %v5807 = vsub.f32 %v410, %v5806
        %v5808 = vand.u32 %v5807, 4294901760
        %5809 = vmatprep.mubr.f32.mxu0 %v5808
        %v5810 = vand.u32 %v253, 4294901760
        %v5811 = vsub.f32 %v253, %v5810
        %v5812 = vand.u32 %v5811, 4294901760
        %5813 = vmatmul.mubr.f32.gmra.mxu0 %v5812
        %v5814 = vpop.f32.mrf.mxu0
        %v5815 = vadd.f32 %v5646, %v5814
        %v5816 = vpop.f32.mrf.mxu0
        %v5817 = vadd.f32 %v5648, %v5816
        %5818 = vdwg.mxu0
        %v5819 = vand.u32 %v3376, 4294901760
        %v5820 = vsub.f32 %v3376, %v5819
        %v5821 = vand.u32 %v5820, 4294901760
        %5822 = vmatprep.subr.mxu0 %v5821
        %v5823 = vand.u32 %v3375, 4294901760
        %v5824 = vsub.f32 %v3375, %v5823
        %v5825 = vand.u32 %v5824, 4294901760
        %5826 = vmatpush1.msra.mxu0 %v5825
        %v5827 = vand.u32 %v3374, 4294901760
        %v5828 = vsub.f32 %v3374, %v5827
        %v5829 = vand.u32 %v5828, 4294901760
        %5830 = vmatprep.subr.mxu0 %v5829
        %v5831 = vand.u32 %v3373, 4294901760
        %v5832 = vsub.f32 %v3373, %v5831
        %v5833 = vand.u32 %v5832, 4294901760
        %5834 = vmatpush1.msra.mxu0 %v5833
        %v5835 = vand.u32 %v3372, 4294901760
        %v5836 = vsub.f32 %v3372, %v5835
        %v5837 = vand.u32 %v5836, 4294901760
        %5838 = vmatprep.subr.mxu0 %v5837
        %v5839 = vand.u32 %v3371, 4294901760
        %v5840 = vsub.f32 %v3371, %v5839
        %v5841 = vand.u32 %v5840, 4294901760
        %5842 = vmatpush1.msra.mxu0 %v5841
        %v5843 = vand.u32 %v3370, 4294901760
        %v5844 = vsub.f32 %v3370, %v5843
        %v5845 = vand.u32 %v5844, 4294901760
        %5846 = vmatprep.subr.mxu0 %v5845
        %v5847 = vand.u32 %v3369, 4294901760
        %v5848 = vsub.f32 %v3369, %v5847
        %v5849 = vand.u32 %v5848, 4294901760
        %5850 = vmatpush1.msra.mxu0 %v5849
        %v5851 = vand.u32 %v3368, 4294901760
        %v5852 = vsub.f32 %v3368, %v5851
        %v5853 = vand.u32 %v5852, 4294901760
        %5854 = vmatprep.subr.mxu0 %v5853
        %v5855 = vand.u32 %v3367, 4294901760
        %v5856 = vsub.f32 %v3367, %v5855
        %v5857 = vand.u32 %v5856, 4294901760
        %5858 = vmatpush1.msra.mxu0 %v5857
        %v5859 = vand.u32 %v3366, 4294901760
        %v5860 = vsub.f32 %v3366, %v5859
        %v5861 = vand.u32 %v5860, 4294901760
        %5862 = vmatprep.subr.mxu0 %v5861
        %v5863 = vand.u32 %v3365, 4294901760
        %v5864 = vsub.f32 %v3365, %v5863
        %v5865 = vand.u32 %v5864, 4294901760
        %5866 = vmatpush1.msra.mxu0 %v5865
        %v5867 = vand.u32 %v3364, 4294901760
        %v5868 = vsub.f32 %v3364, %v5867
        %v5869 = vand.u32 %v5868, 4294901760
        %5870 = vmatprep.subr.mxu0 %v5869
        %v5871 = vand.u32 %v3363, 4294901760
        %v5872 = vsub.f32 %v3363, %v5871
        %v5873 = vand.u32 %v5872, 4294901760
        %5874 = vmatpush1.msra.mxu0 %v5873
        %v5875 = vand.u32 %v3362, 4294901760
        %v5876 = vsub.f32 %v3362, %v5875
        %v5877 = vand.u32 %v5876, 4294901760
        %5878 = vmatprep.subr.mxu0 %v5877
        %v5879 = vand.u32 %v3361, 4294901760
        %v5880 = vsub.f32 %v3361, %v5879
        %v5881 = vand.u32 %v5880, 4294901760
        %5882 = vmatpush1.msra.mxu0 %v5881
        %v5883 = vand.u32 %v3360, 4294901760
        %v5884 = vsub.f32 %v3360, %v5883
        %v5885 = vand.u32 %v5884, 4294901760
        %5886 = vmatprep.subr.mxu0 %v5885
        %v5887 = vand.u32 %v3359, 4294901760
        %v5888 = vsub.f32 %v3359, %v5887
        %v5889 = vand.u32 %v5888, 4294901760
        %5890 = vmatpush1.msra.mxu0 %v5889
        %v5891 = vand.u32 %v3358, 4294901760
        %v5892 = vsub.f32 %v3358, %v5891
        %v5893 = vand.u32 %v5892, 4294901760
        %5894 = vmatprep.subr.mxu0 %v5893
        %v5895 = vand.u32 %v3357, 4294901760
        %v5896 = vsub.f32 %v3357, %v5895
        %v5897 = vand.u32 %v5896, 4294901760
        %5898 = vmatpush1.msra.mxu0 %v5897
        %v5899 = vand.u32 %v3356, 4294901760
        %v5900 = vsub.f32 %v3356, %v5899
        %v5901 = vand.u32 %v5900, 4294901760
        %5902 = vmatprep.subr.mxu0 %v5901
        %v5903 = vand.u32 %v3355, 4294901760
        %v5904 = vsub.f32 %v3355, %v5903
        %v5905 = vand.u32 %v5904, 4294901760
        %5906 = vmatpush1.msra.mxu0 %v5905
        %v5907 = vand.u32 %v3354, 4294901760
        %v5908 = vsub.f32 %v3354, %v5907
        %v5909 = vand.u32 %v5908, 4294901760
        %5910 = vmatprep.subr.mxu0 %v5909
        %v5911 = vand.u32 %v3353, 4294901760
        %v5912 = vsub.f32 %v3353, %v5911
        %v5913 = vand.u32 %v5912, 4294901760
        %5914 = vmatpush1.msra.mxu0 %v5913
        %v5915 = vand.u32 %v3352, 4294901760
        %v5916 = vsub.f32 %v3352, %v5915
        %v5917 = vand.u32 %v5916, 4294901760
        %5918 = vmatprep.subr.mxu0 %v5917
        %v5919 = vand.u32 %v3351, 4294901760
        %v5920 = vsub.f32 %v3351, %v5919
        %v5921 = vand.u32 %v5920, 4294901760
        %5922 = vmatpush1.msra.mxu0 %v5921
        %v5923 = vand.u32 %v3350, 4294901760
        %v5924 = vsub.f32 %v3350, %v5923
        %v5925 = vand.u32 %v5924, 4294901760
        %5926 = vmatprep.subr.mxu0 %v5925
        %v5927 = vand.u32 %v3349, 4294901760
        %v5928 = vsub.f32 %v3349, %v5927
        %v5929 = vand.u32 %v5928, 4294901760
        %5930 = vmatpush1.msra.mxu0 %v5929
        %v5931 = vand.u32 %v3348, 4294901760
        %v5932 = vsub.f32 %v3348, %v5931
        %v5933 = vand.u32 %v5932, 4294901760
        %5934 = vmatprep.subr.mxu0 %v5933
        %v5935 = vand.u32 %v3347, 4294901760
        %v5936 = vsub.f32 %v3347, %v5935
        %v5937 = vand.u32 %v5936, 4294901760
        %5938 = vmatpush1.msra.mxu0 %v5937
        %v5939 = vand.u32 %v3346, 4294901760
        %v5940 = vsub.f32 %v3346, %v5939
        %v5941 = vand.u32 %v5940, 4294901760
        %5942 = vmatprep.subr.mxu0 %v5941
        %v5943 = vand.u32 %v3345, 4294901760
        %v5944 = vsub.f32 %v3345, %v5943
        %v5945 = vand.u32 %v5944, 4294901760
        %5946 = vmatpush1.msra.mxu0 %v5945
        %5947 = vmatprep.subr.mxu0 0.0
        %5948 = vmatpush2.msra.mxu0 0.0
        %5949 = vmatprep.subr.mxu0 0.0
        %5950 = vmatpush2.msra.mxu0 0.0
        %5951 = vmatprep.subr.mxu0 0.0
        %5952 = vmatpush2.msra.mxu0 0.0
        %5953 = vmatprep.subr.mxu0 0.0
        %5954 = vmatpush2.msra.mxu0 0.0
        %v5955 = vand.u32 %v3400, 4294901760
        %v5956 = vsub.f32 %v3400, %v5955
        %v5957 = vand.u32 %v5956, 4294901760
        %5958 = vmatprep.subr.mxu0 %v5957
        %v5959 = vand.u32 %v3399, 4294901760
        %v5960 = vsub.f32 %v3399, %v5959
        %v5961 = vand.u32 %v5960, 4294901760
        %5962 = vmatpush2.msra.mxu0 %v5961
        %v5963 = vand.u32 %v3398, 4294901760
        %v5964 = vsub.f32 %v3398, %v5963
        %v5965 = vand.u32 %v5964, 4294901760
        %5966 = vmatprep.subr.mxu0 %v5965
        %v5967 = vand.u32 %v3397, 4294901760
        %v5968 = vsub.f32 %v3397, %v5967
        %v5969 = vand.u32 %v5968, 4294901760
        %5970 = vmatpush2.msra.mxu0 %v5969
        %v5971 = vand.u32 %v3396, 4294901760
        %v5972 = vsub.f32 %v3396, %v5971
        %v5973 = vand.u32 %v5972, 4294901760
        %5974 = vmatprep.subr.mxu0 %v5973
        %v5975 = vand.u32 %v3395, 4294901760
        %v5976 = vsub.f32 %v3395, %v5975
        %v5977 = vand.u32 %v5976, 4294901760
        %5978 = vmatpush2.msra.mxu0 %v5977
        %v5979 = vand.u32 %v3394, 4294901760
        %v5980 = vsub.f32 %v3394, %v5979
        %v5981 = vand.u32 %v5980, 4294901760
        %5982 = vmatprep.subr.mxu0 %v5981
        %v5983 = vand.u32 %v3393, 4294901760
        %v5984 = vsub.f32 %v3393, %v5983
        %v5985 = vand.u32 %v5984, 4294901760
        %5986 = vmatpush2.msra.mxu0 %v5985
        %v5987 = vand.u32 %v3392, 4294901760
        %v5988 = vsub.f32 %v3392, %v5987
        %v5989 = vand.u32 %v5988, 4294901760
        %5990 = vmatprep.subr.mxu0 %v5989
        %v5991 = vand.u32 %v3391, 4294901760
        %v5992 = vsub.f32 %v3391, %v5991
        %v5993 = vand.u32 %v5992, 4294901760
        %5994 = vmatpush2.msra.mxu0 %v5993
        %v5995 = vand.u32 %v3390, 4294901760
        %v5996 = vsub.f32 %v3390, %v5995
        %v5997 = vand.u32 %v5996, 4294901760
        %5998 = vmatprep.subr.mxu0 %v5997
        %v5999 = vand.u32 %v3389, 4294901760
        %v6000 = vsub.f32 %v3389, %v5999
        %v6001 = vand.u32 %v6000, 4294901760
        %6002 = vmatpush2.msra.mxu0 %v6001
        %v6003 = vand.u32 %v3388, 4294901760
        %v6004 = vsub.f32 %v3388, %v6003
        %v6005 = vand.u32 %v6004, 4294901760
        %6006 = vmatprep.subr.mxu0 %v6005
        %v6007 = vand.u32 %v3387, 4294901760
        %v6008 = vsub.f32 %v3387, %v6007
        %v6009 = vand.u32 %v6008, 4294901760
        %6010 = vmatpush2.msra.mxu0 %v6009
        %v6011 = vand.u32 %v3386, 4294901760
        %v6012 = vsub.f32 %v3386, %v6011
        %v6013 = vand.u32 %v6012, 4294901760
        %6014 = vmatprep.subr.mxu0 %v6013
        %v6015 = vand.u32 %v3385, 4294901760
        %v6016 = vsub.f32 %v3385, %v6015
        %v6017 = vand.u32 %v6016, 4294901760
        %6018 = vmatpush2.msra.mxu0 %v6017
        %v6019 = vand.u32 %v3384, 4294901760
        %v6020 = vsub.f32 %v3384, %v6019
        %v6021 = vand.u32 %v6020, 4294901760
        %6022 = vmatprep.subr.mxu0 %v6021
        %v6023 = vand.u32 %v3383, 4294901760
        %v6024 = vsub.f32 %v3383, %v6023
        %v6025 = vand.u32 %v6024, 4294901760
        %6026 = vmatpush2.msra.mxu0 %v6025
        %v6027 = vand.u32 %v3382, 4294901760
        %v6028 = vsub.f32 %v3382, %v6027
        %v6029 = vand.u32 %v6028, 4294901760
        %6030 = vmatprep.subr.mxu0 %v6029
        %v6031 = vand.u32 %v3381, 4294901760
        %v6032 = vsub.f32 %v3381, %v6031
        %v6033 = vand.u32 %v6032, 4294901760
        %6034 = vmatpush2.msra.mxu0 %v6033
        %v6035 = vand.u32 %v3380, 4294901760
        %v6036 = vsub.f32 %v3380, %v6035
        %v6037 = vand.u32 %v6036, 4294901760
        %6038 = vmatprep.subr.mxu0 %v6037
        %v6039 = vand.u32 %v3379, 4294901760
        %v6040 = vsub.f32 %v3379, %v6039
        %v6041 = vand.u32 %v6040, 4294901760
        %6042 = vmatpush2.msra.mxu0 %v6041
        %v6043 = vand.u32 %v3378, 4294901760
        %v6044 = vsub.f32 %v3378, %v6043
        %v6045 = vand.u32 %v6044, 4294901760
        %6046 = vmatprep.subr.mxu0 %v6045
        %v6047 = vand.u32 %v3377, 4294901760
        %v6048 = vsub.f32 %v3377, %v6047
        %v6049 = vand.u32 %v6048, 4294901760
        %6050 = vmatpush2.msra.mxu0 %v6049
        %v6051 = vand.u32 %v401, 4294901760
        %6052 = vmatprep.mubr.f32.mxu0 %v6051
        %v6053 = vand.u32 %v241, 4294901760
        %6054 = vmatmul.mubr.f32.gmra.mxu0 %v6053
        %v6055 = vpop.f32.mrf.mxu0
        %v6056 = vadd.f32 %v5779, %v6055
        %v6057 = vpop.f32.mrf.mxu0
        %v6058 = vadd.f32 %v5781, %v6057
        %v6059 = vand.u32 %v404, 4294901760
        %6060 = vmatprep.mubr.f32.mxu0 %v6059
        %v6061 = vand.u32 %v245, 4294901760
        %6062 = vmatmul.mubr.f32.gmra.mxu0 %v6061
        %v6063 = vpop.f32.mrf.mxu0
        %v6064 = vadd.f32 %v5791, %v6063
        %v6065 = vpop.f32.mrf.mxu0
        %v6066 = vadd.f32 %v5793, %v6065
        %v6067 = vand.u32 %v407, 4294901760
        %6068 = vmatprep.mubr.f32.mxu0 %v6067
        %v6069 = vand.u32 %v249, 4294901760
        %6070 = vmatmul.mubr.f32.gmra.mxu0 %v6069
        %v6071 = vpop.f32.mrf.mxu0
        %v6072 = vadd.f32 %v5803, %v6071
        %v6073 = vpop.f32.mrf.mxu0
        %v6074 = vadd.f32 %v5805, %v6073
        %v6075 = vand.u32 %v410, 4294901760
        %6076 = vmatprep.mubr.f32.mxu0 %v6075
        %v6077 = vand.u32 %v253, 4294901760
        %6078 = vmatmul.mubr.f32.gmra.mxu0 %v6077
        %v6079 = vpop.f32.mrf.mxu0
        %v6080 = vadd.f32 %v5815, %v6079
        %v6081 = vpop.f32.mrf.mxu0
        %v6082 = vadd.f32 %v5817, %v6081
        %6083 = vdwg.mxu0
        %v6084 = vand.u32 %v3376, 4294901760
        %6085 = vmatprep.subr.mxu0 %v6084
        %v6086 = vand.u32 %v3375, 4294901760
        %6087 = vmatpush1.msra.mxu0 %v6086
        %v6088 = vand.u32 %v3374, 4294901760
        %6089 = vmatprep.subr.mxu0 %v6088
        %v6090 = vand.u32 %v3373, 4294901760
        %6091 = vmatpush1.msra.mxu0 %v6090
        %v6092 = vand.u32 %v3372, 4294901760
        %6093 = vmatprep.subr.mxu0 %v6092
        %v6094 = vand.u32 %v3371, 4294901760
        %6095 = vmatpush1.msra.mxu0 %v6094
        %v6096 = vand.u32 %v3370, 4294901760
        %6097 = vmatprep.subr.mxu0 %v6096
        %v6098 = vand.u32 %v3369, 4294901760
        %6099 = vmatpush1.msra.mxu0 %v6098
        %v6100 = vand.u32 %v3368, 4294901760
        %6101 = vmatprep.subr.mxu0 %v6100
        %v6102 = vand.u32 %v3367, 4294901760
        %6103 = vmatpush1.msra.mxu0 %v6102
        %v6104 = vand.u32 %v3366, 4294901760
        %6105 = vmatprep.subr.mxu0 %v6104
        %v6106 = vand.u32 %v3365, 4294901760
        %6107 = vmatpush1.msra.mxu0 %v6106
        %v6108 = vand.u32 %v3364, 4294901760
        %6109 = vmatprep.subr.mxu0 %v6108
        %v6110 = vand.u32 %v3363, 4294901760
        %6111 = vmatpush1.msra.mxu0 %v6110
        %v6112 = vand.u32 %v3362, 4294901760
        %6113 = vmatprep.subr.mxu0 %v6112
        %v6114 = vand.u32 %v3361, 4294901760
        %6115 = vmatpush1.msra.mxu0 %v6114
        %v6116 = vand.u32 %v3360, 4294901760
        %6117 = vmatprep.subr.mxu0 %v6116
        %v6118 = vand.u32 %v3359, 4294901760
        %6119 = vmatpush1.msra.mxu0 %v6118
        %v6120 = vand.u32 %v3358, 4294901760
        %6121 = vmatprep.subr.mxu0 %v6120
        %v6122 = vand.u32 %v3357, 4294901760
        %6123 = vmatpush1.msra.mxu0 %v6122
        %v6124 = vand.u32 %v3356, 4294901760
        %6125 = vmatprep.subr.mxu0 %v6124
        %v6126 = vand.u32 %v3355, 4294901760
        %6127 = vmatpush1.msra.mxu0 %v6126
        %v6128 = vand.u32 %v3354, 4294901760
        %6129 = vmatprep.subr.mxu0 %v6128
        %v6130 = vand.u32 %v3353, 4294901760
        %6131 = vmatpush1.msra.mxu0 %v6130
        %v6132 = vand.u32 %v3352, 4294901760
        %6133 = vmatprep.subr.mxu0 %v6132
        %v6134 = vand.u32 %v3351, 4294901760
        %6135 = vmatpush1.msra.mxu0 %v6134
        %v6136 = vand.u32 %v3350, 4294901760
        %6137 = vmatprep.subr.mxu0 %v6136
        %v6138 = vand.u32 %v3349, 4294901760
        %6139 = vmatpush1.msra.mxu0 %v6138
        %v6140 = vand.u32 %v3348, 4294901760
        %6141 = vmatprep.subr.mxu0 %v6140
        %v6142 = vand.u32 %v3347, 4294901760
        %6143 = vmatpush1.msra.mxu0 %v6142
        %v6144 = vand.u32 %v3346, 4294901760
        %6145 = vmatprep.subr.mxu0 %v6144
        %v6146 = vand.u32 %v3345, 4294901760
        %6147 = vmatpush1.msra.mxu0 %v6146
        %6148 = vmatprep.subr.mxu0 0.0
        %6149 = vmatpush2.msra.mxu0 0.0
        %6150 = vmatprep.subr.mxu0 0.0
        %6151 = vmatpush2.msra.mxu0 0.0
        %6152 = vmatprep.subr.mxu0 0.0
        %6153 = vmatpush2.msra.mxu0 0.0
        %6154 = vmatprep.subr.mxu0 0.0
        %6155 = vmatpush2.msra.mxu0 0.0
        %v6156 = vand.u32 %v3400, 4294901760
        %6157 = vmatprep.subr.mxu0 %v6156
        %v6158 = vand.u32 %v3399, 4294901760
        %6159 = vmatpush2.msra.mxu0 %v6158
        %v6160 = vand.u32 %v3398, 4294901760
        %6161 = vmatprep.subr.mxu0 %v6160
        %v6162 = vand.u32 %v3397, 4294901760
        %6163 = vmatpush2.msra.mxu0 %v6162
        %v6164 = vand.u32 %v3396, 4294901760
        %6165 = vmatprep.subr.mxu0 %v6164
        %v6166 = vand.u32 %v3395, 4294901760
        %6167 = vmatpush2.msra.mxu0 %v6166
        %v6168 = vand.u32 %v3394, 4294901760
        %6169 = vmatprep.subr.mxu0 %v6168
        %v6170 = vand.u32 %v3393, 4294901760
        %6171 = vmatpush2.msra.mxu0 %v6170
        %v6172 = vand.u32 %v3392, 4294901760
        %6173 = vmatprep.subr.mxu0 %v6172
        %v6174 = vand.u32 %v3391, 4294901760
        %6175 = vmatpush2.msra.mxu0 %v6174
        %v6176 = vand.u32 %v3390, 4294901760
        %6177 = vmatprep.subr.mxu0 %v6176
        %v6178 = vand.u32 %v3389, 4294901760
        %6179 = vmatpush2.msra.mxu0 %v6178
        %v6180 = vand.u32 %v3388, 4294901760
        %6181 = vmatprep.subr.mxu0 %v6180
        %v6182 = vand.u32 %v3387, 4294901760
        %6183 = vmatpush2.msra.mxu0 %v6182
        %v6184 = vand.u32 %v3386, 4294901760
        %6185 = vmatprep.subr.mxu0 %v6184
        %v6186 = vand.u32 %v3385, 4294901760
        %6187 = vmatpush2.msra.mxu0 %v6186
        %v6188 = vand.u32 %v3384, 4294901760
        %6189 = vmatprep.subr.mxu0 %v6188
        %v6190 = vand.u32 %v3383, 4294901760
        %6191 = vmatpush2.msra.mxu0 %v6190
        %v6192 = vand.u32 %v3382, 4294901760
        %6193 = vmatprep.subr.mxu0 %v6192
        %v6194 = vand.u32 %v3381, 4294901760
        %6195 = vmatpush2.msra.mxu0 %v6194
        %v6196 = vand.u32 %v3380, 4294901760
        %6197 = vmatprep.subr.mxu0 %v6196
        %v6198 = vand.u32 %v3379, 4294901760
        %6199 = vmatpush2.msra.mxu0 %v6198
        %v6200 = vand.u32 %v3378, 4294901760
        %6201 = vmatprep.subr.mxu0 %v6200
        %v6202 = vand.u32 %v3377, 4294901760
        %6203 = vmatpush2.msra.mxu0 %v6202
        %v6204 = vand.u32 %v401, 4294901760
        %6205 = vmatprep.mubr.f32.mxu0 %v6204
        %v6206 = vand.u32 %v241, 4294901760
        %6207 = vmatmul.mubr.f32.gmra.mxu0 %v6206
        %v6208 = vpop.f32.mrf.mxu0
        %v6209 = vadd.f32 %v6056, %v6208
        %v6210 = vpop.f32.mrf.mxu0
        %v6211 = vadd.f32 %v6058, %v6210
        %v6212 = vand.u32 %v404, 4294901760
        %6213 = vmatprep.mubr.f32.mxu0 %v6212
        %v6214 = vand.u32 %v245, 4294901760
        %6215 = vmatmul.mubr.f32.gmra.mxu0 %v6214
        %v6216 = vpop.f32.mrf.mxu0
        %v6217 = vadd.f32 %v6064, %v6216
        %v6218 = vpop.f32.mrf.mxu0
        %v6219 = vadd.f32 %v6066, %v6218
        %v6220 = vand.u32 %v407, 4294901760
        %6221 = vmatprep.mubr.f32.mxu0 %v6220
        %v6222 = vand.u32 %v249, 4294901760
        %6223 = vmatmul.mubr.f32.gmra.mxu0 %v6222
        %v6224 = vpop.f32.mrf.mxu0
        %v6225 = vadd.f32 %v6072, %v6224
        %v6226 = vpop.f32.mrf.mxu0
        %v6227 = vadd.f32 %v6074, %v6226
        %v6228 = vand.u32 %v410, 4294901760
        %6229 = vmatprep.mubr.f32.mxu0 %v6228
        %v6230 = vand.u32 %v253, 4294901760
        %6231 = vmatmul.mubr.f32.gmra.mxu0 %v6230
        %v6232 = vpop.f32.mrf.mxu0
        %v6233 = vadd.f32 %v6080, %v6232
        %v6234 = vpop.f32.mrf.mxu0
        %v6235 = vadd.f32 %v6082, %v6234
        %6236 = vdwg.mxu0
        %vm6237 = vcmp.gt.f32.partialorder %v6209, 0.0
        %vm6238 = vcmp.gt.f32.partialorder %v6211, 0.0
        %vm6239 = vcmp.gt.f32.partialorder %v6217, 0.0
        %vm6240 = vcmp.gt.f32.partialorder %v6219, 0.0
        %vm6241 = vcmp.gt.f32.partialorder %v6225, 0.0
        %vm6242 = vcmp.gt.f32.partialorder %v6227, 0.0
        %vm6243 = vcmp.gt.f32.partialorder %v6233, 0.0
        %vm6244 = vcmp.gt.f32.partialorder %v6235, 0.0
        %v6245 = vmul.f32 %v6209, -0.1
        %v6246 = vmul.f32 %v6211, -0.1
        %v6247 = vmul.f32 %v6217, -0.1
        %v6248 = vmul.f32 %v6219, -0.1
        %v6249 = vmul.f32 %v6225, -0.1
        %v6250 = vmul.f32 %v6227, -0.1
        %v6251 = vmul.f32 %v6233, -0.1
        %v6252 = vmul.f32 %v6235, -0.1
        %v6253 = vsel %vm6237, %v6209, %v6245
        %v6254 = vsel %vm6238, %v6211, %v6246
        %v6255 = vsel %vm6239, %v6217, %v6247
        %v6256 = vsel %vm6240, %v6219, %v6248
        %v6257 = vsel %vm6241, %v6225, %v6249
        %v6258 = vsel %vm6242, %v6227, %v6250
        %v6259 = vsel %vm6243, %v6233, %v6251
        %v6260 = vsel %vm6244, %v6235, %v6252
        %s6261 = scalar_lea.vmem %s236, 64
        %6262 = vst [vmem:[%s6261] sm:$0xff] %v6253
        %6263 = vst [vmem:[%s6261 + $0x8] sm:$0xff] %v6254
        %6264 = vst [vmem:[%s6261 + $0x10] sm:$0xff] %v6255
        %6265 = vst [vmem:[%s6261 + $0x18] sm:$0xff] %v6256
        %6266 = vst [vmem:[%s6261 + $0x20] sm:$0xff] %v6257
        %6267 = vst [vmem:[%s6261 + $0x28] sm:$0xff] %v6258
        %6268 = vst [vmem:[%s6261 + $0x30] sm:$0xf] %v6259
        %6269 = vst [vmem:[%s6261 + $0x38] sm:$0xf] %v6260
        %s6270 = smul.u32 2, %s22
        %s6271 = smul.u32 2, %s23
        %p6272 = scmp.lt.s32.totalorder %s6270, 3
        %s6273 = scalar_select %p6272, %s6270, 3
        %p6274 = scmp.lt.s32.totalorder %s6271, 1
        %s6275 = scalar_select %p6274, %s6271, 1
        %s6276 = smul.addr %s6273, 8
        %s6277 = sadd.s32 %s6275, %s6276
        %s6278 = smul.addr %s6277, 8
        %s6279 = scalar_lea.vmem %s3, %s6278
        // Predicated region
        $region41: #{tpu_custom_call.1} parent=31 // pred_check
          %p6280 = pneg %p120
        $region42: #{tpu_custom_call.1} parent=31 // pred_check_branch
          %6282 = sbr.rel (%p6280) target = $region44
        $region43: #{tpu_custom_call.1} parent=31 // pred_region
          %s6283 = smul.u32 2, %s22
          %s6284 = smul.u32 2, %s23
        $region44: #{tpu_custom_call.1} parent=31 // pred_fallthru
          _
      $region32: #{tpu_custom_call.1} parent=5 // pred_fallthru
        _
      %p6285 = scmp.le.s32.totalorder 2, %s13
      // Predicated region
      $region45: #{tpu_custom_call.1} parent=5 // pred_check
        %p6286 = pneg %p6285
      $region46: #{tpu_custom_call.1} parent=5 // pred_check_branch
        %6288 = sbr.rel (%p6286) target = $region48
      $region47: #{tpu_custom_call.1} parent=5 // pred_region
        %s6289 = ssub.s32 %s13, 2
        // Predicated region
        $region49: #{tpu_custom_call.1} parent=47 // pred_check
          %p6290 = pneg %p126
        $region50: #{tpu_custom_call.1} parent=47 // pred_check_branch
          %6292 = sbr.rel (%p6290) target = $region52
        $region51: #{tpu_custom_call.1} parent=47 // pred_region
          %s6293 = smul.u32 2, %s24
          %s6294 = smul.u32 2, %s25
          %p6295 = scmp.lt.s32.totalorder %s6293, 3
          %s6296 = scalar_select %p6295, %s6293, 3
          %p6297 = scmp.lt.s32.totalorder %s6294, 1
          %s6298 = scalar_select %p6297, %s6294, 1
          %s6299 = smul.addr %s6296, 8
          %s6300 = sadd.s32 %s6298, %s6299
          %s6301 = smul.addr %s6300, 8
          %s6302 = scalar_lea.vmem %s3, %s6301
        $region52: #{tpu_custom_call.1} parent=47 // pred_fallthru
          _
      $region48: #{tpu_custom_call.1} parent=5 // pred_fallthru
        _
    $region6: #{tpu_custom_call.1} parent=1 // loop_footer
      %s17 = sadd.s32 1, %s13
    $region7: #{tpu_custom_call.1} parent=1 // loop_footer_branch
      %12 = sbr.rel target = $region3
    $region8: #{tpu_custom_call.1} parent=1 // loop_exit
      _
    %6303 = vsyncpa [#allocation3], 1
    %s6304 = scalar_lea.sflag [#allocation3], 1
    %6305 = vsyncpa %s6304, 1
    %6306 = vsyncpa [#allocation5], 1

</llo_original>
